<compile_context>
chip_gen: v6e
topology: v6e:2x2x1
jax: 0.10.0
libtpu: 0.0.40
codegen_flags: <defaults>
</compile_context>

<pallas_src>
import functools

import jax
import jax.numpy as jnp
import numpy as np
from jax.experimental import pallas as pl
from jax.experimental.pallas import tpu as pltpu


# --------------------------------------------------------------------------- #
# Fused kernel.  Block = (S, Nb, F): Nb = group_block*T tokens per speaker,    #
# rows ordered (group, time) with time fastest.  Static unroll over S (tiny).  #
# --------------------------------------------------------------------------- #
def _fused_kernel(num_spks, seq_len, scale, cd,
                  x_ref,
                  lng_ref, lnb_ref,
                  wqkv_ref, bqkv_ref, wo_ref, bo_ref,
                  msum_ref, mbc_ref, lsa_ref,
                  w1_ref, b1_ref, wd_ref, bd_ref, w2_ref, b2_ref, lsf_ref,
                  o_ref):
    S, T = num_spks, seq_len
    Nb = x_ref.shape[1]
    Fc = x_ref.shape[2]
    eps = 1e-5

    lng, lnb = lng_ref[...], lnb_ref[...]
    msum, mbc, lsa = msum_ref[...], mbc_ref[...], lsa_ref[...]

    # ---- stage 1a: LayerNorm per speaker, then ONE fused QKV matmul ---------
    ln_list = []
    for s in range(S):                                    # static unroll
        xv = x_ref[s]                                     # (Nb, F) f32
        mu = jnp.mean(xv, axis=-1, keepdims=True)
        var = jnp.mean(jnp.square(xv - mu), axis=-1, keepdims=True)
        ln = (xv - mu) * jax.lax.rsqrt(var + eps) * lng + lnb
        ln_list.append(ln.astype(cd))
    ln_all = jnp.concatenate(ln_list, axis=0)             # (S*Nb, F)  cd
    qkv = jnp.dot(ln_all, wqkv_ref[...],
                  preferred_element_type=jnp.float32) + bqkv_ref[...]   # (S*Nb, 3F) f32

    # static, tile-aligned slices of the fused qkv (sublane offsets % 8 == 0,
    # lane offsets are multiples of F -- 128-aligned for F == 128).
    def q_of(s): return qkv[s * Nb:(s + 1) * Nb, 0:Fc]
    def k_of(s): return qkv[s * Nb:(s + 1) * Nb, Fc:2 * Fc]
    def v_of(s): return qkv[s * Nb:(s + 1) * Nb, 2 * Fc:3 * Fc]

    # ---- shared depthwise-conv helpers (computed once, reused per speaker) --
    t_idx = jax.lax.broadcasted_iota(jnp.int32, (Nb, 1), 0) % T
    m_prev = (t_idx != 0).astype(jnp.float32)             # t-1 tap valid
    m_next = (t_idx != (T - 1)).astype(jnp.float32)       # t+1 tap valid
    wd = wd_ref[...]                                      # (3, 6F)
    lsf = lsf_ref[...]

    # ---- per output speaker: attention -> residual -> GCFN -> store ---------
    for i in range(S):
        qi = q_of(i)
        # per-head scores: sum_d Q[n,h,d]*K[n,h,d] == (Q*K) @ msum -> (Nb, H)
        sc = [scale * jnp.dot(qi * k_of(j), msum,
                              preferred_element_type=jnp.float32)
              for j in range(S)]
        m = sc[0]
        for j in range(1, S):
            m = jnp.maximum(m, sc[j])
        es = [jnp.exp(sj - m) for sj in sc]
        den = es[0]
        for j in range(1, S):
            den = den + es[j]
        inv = pl.reciprocal(den, approx=True)             # EUP slot (free vs VALU)

        # broadcast each head's weight over that head's Dh lanes: (Nb,H)@(H,F)
        ctx = jnp.dot(es[0] * inv, mbc,
                      preferred_element_type=jnp.float32) * v_of(0)
        for j in range(1, S):
            wfull = jnp.dot(es[j] * inv, mbc,
                            preferred_element_type=jnp.float32)
            ctx = ctx + wfull * v_of(j)

        attn = jnp.dot(ctx.astype(cd), wo_ref[...],
                       preferred_element_type=jnp.float32) + bo_ref[...]
        y = x_ref[i] + attn * lsa                         # (Nb, F) GCFN residual base

        # GCFN: fused pconv1 (F->6F), depthwise conv over time, GLU, pconv2.
        h = jnp.dot(y.astype(cd), w1_ref[...],
                    preferred_element_type=jnp.float32) + b1_ref[...]   # (Nb, 6F)
        prev = pltpu.roll(h, 1, axis=0) * m_prev          # h[t-1] (0 at t == 0)
        nxt = pltpu.roll(h, Nb - 1, axis=0) * m_next      # h[t+1] (0 at t == T-1)
        hc = prev * wd[0:1] + h * wd[1:2] + nxt * wd[2:3] + bd_ref[...]
        C = hc.shape[-1] // 2                             # = 3F, lane-aligned cut
        g = hc[:, :C] * jax.nn.sigmoid(hc[:, C:])
        out = jnp.dot(g.astype(cd), w2_ref[...],
                      preferred_element_type=jnp.float32) + b2_ref[...]
        o_ref[i] = (y + out * lsf).astype(o_ref.dtype)


# --------------------------------------------------------------------------- #
# Wrapper: layout plumbing + pallas_call setup.                                #
# --------------------------------------------------------------------------- #
def _bcast_spec(a):
    nd = a.ndim
    return pl.BlockSpec(a.shape, lambda i, nd=nd: (0,) * nd)


def _pick_group_block(G, T, target_tokens):
    """Largest divisor of G with gb*T <= target_tokens and (gb*T) % 8 == 0
    (or gb == G); shrink if possible so the parallel grid has >= 2 steps."""
    divisors = [d for d in range(1, G + 1) if G % d == 0]
    ok = [d for d in divisors
          if d * T <= target_tokens and ((d * T) % 8 == 0 or d == G)]
    if ok:
        gb = max(ok)
    else:
        gb = min(d for d in divisors if (d * T) % 8 == 0 or d == G)
    if G // gb < 2:                                        # keep 2 TCs busy (v7x)
        smaller = [d for d in divisors if d < gb and (d * T) % 8 == 0]
        if smaller:
            gb = max(smaller)
    return gb


def cs_transformer_forward(x, params, num_spks, num_heads, *,
                           group_block=None, matmul_dtype=jnp.bfloat16,
                           target_tokens=256):
    B, F_ch, T = x.shape
    S, H = num_spks, num_heads
    assert B % S == 0 and F_ch % H == 0
    G = B // S
    N = G * T
    Dh = F_ch // H
    cd = matmul_dtype

    if group_block is None:
        group_block = _pick_group_block(G, T, target_tokens)
    assert G % group_block == 0
    nb = group_block * T
    assert nb % 8 == 0 or group_block == G

    row = lambda v: v.reshape(1, -1).astype(jnp.float32)
    wcast = lambda m: m.astype(cd)

    # One layout pass in: (B,F,T) -> per-speaker token slabs (S, G*T, F).
    x_spk = x.reshape(G, S, F_ch, T).transpose(1, 0, 3, 2).reshape(S, N, F_ch)

    # Fused projection weights (lane cuts at F / 3F are 128-aligned for F=128;
    # still correct for other F, just a slower in-kernel slice).
    wqkv = jnp.concatenate([params["wq"].T, params["wk"].T, params["wv"].T], axis=1)  # (F, 3F)
    bqkv = jnp.concatenate([params["bq"], params["bk"], params["bv"]])                # (3F,)
    msum = (jnp.arange(F_ch)[:, None] // Dh ==
            jnp.arange(H)[None, :]).astype(jnp.float32)                              # (F, H)
    mbc = msum.T                                                                       # (H, F)
    w1 = params["w1"].T                                   # (F, 6F), GLU value|gate order kept
    wd = params["wd"].reshape(-1, 3).T                    # (3, 6F)
    w2 = params["w2"].T                                   # (3F, F)

    args = (
        x_spk,
        row(params["ln_g"]), row(params["ln_b"]),
        wcast(wqkv), row(bqkv),
        wcast(params["wo"].T), row(params["bo"]),
        msum, mbc, row(params["ls_attn"]),
        wcast(w1), row(params["b1"]),
        wd.astype(jnp.float32), row(params["bd"]),
        wcast(w2), row(params["b2"]), row(params["ls_ffn"]),
    )
    in_specs = [pl.BlockSpec((S, nb, F_ch), lambda i: (0, i, 0))]
    in_specs += [_bcast_spec(a) for a in args[1:]]

    y_spk = pl.pallas_call(
        functools.partial(_fused_kernel, S, T, 1.0 / (Dh ** 0.5), cd),
        out_shape=jax.ShapeDtypeStruct((S, N, F_ch), x.dtype),
        grid=(N // nb,),
        in_specs=in_specs,
        out_specs=pl.BlockSpec((S, nb, F_ch), lambda i: (0, i, 0)),
        compiler_params=pltpu.CompilerParams(dimension_semantics=("parallel",)),
    )(*args)

    # One layout pass out: (S, G*T, F) -> (B, F, T) (module output contract).
    return y_spk.reshape(S, G, T, F_ch).transpose(1, 0, 3, 2).reshape(B, F_ch, T)


# --------------------------------------------------------------------------- #
# Pure-JAX reference (eval-mode semantics) for the correctness check.          #
# --------------------------------------------------------------------------- #
def cs_transformer_reference(x, params, num_spks, num_heads):
    hi = jax.lax.Precision.HIGHEST
    B, F_ch, T = x.shape
    S, H = num_spks, num_heads
    G, Dh = B // S, F_ch // H
    eps = 1e-5

    tok = x.reshape(G, S, F_ch, T).transpose(0, 3, 1, 2).reshape(G * T, S, F_ch)
    mu = tok.mean(-1, keepdims=True)
    var = ((tok - mu) ** 2).mean(-1, keepdims=True)
    ln = (tok - mu) / jnp.sqrt(var + eps) * params["ln_g"] + params["ln_b"]

    q = jnp.dot(ln, params["wq"].T, precision=hi) + params["bq"]
    k = jnp.dot(ln, params["wk"].T, precision=hi) + params["bk"]
    v = jnp.dot(ln, params["wv"].T, precision=hi) + params["bv"]
    heads = lambda z: z.reshape(-1, S, H, Dh).transpose(0, 2, 1, 3)      # (N,H,S,Dh)
    qh, kh, vh = heads(q), heads(k), heads(v)
    sc = jnp.einsum("nhid,nhjd->nhij", qh, kh, precision=hi) / (Dh ** 0.5)
    w = jax.nn.softmax(sc, axis=-1)
    ctx = jnp.einsum("nhij,nhjd->nhid", w, vh, precision=hi)
    ctx = ctx.transpose(0, 2, 1, 3).reshape(-1, S, F_ch)
    attn = jnp.dot(ctx, params["wo"].T, precision=hi) + params["bo"]
    tok = tok + attn * params["ls_attn"]

    xb = tok.reshape(G, T, S, F_ch).transpose(0, 2, 3, 1).reshape(B, F_ch, T)
    y = xb.transpose(0, 2, 1)                                            # (B,T,F)

    h = jnp.dot(y, params["w1"].T, precision=hi) + params["b1"]          # (B,T,6F)
    wd = params["wd"][:, 0, :]                                           # (6F,3)
    hp = jnp.pad(h, ((0, 0), (1, 1), (0, 0)))
    hc = hp[:, :-2, :] * wd[:, 0] + hp[:, 1:-1, :] * wd[:, 1] + hp[:, 2:, :] * wd[:, 2]
    hc = hc + params["bd"]
    C = params["w2"].shape[1]
    g = hc[..., :C] * jax.nn.sigmoid(hc[..., C:])
    out = jnp.dot(g, params["w2"].T, precision=hi) + params["b2"]
    y = y + out * params["ls_ffn"]
    return y.transpose(0, 2, 1)                                          # (B,F,T)


if __name__ == "__main__":
    F_ch, T, S, H = 128, 16, 2, 4          # channels, time, num_spks, num_heads
    G = 2                                   # speaker groups
    B = G * S                               # module batch dim = groups * spks
    Cg = 3 * F_ch                           # GCFN hidden_dim

    key = jax.random.PRNGKey(0)
    ks = jax.random.split(key, 20)
    rnd = lambda k, shape, s: s * jax.random.normal(k, shape, jnp.float32)

    # NOTE: real LayerScale init is scale_init (1e-5); random values are used
    # here so the numeric check exercises the full branch, not just the residual.
    params = dict(
        ln_g=1.0 + rnd(ks[0], (F_ch,), 0.05), ln_b=rnd(ks[1], (F_ch,), 0.05),
        wq=rnd(ks[2], (F_ch, F_ch), 0.09), bq=rnd(ks[3], (F_ch,), 0.05),
        wk=rnd(ks[4], (F_ch, F_ch), 0.09), bk=rnd(ks[5], (F_ch,), 0.05),
        wv=rnd(ks[6], (F_ch, F_ch), 0.09), bv=rnd(ks[7], (F_ch,), 0.05),
        wo=rnd(ks[8], (F_ch, F_ch), 0.09), bo=rnd(ks[9], (F_ch,), 0.05),
        ls_attn=0.5 + rnd(ks[10], (F_ch,), 0.05),
        w1=rnd(ks[11], (2 * Cg, F_ch), 0.09), b1=rnd(ks[12], (2 * Cg,), 0.05),
        wd=rnd(ks[13], (2 * Cg, 1, 3), 0.4), bd=rnd(ks[14], (2 * Cg,), 0.05),
        w2=rnd(ks[15], (F_ch, Cg), 0.05), b2=rnd(ks[16], (F_ch,), 0.05),
        ls_ffn=0.5 + rnd(ks[17], (F_ch,), 0.05),
    )
    x = jax.random.normal(ks[18], (B, F_ch, T), jnp.float32)

    ref = cs_transformer_reference(x, params, S, H)

    # f32 MXU-operand path: the tight, gating correctness check.
    fwd_f32 = jax.jit(functools.partial(
        cs_transformer_forward, num_spks=S, num_heads=H,
        matmul_dtype=jnp.float32))
    out_f32 = jax.block_until_ready(fwd_f32(x, params))
    np.testing.assert_allclose(np.asarray(out_f32), np.asarray(ref),
                               rtol=2e-2, atol=2e-2)

    # bf16 MXU-operand path (the default; f32 accumulate + f32 epilogue).
    fwd = jax.jit(functools.partial(
        cs_transformer_forward, num_spks=S, num_heads=H))
    out = jax.block_until_ready(fwd(x, params))
    np.testing.assert_allclose(np.asarray(out), np.asarray(ref),
                               rtol=1e-1, atol=1e-1)

    print("KERNEL_OK")
</pallas_src>

<mosaic_0001>
module attributes {stable_mosaic.version = 11 : i64} {
  func.func @_fused_kernel(%arg0: i32, %arg1: memref<2x16x128xf32, #tpu.memory_space<vmem>>, %arg2: memref<1x128xf32, #tpu.memory_space<vmem>>, %arg3: memref<1x128xf32, #tpu.memory_space<vmem>>, %arg4: memref<128x384xf32, #tpu.memory_space<vmem>>, %arg5: memref<1x384xf32, #tpu.memory_space<vmem>>, %arg6: memref<128x128xf32, #tpu.memory_space<vmem>>, %arg7: memref<1x128xf32, #tpu.memory_space<vmem>>, %arg8: memref<128x4xf32, #tpu.memory_space<vmem>>, %arg9: memref<4x128xf32, #tpu.memory_space<vmem>>, %arg10: memref<1x128xf32, #tpu.memory_space<vmem>>, %arg11: memref<128x768xf32, #tpu.memory_space<vmem>>, %arg12: memref<1x768xf32, #tpu.memory_space<vmem>>, %arg13: memref<3x768xf32, #tpu.memory_space<vmem>>, %arg14: memref<1x768xf32, #tpu.memory_space<vmem>>, %arg15: memref<384x128xf32, #tpu.memory_space<vmem>>, %arg16: memref<1x128xf32, #tpu.memory_space<vmem>>, %arg17: memref<1x128xf32, #tpu.memory_space<vmem>>, %arg18: memref<2x16x128xf32, #tpu.memory_space<vmem>>) attributes {dimension_semantics = [#tpu.dimension_semantics<parallel>], iteration_bounds = array<i64: 2>, scalar_prefetch = 0 : i64, scratch_operands = 0 : i64, tpu.core_type = #tpu.core_type<tc>, window_params = [{transform_indices = @transform_0, window_bounds = array<i64: 2, 16, 128>}, {pipeline_mode = #tpu.pipeline_mode<synchronous>, transform_indices = @transform_1, window_bounds = array<i64: 1, 128>}, {pipeline_mode = #tpu.pipeline_mode<synchronous>, transform_indices = @transform_2, window_bounds = array<i64: 1, 128>}, {pipeline_mode = #tpu.pipeline_mode<synchronous>, transform_indices = @transform_3, window_bounds = array<i64: 128, 384>}, {pipeline_mode = #tpu.pipeline_mode<synchronous>, transform_indices = @transform_4, window_bounds = array<i64: 1, 384>}, {pipeline_mode = #tpu.pipeline_mode<synchronous>, transform_indices = @transform_5, window_bounds = array<i64: 128, 128>}, {pipeline_mode = #tpu.pipeline_mode<synchronous>, transform_indices = @transform_6, window_bounds = array<i64: 1, 128>}, {pipeline_mode = #tpu.pipeline_mode<synchronous>, transform_indices = @transform_7, window_bounds = array<i64: 128, 4>}, {pipeline_mode = #tpu.pipeline_mode<synchronous>, transform_indices = @transform_8, window_bounds = array<i64: 4, 128>}, {pipeline_mode = #tpu.pipeline_mode<synchronous>, transform_indices = @transform_9, window_bounds = array<i64: 1, 128>}, {pipeline_mode = #tpu.pipeline_mode<synchronous>, transform_indices = @transform_10, window_bounds = array<i64: 128, 768>}, {pipeline_mode = #tpu.pipeline_mode<synchronous>, transform_indices = @transform_11, window_bounds = array<i64: 1, 768>}, {pipeline_mode = #tpu.pipeline_mode<synchronous>, transform_indices = @transform_12, window_bounds = array<i64: 3, 768>}, {pipeline_mode = #tpu.pipeline_mode<synchronous>, transform_indices = @transform_13, window_bounds = array<i64: 1, 768>}, {pipeline_mode = #tpu.pipeline_mode<synchronous>, transform_indices = @transform_14, window_bounds = array<i64: 384, 128>}, {pipeline_mode = #tpu.pipeline_mode<synchronous>, transform_indices = @transform_15, window_bounds = array<i64: 1, 128>}, {pipeline_mode = #tpu.pipeline_mode<synchronous>, transform_indices = @transform_16, window_bounds = array<i64: 1, 128>}, {transform_indices = @transform_17, window_bounds = array<i64: 2, 16, 128>}]} {
    %c0 = arith.constant 0 : index
    %c0_0 = arith.constant 0 : index
    %0 = vector.load %arg2[%c0, %c0_0] : memref<1x128xf32, #tpu.memory_space<vmem>>, vector<1x128xf32>
    %c0_1 = arith.constant 0 : index
    %c0_2 = arith.constant 0 : index
    %1 = vector.load %arg3[%c0_1, %c0_2] : memref<1x128xf32, #tpu.memory_space<vmem>>, vector<1x128xf32>
    %c0_3 = arith.constant 0 : index
    %c0_4 = arith.constant 0 : index
    %2 = vector.load %arg8[%c0_3, %c0_4] : memref<128x4xf32, #tpu.memory_space<vmem>>, vector<128x4xf32>
    %c0_5 = arith.constant 0 : index
    %c0_6 = arith.constant 0 : index
    %3 = vector.load %arg9[%c0_5, %c0_6] : memref<4x128xf32, #tpu.memory_space<vmem>>, vector<4x128xf32>
    %c0_7 = arith.constant 0 : index
    %c0_8 = arith.constant 0 : index
    %4 = vector.load %arg10[%c0_7, %c0_8] : memref<1x128xf32, #tpu.memory_space<vmem>>, vector<1x128xf32>
    %c0_9 = arith.constant 0 : index
    %c0_10 = arith.constant 0 : index
    %c0_11 = arith.constant 0 : index
    %5 = vector.load %arg1[%c0_9, %c0_10, %c0_11] : memref<2x16x128xf32, #tpu.memory_space<vmem>>, vector<1x16x128xf32>
    %6 = vector.shape_cast %5 : vector<1x16x128xf32> to vector<16x128xf32>
    %cst = arith.constant dense<0.000000e+00> : vector<16xf32>
    %7 = vector.multi_reduction <add>, %6, %cst [1] : vector<16x128xf32> to vector<16xf32>
    %8 = vector.shape_cast %7 : vector<16xf32> to vector<16x1xf32>
    %cst_12 = arith.constant 1.280000e+02 : f32
    %9 = vector.broadcast %cst_12 : f32 to vector<16x1xf32>
    %10 = arith.divf %8, %9 : vector<16x1xf32>
    %11 = vector.broadcast %10 : vector<16x1xf32> to vector<16x128xf32>
    %12 = arith.subf %6, %11 : vector<16x128xf32>
    %13 = arith.mulf %12, %12 : vector<16x128xf32>
    %cst_13 = arith.constant dense<0.000000e+00> : vector<16xf32>
    %14 = vector.multi_reduction <add>, %13, %cst_13 [1] : vector<16x128xf32> to vector<16xf32>
    %15 = vector.shape_cast %14 : vector<16xf32> to vector<16x1xf32>
    %cst_14 = arith.constant 1.280000e+02 : f32
    %16 = vector.broadcast %cst_14 : f32 to vector<16x1xf32>
    %17 = arith.divf %15, %16 : vector<16x1xf32>
    %18 = vector.broadcast %10 : vector<16x1xf32> to vector<16x128xf32>
    %19 = arith.subf %6, %18 : vector<16x128xf32>
    %cst_15 = arith.constant 9.99999974E-6 : f32
    %20 = vector.broadcast %cst_15 : f32 to vector<16x1xf32>
    %21 = arith.addf %17, %20 : vector<16x1xf32>
    %22 = math.rsqrt %21 : vector<16x1xf32>
    %23 = vector.broadcast %22 : vector<16x1xf32> to vector<16x128xf32>
    %24 = arith.mulf %19, %23 : vector<16x128xf32>
    %25 = vector.broadcast %0 : vector<1x128xf32> to vector<16x128xf32>
    %26 = arith.mulf %24, %25 : vector<16x128xf32>
    %27 = vector.broadcast %1 : vector<1x128xf32> to vector<16x128xf32>
    %28 = arith.addf %26, %27 : vector<16x128xf32>
    %c1 = arith.constant 1 : index
    %c0_16 = arith.constant 0 : index
    %c0_17 = arith.constant 0 : index
    %29 = vector.load %arg1[%c1, %c0_16, %c0_17] : memref<2x16x128xf32, #tpu.memory_space<vmem>>, vector<1x16x128xf32>
    %30 = vector.shape_cast %29 : vector<1x16x128xf32> to vector<16x128xf32>
    %cst_18 = arith.constant dense<0.000000e+00> : vector<16xf32>
    %31 = vector.multi_reduction <add>, %30, %cst_18 [1] : vector<16x128xf32> to vector<16xf32>
    %32 = vector.shape_cast %31 : vector<16xf32> to vector<16x1xf32>
    %cst_19 = arith.constant 1.280000e+02 : f32
    %33 = vector.broadcast %cst_19 : f32 to vector<16x1xf32>
    %34 = arith.divf %32, %33 : vector<16x1xf32>
    %35 = vector.broadcast %34 : vector<16x1xf32> to vector<16x128xf32>
    %36 = arith.subf %30, %35 : vector<16x128xf32>
    %37 = arith.mulf %36, %36 : vector<16x128xf32>
    %cst_20 = arith.constant dense<0.000000e+00> : vector<16xf32>
    %38 = vector.multi_reduction <add>, %37, %cst_20 [1] : vector<16x128xf32> to vector<16xf32>
    %39 = vector.shape_cast %38 : vector<16xf32> to vector<16x1xf32>
    %cst_21 = arith.constant 1.280000e+02 : f32
    %40 = vector.broadcast %cst_21 : f32 to vector<16x1xf32>
    %41 = arith.divf %39, %40 : vector<16x1xf32>
    %42 = vector.broadcast %34 : vector<16x1xf32> to vector<16x128xf32>
    %43 = arith.subf %30, %42 : vector<16x128xf32>
    %cst_22 = arith.constant 9.99999974E-6 : f32
    %44 = vector.broadcast %cst_22 : f32 to vector<16x1xf32>
    %45 = arith.addf %41, %44 : vector<16x1xf32>
    %46 = math.rsqrt %45 : vector<16x1xf32>
    %47 = vector.broadcast %46 : vector<16x1xf32> to vector<16x128xf32>
    %48 = arith.mulf %43, %47 : vector<16x128xf32>
    %49 = vector.broadcast %0 : vector<1x128xf32> to vector<16x128xf32>
    %50 = arith.mulf %48, %49 : vector<16x128xf32>
    %51 = vector.broadcast %1 : vector<1x128xf32> to vector<16x128xf32>
    %52 = arith.addf %50, %51 : vector<16x128xf32>
    %53 = tpu.concatenate %28, %52 in 0 : vector<16x128xf32>, vector<16x128xf32> -> vector<32x128xf32>
    %c0_23 = arith.constant 0 : index
    %c0_24 = arith.constant 0 : index
    %54 = vector.load %arg4[%c0_23, %c0_24] : memref<128x384xf32, #tpu.memory_space<vmem>>, vector<128x384xf32>
    %cst_25 = arith.constant dense<0.000000e+00> : vector<32x384xf32>
    %55 = tpu.matmul %53, %54, %cst_25 {dimension_numbers = #tpu.dot_dimension_numbers<[1], [0], [0], [1], [0, 0, 1, 1], [], []>} : vector<32x128xf32>, vector<128x384xf32>, vector<32x384xf32> -> vector<32x384xf32>
    %c0_26 = arith.constant 0 : index
    %c0_27 = arith.constant 0 : index
    %56 = vector.load %arg5[%c0_26, %c0_27] : memref<1x384xf32, #tpu.memory_space<vmem>>, vector<1x384xf32>
    %57 = vector.broadcast %56 : vector<1x384xf32> to vector<32x384xf32>
    %58 = arith.addf %55, %57 : vector<32x384xf32>
    %59 = tpu.iota {dimensions = array<i32: 0>} : vector<16x1xi32>
    %c16_i32 = arith.constant 16 : i32
    %c0_i32 = arith.constant 0 : i32
    %60 = arith.cmpi eq, %c16_i32, %c0_i32 : i32
    %c1_i32 = arith.constant 1 : i32
    %61 = arith.select %60, %c1_i32, %c16_i32 : i32
    %62 = vector.broadcast %61 : i32 to vector<16x1xi32>
    %63 = arith.remsi %59, %62 : vector<16x1xi32>
    %c0_i32_28 = arith.constant 0 : i32
    %64 = vector.broadcast %c0_i32_28 : i32 to vector<16x1xi32>
    %65 = arith.cmpi ne, %63, %64 : vector<16x1xi32>
    %c0_i32_29 = arith.constant 0 : i32
    %66 = vector.broadcast %c0_i32_29 : i32 to vector<16x1xi32>
    %67 = arith.cmpi slt, %63, %66 : vector<16x1xi32>
    %c0_i32_30 = arith.constant 0 : i32
    %68 = arith.cmpi slt, %61, %c0_i32_30 : i32
    %69 = vector.broadcast %68 : i1 to vector<16x1xi1>
    %70 = vector.broadcast %69 : vector<16x1xi1> to vector<16x1xi1>
    %71 = arith.xori %67, %70 : vector<16x1xi1>
    %72 = arith.andi %71, %65 : vector<16x1xi1>
    %73 = vector.broadcast %61 : i32 to vector<16x1xi32>
    %74 = arith.addi %63, %73 : vector<16x1xi32>
    %75 = arith.select %72, %74, %63 : vector<16x1xi1>, vector<16x1xi32>
    %c0_i32_31 = arith.constant 0 : i32
    %76 = vector.broadcast %c0_i32_31 : i32 to vector<16x1xi32>
    %77 = arith.cmpi ne, %75, %76 : vector<16x1xi32>
    %78 = arith.extui %77 : vector<16x1xi1> to vector<16x1xi32>
    %79 = arith.sitofp %78 : vector<16x1xi32> to vector<16x1xf32>
    %c15_i32 = arith.constant 15 : i32
    %80 = vector.broadcast %c15_i32 : i32 to vector<16x1xi32>
    %81 = arith.cmpi ne, %75, %80 : vector<16x1xi32>
    %82 = arith.extui %81 : vector<16x1xi1> to vector<16x1xi32>
    %83 = arith.sitofp %82 : vector<16x1xi32> to vector<16x1xf32>
    %c0_32 = arith.constant 0 : index
    %c0_33 = arith.constant 0 : index
    %84 = vector.load %arg13[%c0_32, %c0_33] : memref<3x768xf32, #tpu.memory_space<vmem>>, vector<3x768xf32>
    %c0_34 = arith.constant 0 : index
    %c0_35 = arith.constant 0 : index
    %85 = vector.load %arg17[%c0_34, %c0_35] : memref<1x128xf32, #tpu.memory_space<vmem>>, vector<1x128xf32>
    %86 = vector.extract_strided_slice %58 {offsets = [0, 0], sizes = [16, 128], strides = [1, 1]} : vector<32x384xf32> to vector<16x128xf32>
    %87 = vector.extract_strided_slice %58 {offsets = [0, 128], sizes = [16, 128], strides = [1, 1]} : vector<32x384xf32> to vector<16x128xf32>
    %88 = arith.mulf %86, %87 : vector<16x128xf32>
    %cst_36 = arith.constant dense<0.000000e+00> : vector<16x4xf32>
    %89 = tpu.matmul %88, %2, %cst_36 {dimension_numbers = #tpu.dot_dimension_numbers<[1], [0], [0], [1], [0, 0, 1, 1], [], []>} : vector<16x128xf32>, vector<128x4xf32>, vector<16x4xf32> -> vector<16x4xf32>
    %cst_37 = arith.constant 0.176776692 : f32
    %90 = vector.broadcast %cst_37 : f32 to vector<16x4xf32>
    %91 = arith.mulf %90, %89 : vector<16x4xf32>
    %92 = vector.extract_strided_slice %58 {offsets = [16, 128], sizes = [16, 128], strides = [1, 1]} : vector<32x384xf32> to vector<16x128xf32>
    %93 = arith.mulf %86, %92 : vector<16x128xf32>
    %cst_38 = arith.constant dense<0.000000e+00> : vector<16x4xf32>
    %94 = tpu.matmul %93, %2, %cst_38 {dimension_numbers = #tpu.dot_dimension_numbers<[1], [0], [0], [1], [0, 0, 1, 1], [], []>} : vector<16x128xf32>, vector<128x4xf32>, vector<16x4xf32> -> vector<16x4xf32>
    %cst_39 = arith.constant 0.176776692 : f32
    %95 = vector.broadcast %cst_39 : f32 to vector<16x4xf32>
    %96 = arith.mulf %95, %94 : vector<16x4xf32>
    %97 = arith.maximumf %91, %96 : vector<16x4xf32>
    %98 = arith.subf %91, %97 : vector<16x4xf32>
    %99 = math.exp %98 : vector<16x4xf32>
    %100 = arith.subf %96, %97 : vector<16x4xf32>
    %101 = math.exp %100 : vector<16x4xf32>
    %102 = arith.addf %99, %101 : vector<16x4xf32>
    %103 = tpu.reciprocal %102 {approx = true} : vector<16x4xf32> -> vector<16x4xf32>
    %104 = arith.mulf %99, %103 : vector<16x4xf32>
    %cst_40 = arith.constant dense<0.000000e+00> : vector<16x128xf32>
    %105 = tpu.matmul %104, %3, %cst_40 {dimension_numbers = #tpu.dot_dimension_numbers<[1], [0], [0], [1], [0, 0, 1, 1], [], []>} : vector<16x4xf32>, vector<4x128xf32>, vector<16x128xf32> -> vector<16x128xf32>
    %106 = vector.extract_strided_slice %58 {offsets = [0, 256], sizes = [16, 128], strides = [1, 1]} : vector<32x384xf32> to vector<16x128xf32>
    %107 = arith.mulf %105, %106 : vector<16x128xf32>
    %108 = arith.mulf %101, %103 : vector<16x4xf32>
    %cst_41 = arith.constant dense<0.000000e+00> : vector<16x128xf32>
    %109 = tpu.matmul %108, %3, %cst_41 {dimension_numbers = #tpu.dot_dimension_numbers<[1], [0], [0], [1], [0, 0, 1, 1], [], []>} : vector<16x4xf32>, vector<4x128xf32>, vector<16x128xf32> -> vector<16x128xf32>
    %110 = vector.extract_strided_slice %58 {offsets = [16, 256], sizes = [16, 128], strides = [1, 1]} : vector<32x384xf32> to vector<16x128xf32>
    %111 = arith.mulf %109, %110 : vector<16x128xf32>
    %112 = arith.addf %107, %111 : vector<16x128xf32>
    %c0_42 = arith.constant 0 : index
    %c0_43 = arith.constant 0 : index
    %113 = vector.load %arg6[%c0_42, %c0_43] : memref<128x128xf32, #tpu.memory_space<vmem>>, vector<128x128xf32>
    %cst_44 = arith.constant dense<0.000000e+00> : vector<16x128xf32>
    %114 = tpu.matmul %112, %113, %cst_44 {dimension_numbers = #tpu.dot_dimension_numbers<[1], [0], [0], [1], [0, 0, 1, 1], [], []>} : vector<16x128xf32>, vector<128x128xf32>, vector<16x128xf32> -> vector<16x128xf32>
    %c0_45 = arith.constant 0 : index
    %c0_46 = arith.constant 0 : index
    %115 = vector.load %arg7[%c0_45, %c0_46] : memref<1x128xf32, #tpu.memory_space<vmem>>, vector<1x128xf32>
    %116 = vector.broadcast %115 : vector<1x128xf32> to vector<16x128xf32>
    %117 = arith.addf %114, %116 : vector<16x128xf32>
    %c0_47 = arith.constant 0 : index
    %c0_48 = arith.constant 0 : index
    %c0_49 = arith.constant 0 : index
    %118 = vector.load %arg1[%c0_47, %c0_48, %c0_49] : memref<2x16x128xf32, #tpu.memory_space<vmem>>, vector<1x16x128xf32>
    %119 = vector.shape_cast %118 : vector<1x16x128xf32> to vector<16x128xf32>
    %120 = vector.broadcast %4 : vector<1x128xf32> to vector<16x128xf32>
    %121 = arith.mulf %117, %120 : vector<16x128xf32>
    %122 = arith.addf %119, %121 : vector<16x128xf32>
    %c0_50 = arith.constant 0 : index
    %c0_51 = arith.constant 0 : index
    %123 = vector.load %arg11[%c0_50, %c0_51] : memref<128x768xf32, #tpu.memory_space<vmem>>, vector<128x768xf32>
    %cst_52 = arith.constant dense<0.000000e+00> : vector<16x768xf32>
    %124 = tpu.matmul %122, %123, %cst_52 {dimension_numbers = #tpu.dot_dimension_numbers<[1], [0], [0], [1], [0, 0, 1, 1], [], []>} : vector<16x128xf32>, vector<128x768xf32>, vector<16x768xf32> -> vector<16x768xf32>
    %c0_53 = arith.constant 0 : index
    %c0_54 = arith.constant 0 : index
    %125 = vector.load %arg12[%c0_53, %c0_54] : memref<1x768xf32, #tpu.memory_space<vmem>>, vector<1x768xf32>
    %126 = vector.broadcast %125 : vector<1x768xf32> to vector<16x768xf32>
    %127 = arith.addf %124, %126 : vector<16x768xf32>
    %c1_i32_55 = arith.constant 1 : i32
    %128 = tpu.dynamic_rotate %127 by %c1_i32_55 dim 0 : vector<16x768xf32>, i32 -> vector<16x768xf32>
    %129 = vector.broadcast %79 : vector<16x1xf32> to vector<16x768xf32>
    %130 = arith.mulf %128, %129 : vector<16x768xf32>
    %c15_i32_56 = arith.constant 15 : i32
    %131 = tpu.dynamic_rotate %127 by %c15_i32_56 dim 0 : vector<16x768xf32>, i32 -> vector<16x768xf32>
    %132 = vector.broadcast %83 : vector<16x1xf32> to vector<16x768xf32>
    %133 = arith.mulf %131, %132 : vector<16x768xf32>
    %134 = vector.extract_strided_slice %84 {offsets = [0, 0], sizes = [1, 768], strides = [1, 1]} : vector<3x768xf32> to vector<1x768xf32>
    %135 = vector.broadcast %134 : vector<1x768xf32> to vector<16x768xf32>
    %136 = arith.mulf %130, %135 : vector<16x768xf32>
    %137 = vector.extract_strided_slice %84 {offsets = [1, 0], sizes = [1, 768], strides = [1, 1]} : vector<3x768xf32> to vector<1x768xf32>
    %138 = vector.broadcast %137 : vector<1x768xf32> to vector<16x768xf32>
    %139 = arith.mulf %127, %138 : vector<16x768xf32>
    %140 = arith.addf %136, %139 : vector<16x768xf32>
    %141 = vector.extract_strided_slice %84 {offsets = [2, 0], sizes = [1, 768], strides = [1, 1]} : vector<3x768xf32> to vector<1x768xf32>
    %142 = vector.broadcast %141 : vector<1x768xf32> to vector<16x768xf32>
    %143 = arith.mulf %133, %142 : vector<16x768xf32>
    %144 = arith.addf %140, %143 : vector<16x768xf32>
    %c0_57 = arith.constant 0 : index
    %c0_58 = arith.constant 0 : index
    %145 = vector.load %arg14[%c0_57, %c0_58] : memref<1x768xf32, #tpu.memory_space<vmem>>, vector<1x768xf32>
    %146 = vector.broadcast %145 : vector<1x768xf32> to vector<16x768xf32>
    %147 = arith.addf %144, %146 : vector<16x768xf32>
    %148 = vector.extract_strided_slice %147 {offsets = [0, 0], sizes = [16, 384], strides = [1, 1]} : vector<16x768xf32> to vector<16x384xf32>
    %149 = vector.extract_strided_slice %147 {offsets = [0, 384], sizes = [16, 384], strides = [1, 1]} : vector<16x768xf32> to vector<16x384xf32>
    %150 = arith.negf %149 : vector<16x384xf32>
    %151 = math.exp %150 : vector<16x384xf32>
    %cst_59 = arith.constant 1.000000e+00 : f32
    %152 = vector.broadcast %cst_59 : f32 to vector<16x384xf32>
    %153 = arith.addf %152, %151 : vector<16x384xf32>
    %154 = arith.divf %152, %153 : vector<16x384xf32>
    %155 = arith.mulf %148, %154 : vector<16x384xf32>
    %c0_60 = arith.constant 0 : index
    %c0_61 = arith.constant 0 : index
    %156 = vector.load %arg15[%c0_60, %c0_61] : memref<384x128xf32, #tpu.memory_space<vmem>>, vector<384x128xf32>
    %cst_62 = arith.constant dense<0.000000e+00> : vector<16x128xf32>
    %157 = tpu.matmul %155, %156, %cst_62 {dimension_numbers = #tpu.dot_dimension_numbers<[1], [0], [0], [1], [0, 0, 1, 1], [], []>} : vector<16x384xf32>, vector<384x128xf32>, vector<16x128xf32> -> vector<16x128xf32>
    %c0_63 = arith.constant 0 : index
    %c0_64 = arith.constant 0 : index
    %158 = vector.load %arg16[%c0_63, %c0_64] : memref<1x128xf32, #tpu.memory_space<vmem>>, vector<1x128xf32>
    %159 = vector.broadcast %158 : vector<1x128xf32> to vector<16x128xf32>
    %160 = arith.addf %157, %159 : vector<16x128xf32>
    %161 = vector.broadcast %85 : vector<1x128xf32> to vector<16x128xf32>
    %162 = arith.mulf %160, %161 : vector<16x128xf32>
    %163 = arith.addf %122, %162 : vector<16x128xf32>
    %c0_65 = arith.constant 0 : index
    %c0_66 = arith.constant 0 : index
    %c0_67 = arith.constant 0 : index
    %164 = vector.load %arg18[%c0_65, %c0_66, %c0_67] : memref<2x16x128xf32, #tpu.memory_space<vmem>>, vector<1x16x128xf32>
    %165 = vector.shape_cast %164 : vector<1x16x128xf32> to vector<16x128xf32>
    %166 = vector.shape_cast %163 : vector<16x128xf32> to vector<1x16x128xf32>
    tpu.vector_store %arg18[%c0_65, %c0_66, %c0_67], %166 {strides = array<i32>} : memref<2x16x128xf32, #tpu.memory_space<vmem>>, vector<1x16x128xf32>,
    %167 = vector.extract_strided_slice %58 {offsets = [16, 0], sizes = [16, 128], strides = [1, 1]} : vector<32x384xf32> to vector<16x128xf32>
    %168 = vector.extract_strided_slice %58 {offsets = [0, 128], sizes = [16, 128], strides = [1, 1]} : vector<32x384xf32> to vector<16x128xf32>
    %169 = arith.mulf %167, %168 : vector<16x128xf32>
    %cst_68 = arith.constant dense<0.000000e+00> : vector<16x4xf32>
    %170 = tpu.matmul %169, %2, %cst_68 {dimension_numbers = #tpu.dot_dimension_numbers<[1], [0], [0], [1], [0, 0, 1, 1], [], []>} : vector<16x128xf32>, vector<128x4xf32>, vector<16x4xf32> -> vector<16x4xf32>
    %cst_69 = arith.constant 0.176776692 : f32
    %171 = vector.broadcast %cst_69 : f32 to vector<16x4xf32>
    %172 = arith.mulf %171, %170 : vector<16x4xf32>
    %173 = vector.extract_strided_slice %58 {offsets = [16, 128], sizes = [16, 128], strides = [1, 1]} : vector<32x384xf32> to vector<16x128xf32>
    %174 = arith.mulf %167, %173 : vector<16x128xf32>
    %cst_70 = arith.constant dense<0.000000e+00> : vector<16x4xf32>
    %175 = tpu.matmul %174, %2, %cst_70 {dimension_numbers = #tpu.dot_dimension_numbers<[1], [0], [0], [1], [0, 0, 1, 1], [], []>} : vector<16x128xf32>, vector<128x4xf32>, vector<16x4xf32> -> vector<16x4xf32>
    %cst_71 = arith.constant 0.176776692 : f32
    %176 = vector.broadcast %cst_71 : f32 to vector<16x4xf32>
    %177 = arith.mulf %176, %175 : vector<16x4xf32>
    %178 = arith.maximumf %172, %177 : vector<16x4xf32>
    %179 = arith.subf %172, %178 : vector<16x4xf32>
    %180 = math.exp %179 : vector<16x4xf32>
    %181 = arith.subf %177, %178 : vector<16x4xf32>
    %182 = math.exp %181 : vector<16x4xf32>
    %183 = arith.addf %180, %182 : vector<16x4xf32>
    %184 = tpu.reciprocal %183 {approx = true} : vector<16x4xf32> -> vector<16x4xf32>
    %185 = arith.mulf %180, %184 : vector<16x4xf32>
    %cst_72 = arith.constant dense<0.000000e+00> : vector<16x128xf32>
    %186 = tpu.matmul %185, %3, %cst_72 {dimension_numbers = #tpu.dot_dimension_numbers<[1], [0], [0], [1], [0, 0, 1, 1], [], []>} : vector<16x4xf32>, vector<4x128xf32>, vector<16x128xf32> -> vector<16x128xf32>
    %187 = vector.extract_strided_slice %58 {offsets = [0, 256], sizes = [16, 128], strides = [1, 1]} : vector<32x384xf32> to vector<16x128xf32>
    %188 = arith.mulf %186, %187 : vector<16x128xf32>
    %189 = arith.mulf %182, %184 : vector<16x4xf32>
    %cst_73 = arith.constant dense<0.000000e+00> : vector<16x128xf32>
    %190 = tpu.matmul %189, %3, %cst_73 {dimension_numbers = #tpu.dot_dimension_numbers<[1], [0], [0], [1], [0, 0, 1, 1], [], []>} : vector<16x4xf32>, vector<4x128xf32>, vector<16x128xf32> -> vector<16x128xf32>
    %191 = vector.extract_strided_slice %58 {offsets = [16, 256], sizes = [16, 128], strides = [1, 1]} : vector<32x384xf32> to vector<16x128xf32>
    %192 = arith.mulf %190, %191 : vector<16x128xf32>
    %193 = arith.addf %188, %192 : vector<16x128xf32>
    %c0_74 = arith.constant 0 : index
    %c0_75 = arith.constant 0 : index
    %194 = vector.load %arg6[%c0_74, %c0_75] : memref<128x128xf32, #tpu.memory_space<vmem>>, vector<128x128xf32>
    %cst_76 = arith.constant dense<0.000000e+00> : vector<16x128xf32>
    %195 = tpu.matmul %193, %194, %cst_76 {dimension_numbers = #tpu.dot_dimension_numbers<[1], [0], [0], [1], [0, 0, 1, 1], [], []>} : vector<16x128xf32>, vector<128x128xf32>, vector<16x128xf32> -> vector<16x128xf32>
    %c0_77 = arith.constant 0 : index
    %c0_78 = arith.constant 0 : index
    %196 = vector.load %arg7[%c0_77, %c0_78] : memref<1x128xf32, #tpu.memory_space<vmem>>, vector<1x128xf32>
    %197 = vector.broadcast %196 : vector<1x128xf32> to vector<16x128xf32>
    %198 = arith.addf %195, %197 : vector<16x128xf32>
    %c1_79 = arith.constant 1 : index
    %c0_80 = arith.constant 0 : index
    %c0_81 = arith.constant 0 : index
    %199 = vector.load %arg1[%c1_79, %c0_80, %c0_81] : memref<2x16x128xf32, #tpu.memory_space<vmem>>, vector<1x16x128xf32>
    %200 = vector.shape_cast %199 : vector<1x16x128xf32> to vector<16x128xf32>
    %201 = vector.broadcast %4 : vector<1x128xf32> to vector<16x128xf32>
    %202 = arith.mulf %198, %201 : vector<16x128xf32>
    %203 = arith.addf %200, %202 : vector<16x128xf32>
    %c0_82 = arith.constant 0 : index
    %c0_83 = arith.constant 0 : index
    %204 = vector.load %arg11[%c0_82, %c0_83] : memref<128x768xf32, #tpu.memory_space<vmem>>, vector<128x768xf32>
    %cst_84 = arith.constant dense<0.000000e+00> : vector<16x768xf32>
    %205 = tpu.matmul %203, %204, %cst_84 {dimension_numbers = #tpu.dot_dimension_numbers<[1], [0], [0], [1], [0, 0, 1, 1], [], []>} : vector<16x128xf32>, vector<128x768xf32>, vector<16x768xf32> -> vector<16x768xf32>
    %c0_85 = arith.constant 0 : index
    %c0_86 = arith.constant 0 : index
    %206 = vector.load %arg12[%c0_85, %c0_86] : memref<1x768xf32, #tpu.memory_space<vmem>>, vector<1x768xf32>
    %207 = vector.broadcast %206 : vector<1x768xf32> to vector<16x768xf32>
    %208 = arith.addf %205, %207 : vector<16x768xf32>
    %c1_i32_87 = arith.constant 1 : i32
    %209 = tpu.dynamic_rotate %208 by %c1_i32_87 dim 0 : vector<16x768xf32>, i32 -> vector<16x768xf32>
    %210 = vector.broadcast %79 : vector<16x1xf32> to vector<16x768xf32>
    %211 = arith.mulf %209, %210 : vector<16x768xf32>
    %c15_i32_88 = arith.constant 15 : i32
    %212 = tpu.dynamic_rotate %208 by %c15_i32_88 dim 0 : vector<16x768xf32>, i32 -> vector<16x768xf32>
    %213 = vector.broadcast %83 : vector<16x1xf32> to vector<16x768xf32>
    %214 = arith.mulf %212, %213 : vector<16x768xf32>
    %215 = vector.extract_strided_slice %84 {offsets = [0, 0], sizes = [1, 768], strides = [1, 1]} : vector<3x768xf32> to vector<1x768xf32>
    %216 = vector.broadcast %215 : vector<1x768xf32> to vector<16x768xf32>
    %217 = arith.mulf %211, %216 : vector<16x768xf32>
    %218 = vector.extract_strided_slice %84 {offsets = [1, 0], sizes = [1, 768], strides = [1, 1]} : vector<3x768xf32> to vector<1x768xf32>
    %219 = vector.broadcast %218 : vector<1x768xf32> to vector<16x768xf32>
    %220 = arith.mulf %208, %219 : vector<16x768xf32>
    %221 = arith.addf %217, %220 : vector<16x768xf32>
    %222 = vector.extract_strided_slice %84 {offsets = [2, 0], sizes = [1, 768], strides = [1, 1]} : vector<3x768xf32> to vector<1x768xf32>
    %223 = vector.broadcast %222 : vector<1x768xf32> to vector<16x768xf32>
    %224 = arith.mulf %214, %223 : vector<16x768xf32>
    %225 = arith.addf %221, %224 : vector<16x768xf32>
    %c0_89 = arith.constant 0 : index
    %c0_90 = arith.constant 0 : index
    %226 = vector.load %arg14[%c0_89, %c0_90] : memref<1x768xf32, #tpu.memory_space<vmem>>, vector<1x768xf32>
    %227 = vector.broadcast %226 : vector<1x768xf32> to vector<16x768xf32>
    %228 = arith.addf %225, %227 : vector<16x768xf32>
    %229 = vector.extract_strided_slice %228 {offsets = [0, 0], sizes = [16, 384], strides = [1, 1]} : vector<16x768xf32> to vector<16x384xf32>
    %230 = vector.extract_strided_slice %228 {offsets = [0, 384], sizes = [16, 384], strides = [1, 1]} : vector<16x768xf32> to vector<16x384xf32>
    %231 = arith.negf %230 : vector<16x384xf32>
    %232 = math.exp %231 : vector<16x384xf32>
    %cst_91 = arith.constant 1.000000e+00 : f32
    %233 = vector.broadcast %cst_91 : f32 to vector<16x384xf32>
    %234 = arith.addf %233, %232 : vector<16x384xf32>
    %235 = arith.divf %233, %234 : vector<16x384xf32>
    %236 = arith.mulf %229, %235 : vector<16x384xf32>
    %c0_92 = arith.constant 0 : index
    %c0_93 = arith.constant 0 : index
    %237 = vector.load %arg15[%c0_92, %c0_93] : memref<384x128xf32, #tpu.memory_space<vmem>>, vector<384x128xf32>
    %cst_94 = arith.constant dense<0.000000e+00> : vector<16x128xf32>
    %238 = tpu.matmul %236, %237, %cst_94 {dimension_numbers = #tpu.dot_dimension_numbers<[1], [0], [0], [1], [0, 0, 1, 1], [], []>} : vector<16x384xf32>, vector<384x128xf32>, vector<16x128xf32> -> vector<16x128xf32>
    %c0_95 = arith.constant 0 : index
    %c0_96 = arith.constant 0 : index
    %239 = vector.load %arg16[%c0_95, %c0_96] : memref<1x128xf32, #tpu.memory_space<vmem>>, vector<1x128xf32>
    %240 = vector.broadcast %239 : vector<1x128xf32> to vector<16x128xf32>
    %241 = arith.addf %238, %240 : vector<16x128xf32>
    %242 = vector.broadcast %85 : vector<1x128xf32> to vector<16x128xf32>
    %243 = arith.mulf %241, %242 : vector<16x128xf32>
    %244 = arith.addf %203, %243 : vector<16x128xf32>
    %c1_97 = arith.constant 1 : index
    %c0_98 = arith.constant 0 : index
    %c0_99 = arith.constant 0 : index
    %245 = vector.load %arg18[%c1_97, %c0_98, %c0_99] : memref<2x16x128xf32, #tpu.memory_space<vmem>>, vector<1x16x128xf32>
    %246 = vector.shape_cast %245 : vector<1x16x128xf32> to vector<16x128xf32>
    %247 = vector.shape_cast %244 : vector<16x128xf32> to vector<1x16x128xf32>
    tpu.vector_store %arg18[%c1_97, %c0_98, %c0_99], %247 {strides = array<i32>} : memref<2x16x128xf32, #tpu.memory_space<vmem>>, vector<1x16x128xf32>,
    return
  }
  func.func @transform_0(%arg0: i32) -> (i32, i32, i32) {
    %c0_i32 = arith.constant 0 : i32
    %c0_i32_0 = arith.constant 0 : i32
    %c0_i32_1 = arith.constant 0 : i32
    return %c0_i32, %arg0, %c0_i32_0 : i32, i32, i32
  }
  func.func @transform_1(%arg0: i32) -> (i32, i32) {
    %c0_i32 = arith.constant 0 : i32
    %c0_i32_0 = arith.constant 0 : i32
    %c0_i32_1 = arith.constant 0 : i32
    return %c0_i32, %c0_i32_0 : i32, i32
  }
  func.func @transform_2(%arg0: i32) -> (i32, i32) {
    %c0_i32 = arith.constant 0 : i32
    %c0_i32_0 = arith.constant 0 : i32
    %c0_i32_1 = arith.constant 0 : i32
    return %c0_i32, %c0_i32_0 : i32, i32
  }
  func.func @transform_3(%arg0: i32) -> (i32, i32) {
    %c0_i32 = arith.constant 0 : i32
    %c0_i32_0 = arith.constant 0 : i32
    %c0_i32_1 = arith.constant 0 : i32
    return %c0_i32, %c0_i32_0 : i32, i32
  }
  func.func @transform_4(%arg0: i32) -> (i32, i32) {
    %c0_i32 = arith.constant 0 : i32
    %c0_i32_0 = arith.constant 0 : i32
    %c0_i32_1 = arith.constant 0 : i32
    return %c0_i32, %c0_i32_0 : i32, i32
  }
  func.func @transform_5(%arg0: i32) -> (i32, i32) {
    %c0_i32 = arith.constant 0 : i32
    %c0_i32_0 = arith.constant 0 : i32
    %c0_i32_1 = arith.constant 0 : i32
    return %c0_i32, %c0_i32_0 : i32, i32
  }
  func.func @transform_6(%arg0: i32) -> (i32, i32) {
    %c0_i32 = arith.constant 0 : i32
    %c0_i32_0 = arith.constant 0 : i32
    %c0_i32_1 = arith.constant 0 : i32
    return %c0_i32, %c0_i32_0 : i32, i32
  }
  func.func @transform_7(%arg0: i32) -> (i32, i32) {
    %c0_i32 = arith.constant 0 : i32
    %c0_i32_0 = arith.constant 0 : i32
    %c0_i32_1 = arith.constant 0 : i32
    return %c0_i32, %c0_i32_0 : i32, i32
  }
  func.func @transform_8(%arg0: i32) -> (i32, i32) {
    %c0_i32 = arith.constant 0 : i32
    %c0_i32_0 = arith.constant 0 : i32
    %c0_i32_1 = arith.constant 0 : i32
    return %c0_i32, %c0_i32_0 : i32, i32
  }
  func.func @transform_9(%arg0: i32) -> (i32, i32) {
    %c0_i32 = arith.constant 0 : i32
    %c0_i32_0 = arith.constant 0 : i32
    %c0_i32_1 = arith.constant 0 : i32
    return %c0_i32, %c0_i32_0 : i32, i32
  }
  func.func @transform_10(%arg0: i32) -> (i32, i32) {
    %c0_i32 = arith.constant 0 : i32
    %c0_i32_0 = arith.constant 0 : i32
    %c0_i32_1 = arith.constant 0 : i32
    return %c0_i32, %c0_i32_0 : i32, i32
  }
  func.func @transform_11(%arg0: i32) -> (i32, i32) {
    %c0_i32 = arith.constant 0 : i32
    %c0_i32_0 = arith.constant 0 : i32
    %c0_i32_1 = arith.constant 0 : i32
    return %c0_i32, %c0_i32_0 : i32, i32
  }
  func.func @transform_12(%arg0: i32) -> (i32, i32) {
    %c0_i32 = arith.constant 0 : i32
    %c0_i32_0 = arith.constant 0 : i32
    %c0_i32_1 = arith.constant 0 : i32
    return %c0_i32, %c0_i32_0 : i32, i32
  }
  func.func @transform_13(%arg0: i32) -> (i32, i32) {
    %c0_i32 = arith.constant 0 : i32
    %c0_i32_0 = arith.constant 0 : i32
    %c0_i32_1 = arith.constant 0 : i32
    return %c0_i32, %c0_i32_0 : i32, i32
  }
  func.func @transform_14(%arg0: i32) -> (i32, i32) {
    %c0_i32 = arith.constant 0 : i32
    %c0_i32_0 = arith.constant 0 : i32
    %c0_i32_1 = arith.constant 0 : i32
    return %c0_i32, %c0_i32_0 : i32, i32
  }
  func.func @transform_15(%arg0: i32) -> (i32, i32) {
    %c0_i32 = arith.constant 0 : i32
    %c0_i32_0 = arith.constant 0 : i32
    %c0_i32_1 = arith.constant 0 : i32
    return %c0_i32, %c0_i32_0 : i32, i32
  }
  func.func @transform_16(%arg0: i32) -> (i32, i32) {
    %c0_i32 = arith.constant 0 : i32
    %c0_i32_0 = arith.constant 0 : i32
    %c0_i32_1 = arith.constant 0 : i32
    return %c0_i32, %c0_i32_0 : i32, i32
  }
  func.func @transform_17(%arg0: i32) -> (i32, i32, i32) {
    %c0_i32 = arith.constant 0 : i32
    %c0_i32_0 = arith.constant 0 : i32
    %c0_i32_1 = arith.constant 0 : i32
    return %c0_i32, %arg0, %c0_i32_0 : i32, i32, i32
  }
}

</mosaic_0001>

<llo_original>
// kernel: cs_transformer_forward.1
$region0: #{cs_transformer_forward.1}
  #allocation0 [shape = 'u32[]', space=smem, size = 0x4, offset = 0x4, fixed_abs, tag = 'smem constant byte address 0x4 - core index']
  #allocation1 [shape = 'u32[144,128]{1,0:T(1,128)}', space=vmem, size = 0x12000, scoped, tag = 'internal scratch']
  %s0 = inlined_call_operand.vmem [shape: f32[2,32,128], index: 0, kind: input, shape index: {}]
  %s1 = inlined_call_operand.vmem [shape: f32[1,128], index: 1, kind: input, shape index: {}]
  %s2 = inlined_call_operand.vmem [shape: f32[1,128], index: 2, kind: input, shape index: {}]
  %s3 = inlined_call_operand.vmem [shape: f32[128,384], index: 3, kind: input, shape index: {}]
  %s4 = inlined_call_operand.vmem [shape: f32[1,384], index: 4, kind: input, shape index: {}]
  %s5 = inlined_call_operand.vmem [shape: f32[128,128], index: 5, kind: input, shape index: {}]
  %s6 = inlined_call_operand.vmem [shape: f32[1,128], index: 6, kind: input, shape index: {}]
  %s7 = inlined_call_operand.vmem [shape: f32[128,4], index: 7, kind: input, shape index: {}]
  %s8 = inlined_call_operand.vmem [shape: f32[4,128], index: 8, kind: input, shape index: {}]
  %s9 = inlined_call_operand.vmem [shape: f32[1,128], index: 9, kind: input, shape index: {}]
  %s10 = inlined_call_operand.vmem [shape: f32[128,768], index: 10, kind: input, shape index: {}]
  %s11 = inlined_call_operand.vmem [shape: f32[1,768], index: 11, kind: input, shape index: {}]
  %s12 = inlined_call_operand.vmem [shape: f32[3,768], index: 12, kind: input, shape index: {}]
  %s13 = inlined_call_operand.vmem [shape: f32[1,768], index: 13, kind: input, shape index: {}]
  %s14 = inlined_call_operand.vmem [shape: f32[384,128], index: 14, kind: input, shape index: {}]
  %s15 = inlined_call_operand.vmem [shape: f32[1,128], index: 15, kind: input, shape index: {}]
  %s16 = inlined_call_operand.vmem [shape: f32[1,128], index: 16, kind: input, shape index: {}]
  %s17 = inlined_call_operand.vmem [shape: f32[2,32,128], index: 17, kind: output, shape index: {}]
  %s18 = sld [smem:[#allocation0]]
  $region173: #{cs_transformer_forward.1} parent=0
    _
  %s20 = ssub.s32 1, %s18
  %s21 = scalar_select 0, %s20, %s18
  $region1: #{cs_transformer_forward.1} parent=0
    #allocation2 [shape = 'u8[32768]{0}', space=vmem, size = 0x8000, scoped, tag = 'input window, operand 0']
    #allocation3 [shape = 'u8[32768]{0}', space=vmem, size = 0x8000, scoped, tag = 'output window, operand 0']
    loop: start=0, step=1, limit=4
    $region2: #{cs_transformer_forward.1} parent=1 // loop_pre_header
      _
    $region3: #{cs_transformer_forward.1} parent=1 // loop_header
      %s23 = sphi 0, %s27
      %p24 = scmp.ge.s32.totalorder %s23, 4
      %s33 = sphi 0, %s35
      %s36 = sphi 0, %s33
      %s37 = sphi 0, %s36
      %s53 = sphi 0, %s37
      %s57 = sphi 0, %s57
      %s59 = sphi 0, %s57
      %s60 = sphi 0, %s59
      %s74 = sphi 0, %s60
      %s78 = sphi 0, %s78
      %s80 = sphi 0, %s78
      %s81 = sphi 0, %s80
      %s95 = sphi 0, %s81
      %s99 = sphi 0, %s99
      %s101 = sphi 0, %s99
      %s102 = sphi 0, %s101
      %s116 = sphi 0, %s102
      %s120 = sphi 0, %s120
      %s122 = sphi 0, %s120
      %s123 = sphi 0, %s122
      %s137 = sphi 0, %s123
      %s141 = sphi 0, %s141
      %s143 = sphi 0, %s141
      %s144 = sphi 0, %s143
      %s158 = sphi 0, %s144
      %s162 = sphi 0, %s162
      %s164 = sphi 0, %s162
      %s165 = sphi 0, %s164
      %s179 = sphi 0, %s165
      %s183 = sphi 0, %s183
      %s185 = sphi 0, %s183
      %s186 = sphi 0, %s185
      %s200 = sphi 0, %s186
      %s204 = sphi 0, %s204
      %s206 = sphi 0, %s204
      %s207 = sphi 0, %s206
      %s221 = sphi 0, %s207
      %s225 = sphi 0, %s225
      %s227 = sphi 0, %s225
      %s228 = sphi 0, %s227
      %s242 = sphi 0, %s228
      %s246 = sphi 0, %s246
      %s248 = sphi 0, %s246
      %s249 = sphi 0, %s248
      %s263 = sphi 0, %s249
      %s267 = sphi 0, %s267
      %s269 = sphi 0, %s267
      %s270 = sphi 0, %s269
      %s284 = sphi 0, %s270
      %s288 = sphi 0, %s288
      %s290 = sphi 0, %s288
      %s291 = sphi 0, %s290
      %s305 = sphi 0, %s291
      %s309 = sphi 0, %s309
      %s311 = sphi 0, %s309
      %s312 = sphi 0, %s311
      %s326 = sphi 0, %s312
      %s330 = sphi 0, %s330
      %s332 = sphi 0, %s330
      %s333 = sphi 0, %s332
      %s347 = sphi 0, %s333
      %s351 = sphi 0, %s351
      %s353 = sphi 0, %s351
      %s354 = sphi 0, %s353
      %s368 = sphi 0, %s354
      %s372 = sphi 0, %s372
      %s374 = sphi 0, %s372
      %s375 = sphi 0, %s374
      %s389 = sphi 0, %s375
      %s395 = sphi 0, %s397
      %s398 = sphi 0, %s395
      %s399 = sphi 0, %s398
      %s415 = sphi 0, %s399
    $region4: #{cs_transformer_forward.1} parent=1 // loop_header_branch
      %26 = sbr.rel (%p24) target = $region8
    $region5: #{cs_transformer_forward.1} parent=1 // loop_body
      %s28 = ssub.s32 %s23, 1
      %s29 = ssub.s32 %s23, 2
      %s30 = sadd.s32 %s23, 1
      %s31 = ssub.s32 %s23, %s30
      %p32 = scmp.eq.s32.totalorder %s31, 0
      %s34 = sadd.s32 %s33, 1
      %s35 = scalar_select %p32, %s33, %s34
      %p38 = pneg %p32
      %p39 = scmp.eq.s32.totalorder %s23, 1
      %p40 = por %p38, %p39
      %p41 = scmp.ne.s32.totalorder %s33, %s36
      %p42 = scmp.eq.s32.totalorder %s23, 0
      %p43 = por %p41, %p42
      %p44 = scmp.ne.s32.totalorder %s33, %s36
      %p45 = scmp.eq.s32.totalorder %s28, 1
      %p46 = por %p44, %p45
      %p47 = scmp.ne.s32.totalorder %s36, %s37
      %p48 = scmp.eq.s32.totalorder %s28, 0
      %p49 = por %p47, %p48
      %p50 = scmp.ne.s32.totalorder %s36, %s37
      %p51 = scmp.eq.s32.totalorder %s29, 1
      %p52 = por %p50, %p51
      %p54 = scmp.ne.s32.totalorder %s37, %s53
      %p55 = scmp.eq.s32.totalorder %s29, 0
      %p56 = por %p54, %p55
      %s58 = sadd.s32 %s57, 1
      %p61 = scmp.eq.s32.totalorder %s23, 1
      %p62 = scmp.ne.s32.totalorder %s57, %s59
      %p63 = scmp.eq.s32.totalorder %s23, 0
      %p64 = por %p62, %p63
      %p65 = scmp.ne.s32.totalorder %s57, %s59
      %p66 = scmp.eq.s32.totalorder %s28, 1
      %p67 = por %p65, %p66
      %p68 = scmp.ne.s32.totalorder %s59, %s60
      %p69 = scmp.eq.s32.totalorder %s28, 0
      %p70 = por %p68, %p69
      %p71 = scmp.ne.s32.totalorder %s59, %s60
      %p72 = scmp.eq.s32.totalorder %s29, 1
      %p73 = por %p71, %p72
      %p75 = scmp.ne.s32.totalorder %s60, %s74
      %p76 = scmp.eq.s32.totalorder %s29, 0
      %p77 = por %p75, %p76
      %s79 = sadd.s32 %s78, 1
      %p82 = scmp.eq.s32.totalorder %s23, 1
      %p83 = scmp.ne.s32.totalorder %s78, %s80
      %p84 = scmp.eq.s32.totalorder %s23, 0
      %p85 = por %p83, %p84
      %p86 = scmp.ne.s32.totalorder %s78, %s80
      %p87 = scmp.eq.s32.totalorder %s28, 1
      %p88 = por %p86, %p87
      %p89 = scmp.ne.s32.totalorder %s80, %s81
      %p90 = scmp.eq.s32.totalorder %s28, 0
      %p91 = por %p89, %p90
      %p92 = scmp.ne.s32.totalorder %s80, %s81
      %p93 = scmp.eq.s32.totalorder %s29, 1
      %p94 = por %p92, %p93
      %p96 = scmp.ne.s32.totalorder %s81, %s95
      %p97 = scmp.eq.s32.totalorder %s29, 0
      %p98 = por %p96, %p97
      %s100 = sadd.s32 %s99, 1
      %p103 = scmp.eq.s32.totalorder %s23, 1
      %p104 = scmp.ne.s32.totalorder %s99, %s101
      %p105 = scmp.eq.s32.totalorder %s23, 0
      %p106 = por %p104, %p105
      %p107 = scmp.ne.s32.totalorder %s99, %s101
      %p108 = scmp.eq.s32.totalorder %s28, 1
      %p109 = por %p107, %p108
      %p110 = scmp.ne.s32.totalorder %s101, %s102
      %p111 = scmp.eq.s32.totalorder %s28, 0
      %p112 = por %p110, %p111
      %p113 = scmp.ne.s32.totalorder %s101, %s102
      %p114 = scmp.eq.s32.totalorder %s29, 1
      %p115 = por %p113, %p114
      %p117 = scmp.ne.s32.totalorder %s102, %s116
      %p118 = scmp.eq.s32.totalorder %s29, 0
      %p119 = por %p117, %p118
      %s121 = sadd.s32 %s120, 1
      %p124 = scmp.eq.s32.totalorder %s23, 1
      %p125 = scmp.ne.s32.totalorder %s120, %s122
      %p126 = scmp.eq.s32.totalorder %s23, 0
      %p127 = por %p125, %p126
      %p128 = scmp.ne.s32.totalorder %s120, %s122
      %p129 = scmp.eq.s32.totalorder %s28, 1
      %p130 = por %p128, %p129
      %p131 = scmp.ne.s32.totalorder %s122, %s123
      %p132 = scmp.eq.s32.totalorder %s28, 0
      %p133 = por %p131, %p132
      %p134 = scmp.ne.s32.totalorder %s122, %s123
      %p135 = scmp.eq.s32.totalorder %s29, 1
      %p136 = por %p134, %p135
      %p138 = scmp.ne.s32.totalorder %s123, %s137
      %p139 = scmp.eq.s32.totalorder %s29, 0
      %p140 = por %p138, %p139
      %s142 = sadd.s32 %s141, 1
      %p145 = scmp.eq.s32.totalorder %s23, 1
      %p146 = scmp.ne.s32.totalorder %s141, %s143
      %p147 = scmp.eq.s32.totalorder %s23, 0
      %p148 = por %p146, %p147
      %p149 = scmp.ne.s32.totalorder %s141, %s143
      %p150 = scmp.eq.s32.totalorder %s28, 1
      %p151 = por %p149, %p150
      %p152 = scmp.ne.s32.totalorder %s143, %s144
      %p153 = scmp.eq.s32.totalorder %s28, 0
      %p154 = por %p152, %p153
      %p155 = scmp.ne.s32.totalorder %s143, %s144
      %p156 = scmp.eq.s32.totalorder %s29, 1
      %p157 = por %p155, %p156
      %p159 = scmp.ne.s32.totalorder %s144, %s158
      %p160 = scmp.eq.s32.totalorder %s29, 0
      %p161 = por %p159, %p160
      %s163 = sadd.s32 %s162, 1
      %p166 = scmp.eq.s32.totalorder %s23, 1
      %p167 = scmp.ne.s32.totalorder %s162, %s164
      %p168 = scmp.eq.s32.totalorder %s23, 0
      %p169 = por %p167, %p168
      %p170 = scmp.ne.s32.totalorder %s162, %s164
      %p171 = scmp.eq.s32.totalorder %s28, 1
      %p172 = por %p170, %p171
      %p173 = scmp.ne.s32.totalorder %s164, %s165
      %p174 = scmp.eq.s32.totalorder %s28, 0
      %p175 = por %p173, %p174
      %p176 = scmp.ne.s32.totalorder %s164, %s165
      %p177 = scmp.eq.s32.totalorder %s29, 1
      %p178 = por %p176, %p177
      %p180 = scmp.ne.s32.totalorder %s165, %s179
      %p181 = scmp.eq.s32.totalorder %s29, 0
      %p182 = por %p180, %p181
      %s184 = sadd.s32 %s183, 1
      %p187 = scmp.eq.s32.totalorder %s23, 1
      %p188 = scmp.ne.s32.totalorder %s183, %s185
      %p189 = scmp.eq.s32.totalorder %s23, 0
      %p190 = por %p188, %p189
      %p191 = scmp.ne.s32.totalorder %s183, %s185
      %p192 = scmp.eq.s32.totalorder %s28, 1
      %p193 = por %p191, %p192
      %p194 = scmp.ne.s32.totalorder %s185, %s186
      %p195 = scmp.eq.s32.totalorder %s28, 0
      %p196 = por %p194, %p195
      %p197 = scmp.ne.s32.totalorder %s185, %s186
      %p198 = scmp.eq.s32.totalorder %s29, 1
      %p199 = por %p197, %p198
      %p201 = scmp.ne.s32.totalorder %s186, %s200
      %p202 = scmp.eq.s32.totalorder %s29, 0
      %p203 = por %p201, %p202
      %s205 = sadd.s32 %s204, 1
      %p208 = scmp.eq.s32.totalorder %s23, 1
      %p209 = scmp.ne.s32.totalorder %s204, %s206
      %p210 = scmp.eq.s32.totalorder %s23, 0
      %p211 = por %p209, %p210
      %p212 = scmp.ne.s32.totalorder %s204, %s206
      %p213 = scmp.eq.s32.totalorder %s28, 1
      %p214 = por %p212, %p213
      %p215 = scmp.ne.s32.totalorder %s206, %s207
      %p216 = scmp.eq.s32.totalorder %s28, 0
      %p217 = por %p215, %p216
      %p218 = scmp.ne.s32.totalorder %s206, %s207
      %p219 = scmp.eq.s32.totalorder %s29, 1
      %p220 = por %p218, %p219
      %p222 = scmp.ne.s32.totalorder %s207, %s221
      %p223 = scmp.eq.s32.totalorder %s29, 0
      %p224 = por %p222, %p223
      %s226 = sadd.s32 %s225, 1
      %p229 = scmp.eq.s32.totalorder %s23, 1
      %p230 = scmp.ne.s32.totalorder %s225, %s227
      %p231 = scmp.eq.s32.totalorder %s23, 0
      %p232 = por %p230, %p231
      %p233 = scmp.ne.s32.totalorder %s225, %s227
      %p234 = scmp.eq.s32.totalorder %s28, 1
      %p235 = por %p233, %p234
      %p236 = scmp.ne.s32.totalorder %s227, %s228
      %p237 = scmp.eq.s32.totalorder %s28, 0
      %p238 = por %p236, %p237
      %p239 = scmp.ne.s32.totalorder %s227, %s228
      %p240 = scmp.eq.s32.totalorder %s29, 1
      %p241 = por %p239, %p240
      %p243 = scmp.ne.s32.totalorder %s228, %s242
      %p244 = scmp.eq.s32.totalorder %s29, 0
      %p245 = por %p243, %p244
      %s247 = sadd.s32 %s246, 1
      %p250 = scmp.eq.s32.totalorder %s23, 1
      %p251 = scmp.ne.s32.totalorder %s246, %s248
      %p252 = scmp.eq.s32.totalorder %s23, 0
      %p253 = por %p251, %p252
      %p254 = scmp.ne.s32.totalorder %s246, %s248
      %p255 = scmp.eq.s32.totalorder %s28, 1
      %p256 = por %p254, %p255
      %p257 = scmp.ne.s32.totalorder %s248, %s249
      %p258 = scmp.eq.s32.totalorder %s28, 0
      %p259 = por %p257, %p258
      %p260 = scmp.ne.s32.totalorder %s248, %s249
      %p261 = scmp.eq.s32.totalorder %s29, 1
      %p262 = por %p260, %p261
      %p264 = scmp.ne.s32.totalorder %s249, %s263
      %p265 = scmp.eq.s32.totalorder %s29, 0
      %p266 = por %p264, %p265
      %s268 = sadd.s32 %s267, 1
      %p271 = scmp.eq.s32.totalorder %s23, 1
      %p272 = scmp.ne.s32.totalorder %s267, %s269
      %p273 = scmp.eq.s32.totalorder %s23, 0
      %p274 = por %p272, %p273
      %p275 = scmp.ne.s32.totalorder %s267, %s269
      %p276 = scmp.eq.s32.totalorder %s28, 1
      %p277 = por %p275, %p276
      %p278 = scmp.ne.s32.totalorder %s269, %s270
      %p279 = scmp.eq.s32.totalorder %s28, 0
      %p280 = por %p278, %p279
      %p281 = scmp.ne.s32.totalorder %s269, %s270
      %p282 = scmp.eq.s32.totalorder %s29, 1
      %p283 = por %p281, %p282
      %p285 = scmp.ne.s32.totalorder %s270, %s284
      %p286 = scmp.eq.s32.totalorder %s29, 0
      %p287 = por %p285, %p286
      %s289 = sadd.s32 %s288, 1
      %p292 = scmp.eq.s32.totalorder %s23, 1
      %p293 = scmp.ne.s32.totalorder %s288, %s290
      %p294 = scmp.eq.s32.totalorder %s23, 0
      %p295 = por %p293, %p294
      %p296 = scmp.ne.s32.totalorder %s288, %s290
      %p297 = scmp.eq.s32.totalorder %s28, 1
      %p298 = por %p296, %p297
      %p299 = scmp.ne.s32.totalorder %s290, %s291
      %p300 = scmp.eq.s32.totalorder %s28, 0
      %p301 = por %p299, %p300
      %p302 = scmp.ne.s32.totalorder %s290, %s291
      %p303 = scmp.eq.s32.totalorder %s29, 1
      %p304 = por %p302, %p303
      %p306 = scmp.ne.s32.totalorder %s291, %s305
      %p307 = scmp.eq.s32.totalorder %s29, 0
      %p308 = por %p306, %p307
      %s310 = sadd.s32 %s309, 1
      %p313 = scmp.eq.s32.totalorder %s23, 1
      %p314 = scmp.ne.s32.totalorder %s309, %s311
      %p315 = scmp.eq.s32.totalorder %s23, 0
      %p316 = por %p314, %p315
      %p317 = scmp.ne.s32.totalorder %s309, %s311
      %p318 = scmp.eq.s32.totalorder %s28, 1
      %p319 = por %p317, %p318
      %p320 = scmp.ne.s32.totalorder %s311, %s312
      %p321 = scmp.eq.s32.totalorder %s28, 0
      %p322 = por %p320, %p321
      %p323 = scmp.ne.s32.totalorder %s311, %s312
      %p324 = scmp.eq.s32.totalorder %s29, 1
      %p325 = por %p323, %p324
      %p327 = scmp.ne.s32.totalorder %s312, %s326
      %p328 = scmp.eq.s32.totalorder %s29, 0
      %p329 = por %p327, %p328
      %s331 = sadd.s32 %s330, 1
      %p334 = scmp.eq.s32.totalorder %s23, 1
      %p335 = scmp.ne.s32.totalorder %s330, %s332
      %p336 = scmp.eq.s32.totalorder %s23, 0
      %p337 = por %p335, %p336
      %p338 = scmp.ne.s32.totalorder %s330, %s332
      %p339 = scmp.eq.s32.totalorder %s28, 1
      %p340 = por %p338, %p339
      %p341 = scmp.ne.s32.totalorder %s332, %s333
      %p342 = scmp.eq.s32.totalorder %s28, 0
      %p343 = por %p341, %p342
      %p344 = scmp.ne.s32.totalorder %s332, %s333
      %p345 = scmp.eq.s32.totalorder %s29, 1
      %p346 = por %p344, %p345
      %p348 = scmp.ne.s32.totalorder %s333, %s347
      %p349 = scmp.eq.s32.totalorder %s29, 0
      %p350 = por %p348, %p349
      %s352 = sadd.s32 %s351, 1
      %p355 = scmp.eq.s32.totalorder %s23, 1
      %p356 = scmp.ne.s32.totalorder %s351, %s353
      %p357 = scmp.eq.s32.totalorder %s23, 0
      %p358 = por %p356, %p357
      %p359 = scmp.ne.s32.totalorder %s351, %s353
      %p360 = scmp.eq.s32.totalorder %s28, 1
      %p361 = por %p359, %p360
      %p362 = scmp.ne.s32.totalorder %s353, %s354
      %p363 = scmp.eq.s32.totalorder %s28, 0
      %p364 = por %p362, %p363
      %p365 = scmp.ne.s32.totalorder %s353, %s354
      %p366 = scmp.eq.s32.totalorder %s29, 1
      %p367 = por %p365, %p366
      %p369 = scmp.ne.s32.totalorder %s354, %s368
      %p370 = scmp.eq.s32.totalorder %s29, 0
      %p371 = por %p369, %p370
      %s373 = sadd.s32 %s372, 1
      %p376 = scmp.eq.s32.totalorder %s23, 1
      %p377 = scmp.ne.s32.totalorder %s372, %s374
      %p378 = scmp.eq.s32.totalorder %s23, 0
      %p379 = por %p377, %p378
      %p380 = scmp.ne.s32.totalorder %s372, %s374
      %p381 = scmp.eq.s32.totalorder %s28, 1
      %p382 = por %p380, %p381
      %p383 = scmp.ne.s32.totalorder %s374, %s375
      %p384 = scmp.eq.s32.totalorder %s28, 0
      %p385 = por %p383, %p384
      %p386 = scmp.ne.s32.totalorder %s374, %s375
      %p387 = scmp.eq.s32.totalorder %s29, 1
      %p388 = por %p386, %p387
      %p390 = scmp.ne.s32.totalorder %s375, %s389
      %p391 = scmp.eq.s32.totalorder %s29, 0
      %p392 = por %p390, %p391
      %s393 = ssub.s32 %s23, %s30
      %p394 = scmp.eq.s32.totalorder %s393, 0
      %s396 = sadd.s32 %s395, 1
      %s397 = scalar_select %p394, %s395, %s396
      %p400 = pneg %p394
      %p401 = scmp.eq.s32.totalorder %s23, 1
      %p402 = por %p400, %p401
      %p403 = scmp.ne.s32.totalorder %s395, %s398
      %p404 = scmp.eq.s32.totalorder %s23, 0
      %p405 = por %p403, %p404
      %p406 = scmp.ne.s32.totalorder %s395, %s398
      %p407 = scmp.eq.s32.totalorder %s28, 1
      %p408 = por %p406, %p407
      %p409 = scmp.ne.s32.totalorder %s398, %s399
      %p410 = scmp.eq.s32.totalorder %s28, 0
      %p411 = por %p409, %p410
      %p412 = scmp.ne.s32.totalorder %s398, %s399
      %p413 = scmp.eq.s32.totalorder %s29, 1
      %p414 = por %p412, %p413
      %p416 = scmp.ne.s32.totalorder %s399, %s415
      %p417 = scmp.eq.s32.totalorder %s29, 0
      %p418 = por %p416, %p417
      %p419 = scmp.le.s32.totalorder 1, %s23
      %p420 = scmp.lt.s32.totalorder %s23, 3
      %p421 = pnand %p419, %p420
      %p422 = pneg %p421
      // Predicated region
      $region9: #{cs_transformer_forward.1} parent=5 // pred_check
        _
      $region10: #{cs_transformer_forward.1} parent=5 // pred_check_branch
        %424 = sbr.rel (%p421) target = $region12
      $region11: #{cs_transformer_forward.1} parent=5 // pred_region
        %s425 = ssub.s32 %s23, 1
        // Predicated region
        $region13: #{cs_transformer_forward.1} parent=11 // pred_check
          %p426 = pneg %p70
        $region14: #{cs_transformer_forward.1} parent=11 // pred_check_branch
          %428 = sbr.rel (%p426) target = $region16
        $region15: #{cs_transformer_forward.1} parent=11 // pred_region
          _
        $region16: #{cs_transformer_forward.1} parent=11 // pred_fallthru
          _
        // Predicated region
        $region17: #{cs_transformer_forward.1} parent=11 // pred_check
          %p429 = pneg %p91
        $region18: #{cs_transformer_forward.1} parent=11 // pred_check_branch
          %431 = sbr.rel (%p429) target = $region20
        $region19: #{cs_transformer_forward.1} parent=11 // pred_region
          _
        $region20: #{cs_transformer_forward.1} parent=11 // pred_fallthru
          _
        // Predicated region
        $region21: #{cs_transformer_forward.1} parent=11 // pred_check
          %p432 = pneg %p112
        $region22: #{cs_transformer_forward.1} parent=11 // pred_check_branch
          %434 = sbr.rel (%p432) target = $region24
        $region23: #{cs_transformer_forward.1} parent=11 // pred_region
          _
        $region24: #{cs_transformer_forward.1} parent=11 // pred_fallthru
          _
        // Predicated region
        $region25: #{cs_transformer_forward.1} parent=11 // pred_check
          %p435 = pneg %p133
        $region26: #{cs_transformer_forward.1} parent=11 // pred_check_branch
          %437 = sbr.rel (%p435) target = $region28
        $region27: #{cs_transformer_forward.1} parent=11 // pred_region
          _
        $region28: #{cs_transformer_forward.1} parent=11 // pred_fallthru
          _
        // Predicated region
        $region29: #{cs_transformer_forward.1} parent=11 // pred_check
          %p438 = pneg %p154
        $region30: #{cs_transformer_forward.1} parent=11 // pred_check_branch
          %440 = sbr.rel (%p438) target = $region32
        $region31: #{cs_transformer_forward.1} parent=11 // pred_region
          _
        $region32: #{cs_transformer_forward.1} parent=11 // pred_fallthru
          _
        // Predicated region
        $region33: #{cs_transformer_forward.1} parent=11 // pred_check
          %p441 = pneg %p175
        $region34: #{cs_transformer_forward.1} parent=11 // pred_check_branch
          %443 = sbr.rel (%p441) target = $region36
        $region35: #{cs_transformer_forward.1} parent=11 // pred_region
          _
        $region36: #{cs_transformer_forward.1} parent=11 // pred_fallthru
          _
        // Predicated region
        $region37: #{cs_transformer_forward.1} parent=11 // pred_check
          %p444 = pneg %p196
        $region38: #{cs_transformer_forward.1} parent=11 // pred_check_branch
          %446 = sbr.rel (%p444) target = $region40
        $region39: #{cs_transformer_forward.1} parent=11 // pred_region
          _
        $region40: #{cs_transformer_forward.1} parent=11 // pred_fallthru
          _
        // Predicated region
        $region41: #{cs_transformer_forward.1} parent=11 // pred_check
          %p447 = pneg %p217
        $region42: #{cs_transformer_forward.1} parent=11 // pred_check_branch
          %449 = sbr.rel (%p447) target = $region44
        $region43: #{cs_transformer_forward.1} parent=11 // pred_region
          _
        $region44: #{cs_transformer_forward.1} parent=11 // pred_fallthru
          _
        // Predicated region
        $region45: #{cs_transformer_forward.1} parent=11 // pred_check
          %p450 = pneg %p238
        $region46: #{cs_transformer_forward.1} parent=11 // pred_check_branch
          %452 = sbr.rel (%p450) target = $region48
        $region47: #{cs_transformer_forward.1} parent=11 // pred_region
          _
        $region48: #{cs_transformer_forward.1} parent=11 // pred_fallthru
          _
        // Predicated region
        $region49: #{cs_transformer_forward.1} parent=11 // pred_check
          %p453 = pneg %p259
        $region50: #{cs_transformer_forward.1} parent=11 // pred_check_branch
          %455 = sbr.rel (%p453) target = $region52
        $region51: #{cs_transformer_forward.1} parent=11 // pred_region
          _
        $region52: #{cs_transformer_forward.1} parent=11 // pred_fallthru
          _
        // Predicated region
        $region53: #{cs_transformer_forward.1} parent=11 // pred_check
          %p456 = pneg %p280
        $region54: #{cs_transformer_forward.1} parent=11 // pred_check_branch
          %458 = sbr.rel (%p456) target = $region56
        $region55: #{cs_transformer_forward.1} parent=11 // pred_region
          _
        $region56: #{cs_transformer_forward.1} parent=11 // pred_fallthru
          _
        // Predicated region
        $region57: #{cs_transformer_forward.1} parent=11 // pred_check
          %p459 = pneg %p301
        $region58: #{cs_transformer_forward.1} parent=11 // pred_check_branch
          %461 = sbr.rel (%p459) target = $region60
        $region59: #{cs_transformer_forward.1} parent=11 // pred_region
          _
        $region60: #{cs_transformer_forward.1} parent=11 // pred_fallthru
          _
        // Predicated region
        $region61: #{cs_transformer_forward.1} parent=11 // pred_check
          %p462 = pneg %p322
        $region62: #{cs_transformer_forward.1} parent=11 // pred_check_branch
          %464 = sbr.rel (%p462) target = $region64
        $region63: #{cs_transformer_forward.1} parent=11 // pred_region
          _
        $region64: #{cs_transformer_forward.1} parent=11 // pred_fallthru
          _
        // Predicated region
        $region65: #{cs_transformer_forward.1} parent=11 // pred_check
          %p465 = pneg %p343
        $region66: #{cs_transformer_forward.1} parent=11 // pred_check_branch
          %467 = sbr.rel (%p465) target = $region68
        $region67: #{cs_transformer_forward.1} parent=11 // pred_region
          _
        $region68: #{cs_transformer_forward.1} parent=11 // pred_fallthru
          _
        // Predicated region
        $region69: #{cs_transformer_forward.1} parent=11 // pred_check
          %p468 = pneg %p364
        $region70: #{cs_transformer_forward.1} parent=11 // pred_check_branch
          %470 = sbr.rel (%p468) target = $region72
        $region71: #{cs_transformer_forward.1} parent=11 // pred_region
          _
        $region72: #{cs_transformer_forward.1} parent=11 // pred_fallthru
          _
        // Predicated region
        $region73: #{cs_transformer_forward.1} parent=11 // pred_check
          %p471 = pneg %p385
        $region74: #{cs_transformer_forward.1} parent=11 // pred_check_branch
          %473 = sbr.rel (%p471) target = $region76
        $region75: #{cs_transformer_forward.1} parent=11 // pred_region
          _
        $region76: #{cs_transformer_forward.1} parent=11 // pred_fallthru
          _
      $region12: #{cs_transformer_forward.1} parent=5 // pred_fallthru
        _
      %p474 = scmp.lt.s32.totalorder %s23, 2
      // Predicated region
      $region77: #{cs_transformer_forward.1} parent=5 // pred_check
        %p475 = pneg %p474
      $region78: #{cs_transformer_forward.1} parent=5 // pred_check_branch
        %477 = sbr.rel (%p475) target = $region80
      $region79: #{cs_transformer_forward.1} parent=5 // pred_region
        // Predicated region
        $region81: #{cs_transformer_forward.1} parent=79 // pred_check
          %p478 = pneg %p43
        $region82: #{cs_transformer_forward.1} parent=79 // pred_check_branch
          %480 = sbr.rel (%p478) target = $region84
        $region83: #{cs_transformer_forward.1} parent=79 // pred_region
          %s481 = sand.u32 %s33, 1
          %s482 = sand.u32 %s33, 1
          %s483 = smul.addr %s482, 32
          %s484 = scalar_lea.vmem [#allocation2], %s483
          %s485 = smul.u32 2, %s23
          %s486 = smul.addr %s485, 8
          %s487 = scalar_lea.vmem %s0, %s486
          // Predicated region
          $region85: #{cs_transformer_forward.1} parent=83 // pred_check
            _
          $region86: #{cs_transformer_forward.1} parent=83 // pred_check_branch
            %489 = sbr.rel (0) target = $region88
          $region87: #{cs_transformer_forward.1} parent=83 // pred_region
            // Predicated region
            $region89: #{cs_transformer_forward.1} parent=87 // pred_check
              _
            $region90: #{cs_transformer_forward.1} parent=87 // pred_check_branch
              %491 = sbr.rel (0) target = $region92
            $region91: #{cs_transformer_forward.1} parent=87 // pred_region
              // Predicated region
              $region104: #{cs_transformer_forward.1} parent=91 // pred_check
                _
              $region105: #{cs_transformer_forward.1} parent=91 // pred_check_branch
                %513 = sbr.rel (0) target = $region107
              $region106: #{cs_transformer_forward.1} parent=91 // pred_region
                loop: start=0, step=1, limit=1
                $region108: #{cs_transformer_forward.1} parent=106 // loop_pre_header
                  _
                $region109: #{cs_transformer_forward.1} parent=106 // loop_header
                  %s515 = sphi 0, %s519
                  %p516 = scmp.ge.s32.totalorder %s515, 1
                  %s520 = sphi %s487, %s487
                  %s521 = sphi %s484, %s484
                $region110: #{cs_transformer_forward.1} parent=106 // loop_header_branch
                  %518 = sbr.rel (%p516) target = $region114
                $region111: #{cs_transformer_forward.1} parent=106 // loop_body
                  %v522 = vld [vmem:[%s520] sm:$0xff]
                  %523 = vst [vmem:[%s521] sm:$0xff] %v522
                  %v524 = vld [vmem:[%s520 + $0x8] sm:$0xff]
                  %525 = vst [vmem:[%s521 + $0x8] sm:$0xff] %v524
                  %v526 = vld [vmem:[%s520 + $0x20] sm:$0xff]
                  %527 = vst [vmem:[%s521 + $0x10] sm:$0xff] %v526
                  %v528 = vld [vmem:[%s520 + $0x28] sm:$0xff]
                  %529 = vst [vmem:[%s521 + $0x18] sm:$0xff] %v528
                $region112: #{cs_transformer_forward.1} parent=106 // loop_footer
                  %s519 = sadd.s32 1, %s515
                $region113: #{cs_transformer_forward.1} parent=106 // loop_footer_branch
                  %514 = sbr.rel target = $region109
                $region114: #{cs_transformer_forward.1} parent=106 // loop_exit
                  _
              $region107: #{cs_transformer_forward.1} parent=91 // pred_fallthru
                _
              // Predicated region
              $region115: #{cs_transformer_forward.1} parent=91 // pred_check
                _
              $region116: #{cs_transformer_forward.1} parent=91 // pred_check_branch
                %531 = sbr.rel target = $region118
              $region117: #{cs_transformer_forward.1} parent=91 // pred_region
                _
              $region118: #{cs_transformer_forward.1} parent=91 // pred_fallthru
                _
            $region92: #{cs_transformer_forward.1} parent=87 // pred_fallthru
              _
            // Predicated region
            $region93: #{cs_transformer_forward.1} parent=87 // pred_check
              _
            $region94: #{cs_transformer_forward.1} parent=87 // pred_check_branch
              %493 = sbr.rel target = $region96
            $region95: #{cs_transformer_forward.1} parent=87 // pred_region
              %s495 = ssub.s32 256, 1
              loop: start=0, step=1, limit=1
              $region97: #{cs_transformer_forward.1} parent=95 // loop_pre_header
                _
              $region98: #{cs_transformer_forward.1} parent=95 // loop_header
                %s497 = sphi 0, %s501
                %p498 = scmp.ge.s32.totalorder %s497, 1
                %s502 = sphi %s487, %s487
                %s503 = sphi %s484, %s484
              $region99: #{cs_transformer_forward.1} parent=95 // loop_header_branch
                %500 = sbr.rel (%p498) target = $region103
              $region100: #{cs_transformer_forward.1} parent=95 // loop_body
                %v504 = vld [vmem:[%s502] sm:%s495]
                %505 = vst [vmem:[%s503] sm:%s495] %v504
                %v506 = vld [vmem:[%s502 + $0x8] sm:%s495]
                %507 = vst [vmem:[%s503 + $0x8] sm:%s495] %v506
                %v508 = vld [vmem:[%s502 + $0x20] sm:%s495]
                %509 = vst [vmem:[%s503 + $0x10] sm:%s495] %v508
                %v510 = vld [vmem:[%s502 + $0x28] sm:%s495]
                %511 = vst [vmem:[%s503 + $0x18] sm:%s495] %v510
              $region101: #{cs_transformer_forward.1} parent=95 // loop_footer
                %s501 = sadd.s32 1, %s497
              $region102: #{cs_transformer_forward.1} parent=95 // loop_footer_branch
                %496 = sbr.rel target = $region98
              $region103: #{cs_transformer_forward.1} parent=95 // loop_exit
                _
            $region96: #{cs_transformer_forward.1} parent=87 // pred_fallthru
              _
          $region88: #{cs_transformer_forward.1} parent=83 // pred_fallthru
            _
          %532 = vnop
        $region84: #{cs_transformer_forward.1} parent=79 // pred_fallthru
          _
      $region80: #{cs_transformer_forward.1} parent=5 // pred_fallthru
        _
      %p533 = scmp.le.s32.totalorder 1, %s23
      %p534 = scmp.lt.s32.totalorder %s23, 3
      %p535 = pnand %p533, %p534
      %p536 = pneg %p535
      // Predicated region
      $region119: #{cs_transformer_forward.1} parent=5 // pred_check
        _
      $region120: #{cs_transformer_forward.1} parent=5 // pred_check_branch
        %538 = sbr.rel (%p535) target = $region122
      $region121: #{cs_transformer_forward.1} parent=5 // pred_region
        %s539 = ssub.s32 %s23, 1
        %s540 = sand.u32 %s36, 1
        %s541 = sand.u32 %s36, 1
        %s542 = smul.addr %s541, 32
        %s543 = scalar_lea.vmem [#allocation2], %s542
        // Predicated region
        $region123: #{cs_transformer_forward.1} parent=121 // pred_check
          %p544 = pneg %p49
        $region124: #{cs_transformer_forward.1} parent=121 // pred_check_branch
          %546 = sbr.rel (%p544) target = $region126
        $region125: #{cs_transformer_forward.1} parent=121 // pred_region
          _
        $region126: #{cs_transformer_forward.1} parent=121 // pred_fallthru
          _
        %s547 = sand.u32 %s36, 1
        %s548 = sand.u32 %s36, 1
        %s549 = smul.addr %s548, 32
        %s550 = scalar_lea.vmem [#allocation2], %s549
        %p551 = pneg %p49
        %p552 = pneg %p46
        %p553 = pneg %p70
        %p554 = pneg %p67
        %p555 = pneg %p91
        %p556 = pneg %p88
        %p557 = pneg %p112
        %p558 = pneg %p109
        %p559 = pneg %p133
        %p560 = pneg %p130
        %p561 = pneg %p154
        %p562 = pneg %p151
        %p563 = pneg %p175
        %p564 = pneg %p172
        %p565 = pneg %p196
        %p566 = pneg %p193
        %p567 = pneg %p217
        %p568 = pneg %p214
        %p569 = pneg %p238
        %p570 = pneg %p235
        %p571 = pneg %p259
        %p572 = pneg %p256
        %p573 = pneg %p280
        %p574 = pneg %p277
        %p575 = pneg %p301
        %p576 = pneg %p298
        %p577 = pneg %p322
        %p578 = pneg %p319
        %p579 = pneg %p343
        %p580 = pneg %p340
        %p581 = pneg %p364
        %p582 = pneg %p361
        %p583 = pneg %p385
        %p584 = pneg %p382
        %p585 = pneg %p411
        %p586 = pneg %p408
        %s587 = sand.u32 %s398, 1
        %s588 = sand.u32 %s398, 1
        %s589 = smul.addr %s588, 32
        %s590 = scalar_lea.vmem [#allocation3], %s589
        %s591 = smul.u32 2, %s28
        %s592 = smul.u32 2, %s28
        %v593 = vld [vmem:[%s1] sm:$0x1]
        %v594 = vld [vmem:[%s2] sm:$0x1]
        %v595 = vld [vmem:[%s7] sm:$0xff]
        %v596 = vld [vmem:[%s7 + $0x8] sm:$0xff]
        %v597 = vld [vmem:[%s7 + $0x10] sm:$0xff]
        %v598 = vld [vmem:[%s7 + $0x18] sm:$0xff]
        %v599 = vld [vmem:[%s7 + $0x20] sm:$0xff]
        %v600 = vld [vmem:[%s7 + $0x28] sm:$0xff]
        %v601 = vld [vmem:[%s7 + $0x30] sm:$0xff]
        %v602 = vld [vmem:[%s7 + $0x38] sm:$0xff]
        %v603 = vld [vmem:[%s7 + $0x40] sm:$0xff]
        %v604 = vld [vmem:[%s7 + $0x48] sm:$0xff]
        %v605 = vld [vmem:[%s7 + $0x50] sm:$0xff]
        %v606 = vld [vmem:[%s7 + $0x58] sm:$0xff]
        %v607 = vld [vmem:[%s7 + $0x60] sm:$0xff]
        %v608 = vld [vmem:[%s7 + $0x68] sm:$0xff]
        %v609 = vld [vmem:[%s7 + $0x70] sm:$0xff]
        %v610 = vld [vmem:[%s7 + $0x78] sm:$0xff]
        %v611 = vld [vmem:[%s8] sm:$0xf]
        %v612 = vld [vmem:[%s9] sm:$0x1]
        %v613 = vld [vmem:[%s543] sm:$0xff]
        %v614 = vld [vmem:[%s543 + $0x8] sm:$0xff]
        %615 = vadd.xlane.f32.xlu0 %v613
        %v616 = vpop.xlane.xlu0 %615
        %617 = vadd.xlane.f32.xlu0 %v614
        %v618 = vpop.xlane.xlu0 %617
        %v619 = vrcp.pop 128.0
        %v620 = vmul.f32 %v616, %v619
        %v621 = vmul.f32 %v618, %v619
        %v622 = vsub.f32 %v613, %v620
        %v623 = vsub.f32 %v614, %v621
        %v624 = vmul.f32 %v622, %v622
        %v625 = vmul.f32 %v623, %v623
        %626 = vadd.xlane.f32.xlu0 %v624
        %v627 = vpop.xlane.xlu0 %626
        %628 = vadd.xlane.f32.xlu0 %v625
        %v629 = vpop.xlane.xlu0 %628
        %v630 = vmul.f32 %v627, %v619
        %v631 = vmul.f32 %v629, %v619
        %v632 = vadd.f32 %v630, 1e-05
        %v633 = vadd.f32 %v631, 1e-05
        %v634 = vrsqrt.pop %v632
        %v635 = vrsqrt.pop %v633
        %v636 = vmul.f32 %v622, %v634
        %v637 = vmul.f32 %v623, %v635
        %v639 = vlaneseq
        %v640 = vshrl.u32 %v639, 7
        %v641 = vsub.s32 0, %v640
        %v642 = vrot.slane %v593, %v641
        %v644 = vmul.f32 %v636, %v642
        %v645 = vmul.f32 %v637, %v642
        %v647 = vlaneseq
        %v648 = vshrl.u32 %v647, 7
        %v649 = vsub.s32 0, %v648
        %v650 = vrot.slane %v594, %v649
        %v652 = vadd.f32 %v644, %v650
        %v653 = vadd.f32 %v645, %v650
        %s654 = scalar_lea.vmem %s543, 16 [#allocation2]
        %v655 = vld [vmem:[%s654] sm:$0xff]
        %v656 = vld [vmem:[%s654 + $0x8] sm:$0xff]
        %657 = vadd.xlane.f32.xlu0 %v655
        %v658 = vpop.xlane.xlu0 %657
        %659 = vadd.xlane.f32.xlu0 %v656
        %v660 = vpop.xlane.xlu0 %659
        %v661 = vmul.f32 %v658, %v619
        %v662 = vmul.f32 %v660, %v619
        %v663 = vsub.f32 %v655, %v661
        %v664 = vsub.f32 %v656, %v662
        %v665 = vmul.f32 %v663, %v663
        %v666 = vmul.f32 %v664, %v664
        %667 = vadd.xlane.f32.xlu0 %v665
        %v668 = vpop.xlane.xlu0 %667
        %669 = vadd.xlane.f32.xlu0 %v666
        %v670 = vpop.xlane.xlu0 %669
        %v671 = vmul.f32 %v668, %v619
        %v672 = vmul.f32 %v670, %v619
        %v673 = vadd.f32 %v671, 1e-05
        %v674 = vadd.f32 %v672, 1e-05
        %v675 = vrsqrt.pop %v673
        %v676 = vrsqrt.pop %v674
        %v677 = vmul.f32 %v663, %v675
        %v678 = vmul.f32 %v664, %v676
        %v679 = vmul.f32 %v677, %v642
        %v680 = vmul.f32 %v678, %v642
        %v681 = vadd.f32 %v679, %v650
        %v682 = vadd.f32 %v680, %v650
        %v683 = vld [vmem:[%s3] sm:$0xff]
        %v684 = vld [vmem:[%s3 + $0x8] sm:$0xff]
        %v685 = vld [vmem:[%s3 + $0x10] sm:$0xff]
        %v686 = vld [vmem:[%s3 + $0x18] sm:$0xff]
        %v687 = vld [vmem:[%s3 + $0x20] sm:$0xff]
        %v688 = vld [vmem:[%s3 + $0x28] sm:$0xff]
        %v689 = vld [vmem:[%s3 + $0x30] sm:$0xff]
        %v690 = vld [vmem:[%s3 + $0x38] sm:$0xff]
        %v691 = vld [vmem:[%s3 + $0x40] sm:$0xff]
        %v692 = vld [vmem:[%s3 + $0x48] sm:$0xff]
        %v693 = vld [vmem:[%s3 + $0x50] sm:$0xff]
        %v694 = vld [vmem:[%s3 + $0x58] sm:$0xff]
        %v695 = vld [vmem:[%s3 + $0x60] sm:$0xff]
        %v696 = vld [vmem:[%s3 + $0x68] sm:$0xff]
        %v697 = vld [vmem:[%s3 + $0x70] sm:$0xff]
        %v698 = vld [vmem:[%s3 + $0x78] sm:$0xff]
        %v699 = vld [vmem:[%s3 + $0x80] sm:$0xff]
        %v700 = vld [vmem:[%s3 + $0x88] sm:$0xff]
        %v701 = vld [vmem:[%s3 + $0x90] sm:$0xff]
        %v702 = vld [vmem:[%s3 + $0x98] sm:$0xff]
        %v703 = vld [vmem:[%s3 + $0xa0] sm:$0xff]
        %v704 = vld [vmem:[%s3 + $0xa8] sm:$0xff]
        %v705 = vld [vmem:[%s3 + $0xb0] sm:$0xff]
        %v706 = vld [vmem:[%s3 + $0xb8] sm:$0xff]
        %v707 = vld [vmem:[%s3 + $0xc0] sm:$0xff]
        %v708 = vld [vmem:[%s3 + $0xc8] sm:$0xff]
        %v709 = vld [vmem:[%s3 + $0xd0] sm:$0xff]
        %v710 = vld [vmem:[%s3 + $0xd8] sm:$0xff]
        %v711 = vld [vmem:[%s3 + $0xe0] sm:$0xff]
        %v712 = vld [vmem:[%s3 + $0xe8] sm:$0xff]
        %v713 = vld [vmem:[%s3 + $0xf0] sm:$0xff]
        %v714 = vld [vmem:[%s3 + $0xf8] sm:$0xff]
        %v715 = vld [vmem:[%s3 + $0x100] sm:$0xff]
        %v716 = vld [vmem:[%s3 + $0x108] sm:$0xff]
        %v717 = vld [vmem:[%s3 + $0x110] sm:$0xff]
        %v718 = vld [vmem:[%s3 + $0x118] sm:$0xff]
        %v719 = vld [vmem:[%s3 + $0x120] sm:$0xff]
        %v720 = vld [vmem:[%s3 + $0x128] sm:$0xff]
        %v721 = vld [vmem:[%s3 + $0x130] sm:$0xff]
        %v722 = vld [vmem:[%s3 + $0x138] sm:$0xff]
        %v723 = vld [vmem:[%s3 + $0x140] sm:$0xff]
        %v724 = vld [vmem:[%s3 + $0x148] sm:$0xff]
        %v725 = vld [vmem:[%s3 + $0x150] sm:$0xff]
        %v726 = vld [vmem:[%s3 + $0x158] sm:$0xff]
        %v727 = vld [vmem:[%s3 + $0x160] sm:$0xff]
        %v728 = vld [vmem:[%s3 + $0x168] sm:$0xff]
        %v729 = vld [vmem:[%s3 + $0x170] sm:$0xff]
        %v730 = vld [vmem:[%s3 + $0x178] sm:$0xff]
        %v731 = vld [vmem:[%s4] sm:$0x7]
        %v733 = vlaneseq
        %v734 = vshrl.u32 %v733, 7
        %v735 = vsub.s32 0, %v734
        %v736 = vrot.slane %v731, %v735
        %v737 = vlaneseq
        %v738 = vshrl.u32 %v737, 7
        %v739 = vsub.s32 1, %v738
        %v740 = vrot.slane %v731, %v739
        %v741 = vlaneseq
        %v742 = vshrl.u32 %v741, 7
        %v743 = vsub.s32 2, %v742
        %v744 = vrot.slane %v731, %v743
        %748 = vmatprep.subr.mxu0 %v729
        %749 = vmatpush1.msra.mxu0 %v728
        %750 = vmatprep.subr.mxu0 %v726
        %751 = vmatpush1.msra.mxu0 %v725
        %752 = vmatprep.subr.mxu0 %v723
        %753 = vmatpush1.msra.mxu0 %v722
        %754 = vmatprep.subr.mxu0 %v720
        %755 = vmatpush1.msra.mxu0 %v719
        %756 = vmatprep.subr.mxu0 %v717
        %757 = vmatpush1.msra.mxu0 %v716
        %758 = vmatprep.subr.mxu0 %v714
        %759 = vmatpush1.msra.mxu0 %v713
        %760 = vmatprep.subr.mxu0 %v711
        %761 = vmatpush1.msra.mxu0 %v710
        %762 = vmatprep.subr.mxu0 %v708
        %763 = vmatpush1.msra.mxu0 %v707
        %764 = vmatprep.subr.mxu0 %v705
        %765 = vmatpush1.msra.mxu0 %v704
        %766 = vmatprep.subr.mxu0 %v702
        %767 = vmatpush1.msra.mxu0 %v701
        %768 = vmatprep.subr.mxu0 %v699
        %769 = vmatpush1.msra.mxu0 %v698
        %770 = vmatprep.subr.mxu0 %v696
        %771 = vmatpush1.msra.mxu0 %v695
        %772 = vmatprep.subr.mxu0 %v693
        %773 = vmatpush1.msra.mxu0 %v692
        %774 = vmatprep.subr.mxu0 %v690
        %775 = vmatpush1.msra.mxu0 %v689
        %776 = vmatprep.subr.mxu0 %v687
        %777 = vmatpush1.msra.mxu0 %v686
        %778 = vmatprep.subr.mxu0 %v684
        %779 = vmatpush1.msra.mxu0 %v683
        %780 = vmatprep.subr.mxu0 0.0
        %781 = vmatpush2.msra.mxu0 0.0
        %782 = vmatprep.subr.mxu0 0.0
        %783 = vmatpush2.msra.mxu0 0.0
        %784 = vmatprep.subr.mxu0 0.0
        %785 = vmatpush2.msra.mxu0 0.0
        %786 = vmatprep.subr.mxu0 0.0
        %787 = vmatpush2.msra.mxu0 0.0
        %788 = vmatprep.subr.mxu0 0.0
        %789 = vmatpush2.msra.mxu0 0.0
        %790 = vmatprep.subr.mxu0 0.0
        %791 = vmatpush2.msra.mxu0 0.0
        %792 = vmatprep.subr.mxu0 0.0
        %793 = vmatpush2.msra.mxu0 0.0
        %794 = vmatprep.subr.mxu0 0.0
        %795 = vmatpush2.msra.mxu0 0.0
        %796 = vmatprep.subr.mxu0 0.0
        %797 = vmatpush2.msra.mxu0 0.0
        %798 = vmatprep.subr.mxu0 0.0
        %799 = vmatpush2.msra.mxu0 0.0
        %800 = vmatprep.subr.mxu0 0.0
        %801 = vmatpush2.msra.mxu0 0.0
        %802 = vmatprep.subr.mxu0 0.0
        %803 = vmatpush2.msra.mxu0 0.0
        %804 = vmatprep.subr.mxu0 0.0
        %805 = vmatpush2.msra.mxu0 0.0
        %806 = vmatprep.subr.mxu0 0.0
        %807 = vmatpush2.msra.mxu0 0.0
        %808 = vmatprep.subr.mxu0 0.0
        %809 = vmatpush2.msra.mxu0 0.0
        %810 = vmatprep.subr.mxu0 0.0
        %811 = vmatpush2.msra.mxu0 0.0
        %812 = vmatprep.mubr.f32.mxu0 0.0
        %813 = vmatmul.mubr.f32.gmra.mxu0 %v652
        %v814 = vpop.f32.mrf.mxu0
        %v815 = vadd.f32 %v736, %v814
        %v816 = vpop.f32.mrf.mxu0
        %v817 = vadd.f32 %v740, %v816
        %818 = vmatprep.mubr.f32.mxu0 0.0
        %819 = vmatmul.mubr.f32.gmra.mxu0 %v653
        %v820 = vpop.f32.mrf.mxu0
        %v821 = vadd.f32 %v736, %v820
        %v822 = vpop.f32.mrf.mxu0
        %v823 = vadd.f32 %v740, %v822
        %824 = vmatprep.mubr.f32.mxu0 0.0
        %825 = vmatmul.mubr.f32.gmra.mxu0 %v681
        %v826 = vpop.f32.mrf.mxu0
        %v827 = vadd.f32 %v736, %v826
        %v828 = vpop.f32.mrf.mxu0
        %v829 = vadd.f32 %v740, %v828
        %830 = vmatprep.mubr.f32.mxu0 0.0
        %831 = vmatmul.mubr.f32.gmra.mxu0 %v682
        %v832 = vpop.f32.mrf.mxu0
        %v833 = vadd.f32 %v736, %v832
        %v834 = vpop.f32.mrf.mxu0
        %v835 = vadd.f32 %v740, %v834
        %836 = vdwg.mxu0
        %837 = vmatprep.subr.mxu0 0.0
        %838 = vmatpush1.msra.mxu0 %v730
        %839 = vmatprep.subr.mxu0 0.0
        %840 = vmatpush1.msra.mxu0 %v727
        %841 = vmatprep.subr.mxu0 0.0
        %842 = vmatpush1.msra.mxu0 %v724
        %843 = vmatprep.subr.mxu0 0.0
        %844 = vmatpush1.msra.mxu0 %v721
        %845 = vmatprep.subr.mxu0 0.0
        %846 = vmatpush1.msra.mxu0 %v718
        %847 = vmatprep.subr.mxu0 0.0
        %848 = vmatpush1.msra.mxu0 %v715
        %849 = vmatprep.subr.mxu0 0.0
        %850 = vmatpush1.msra.mxu0 %v712
        %851 = vmatprep.subr.mxu0 0.0
        %852 = vmatpush1.msra.mxu0 %v709
        %853 = vmatprep.subr.mxu0 0.0
        %854 = vmatpush1.msra.mxu0 %v706
        %855 = vmatprep.subr.mxu0 0.0
        %856 = vmatpush1.msra.mxu0 %v703
        %857 = vmatprep.subr.mxu0 0.0
        %858 = vmatpush1.msra.mxu0 %v700
        %859 = vmatprep.subr.mxu0 0.0
        %860 = vmatpush1.msra.mxu0 %v697
        %861 = vmatprep.subr.mxu0 0.0
        %862 = vmatpush1.msra.mxu0 %v694
        %863 = vmatprep.subr.mxu0 0.0
        %864 = vmatpush1.msra.mxu0 %v691
        %865 = vmatprep.subr.mxu0 0.0
        %866 = vmatpush1.msra.mxu0 %v688
        %867 = vmatprep.subr.mxu0 0.0
        %868 = vmatpush1.msra.mxu0 %v685
        %869 = vmatprep.subr.mxu0 0.0
        %870 = vmatpush2.msra.mxu0 0.0
        %871 = vmatprep.subr.mxu0 0.0
        %872 = vmatpush2.msra.mxu0 0.0
        %873 = vmatprep.subr.mxu0 0.0
        %874 = vmatpush2.msra.mxu0 0.0
        %875 = vmatprep.subr.mxu0 0.0
        %876 = vmatpush2.msra.mxu0 0.0
        %877 = vmatprep.subr.mxu0 0.0
        %878 = vmatpush2.msra.mxu0 0.0
        %879 = vmatprep.subr.mxu0 0.0
        %880 = vmatpush2.msra.mxu0 0.0
        %881 = vmatprep.subr.mxu0 0.0
        %882 = vmatpush2.msra.mxu0 0.0
        %883 = vmatprep.subr.mxu0 0.0
        %884 = vmatpush2.msra.mxu0 0.0
        %885 = vmatprep.subr.mxu0 0.0
        %886 = vmatpush2.msra.mxu0 0.0
        %887 = vmatprep.subr.mxu0 0.0
        %888 = vmatpush2.msra.mxu0 0.0
        %889 = vmatprep.subr.mxu0 0.0
        %890 = vmatpush2.msra.mxu0 0.0
        %891 = vmatprep.subr.mxu0 0.0
        %892 = vmatpush2.msra.mxu0 0.0
        %893 = vmatprep.subr.mxu0 0.0
        %894 = vmatpush2.msra.mxu0 0.0
        %895 = vmatprep.subr.mxu0 0.0
        %896 = vmatpush2.msra.mxu0 0.0
        %897 = vmatprep.subr.mxu0 0.0
        %898 = vmatpush2.msra.mxu0 0.0
        %899 = vmatprep.subr.mxu0 0.0
        %900 = vmatpush2.msra.mxu0 0.0
        %901 = vmatprep.mubr.f32.mxu0 0.0
        %902 = vmatmul.mubr.f32.gmra.mxu0 %v652
        %v903 = vpop.f32.mrf.mxu0
        %v904 = vadd.f32 %v744, %v903
        %v905 = vpop.f32.mrf.mxu0
        %906 = vmatprep.mubr.f32.mxu0 0.0
        %907 = vmatmul.mubr.f32.gmra.mxu0 %v653
        %v908 = vpop.f32.mrf.mxu0
        %v909 = vadd.f32 %v744, %v908
        %v910 = vpop.f32.mrf.mxu0
        %911 = vmatprep.mubr.f32.mxu0 0.0
        %912 = vmatmul.mubr.f32.gmra.mxu0 %v681
        %v913 = vpop.f32.mrf.mxu0
        %v914 = vadd.f32 %v744, %v913
        %v915 = vpop.f32.mrf.mxu0
        %916 = vmatprep.mubr.f32.mxu0 0.0
        %917 = vmatmul.mubr.f32.gmra.mxu0 %v682
        %v918 = vpop.f32.mrf.mxu0
        %v919 = vadd.f32 %v744, %v918
        %v920 = vpop.f32.mrf.mxu0
        %921 = vdwg.mxu0
        %v922 = vlaneseq
        %v923 = vshrl.u32 %v922, 7
        %v924 = vadd.s32 %v923, 8
        %vm925 = vcmp.lt.s32.totalorder %v923, 0
        %v926 = vsub.s32 0, %v923
        %v927 = vsel %vm925, %v926, %v923
        %v928 = vshrl.u32 %v927, 4
        %v929 = vand.u32 %v927, 15
        %v930 = vsub.s32 0, %v929
        %v931 = vsel %vm925, %v930, %v929
        %vm932 = vcmp.lt.s32.totalorder %v924, 0
        %v933 = vsub.s32 0, %v924
        %v934 = vsel %vm932, %v933, %v924
        %v935 = vshrl.u32 %v934, 4
        %v936 = vand.u32 %v934, 15
        %v937 = vsub.s32 0, %v936
        %v938 = vsel %vm932, %v937, %v936
        %vm939 = vcmp.ne.s32.totalorder %v931, 0
        %vm940 = vcmp.ne.s32.totalorder %v938, 0
        %vm941 = vcmp.lt.s32.totalorder %v931, 0
        %vm942 = vcmp.lt.s32.totalorder %v938, 0
        %vm943 = vmand %vm941, %vm939
        %vm944 = vmand %vm942, %vm940
        %v945 = vadd.s32 %v931, 16
        %v946 = vadd.s32 %v938, 16
        %v947 = vsel %vm943, %v945, %v931
        %v948 = vsel %vm944, %v946, %v938
        %vm949 = vcmp.ne.s32.totalorder %v947, 0
        %vm950 = vcmp.ne.s32.totalorder %v948, 0
        %v951 = vsel %vm949, 1, 0
        %v952 = vsel %vm950, 1, 0
        %v953 = vcvt.s32.f32 %v951
        %v954 = vcvt.s32.f32 %v952
        %vm955 = vcmp.ne.s32.totalorder %v947, 15
        %vm956 = vcmp.ne.s32.totalorder %v948, 15
        %v957 = vsel %vm955, 1, 0
        %v958 = vsel %vm956, 1, 0
        %v959 = vcvt.s32.f32 %v957
        %v960 = vcvt.s32.f32 %v958
        %v961 = vld [vmem:[%s12] sm:$0x77]
        %v962 = vld [vmem:[%s12 + $0x8] sm:$0x77]
        %v963 = vld [vmem:[%s12 + $0x10] sm:$0x77]
        %v964 = vld [vmem:[%s16] sm:$0x1]
        %v965 = vmul.f32 %v815, %v817
        %v966 = vmul.f32 %v821, %v823
        %967 = vmatprep.subr.mxu0 0.0
        %968 = vmatpush1.msra.mxu0 %v610
        %969 = vmatprep.subr.mxu0 0.0
        %970 = vmatpush1.msra.mxu0 %v609
        %971 = vmatprep.subr.mxu0 0.0
        %972 = vmatpush1.msra.mxu0 %v608
        %973 = vmatprep.subr.mxu0 0.0
        %974 = vmatpush1.msra.mxu0 %v607
        %975 = vmatprep.subr.mxu0 0.0
        %976 = vmatpush1.msra.mxu0 %v606
        %977 = vmatprep.subr.mxu0 0.0
        %978 = vmatpush1.msra.mxu0 %v605
        %979 = vmatprep.subr.mxu0 0.0
        %980 = vmatpush1.msra.mxu0 %v604
        %981 = vmatprep.subr.mxu0 0.0
        %982 = vmatpush1.msra.mxu0 %v603
        %983 = vmatprep.subr.mxu0 0.0
        %984 = vmatpush1.msra.mxu0 %v602
        %985 = vmatprep.subr.mxu0 0.0
        %986 = vmatpush1.msra.mxu0 %v601
        %987 = vmatprep.subr.mxu0 0.0
        %988 = vmatpush1.msra.mxu0 %v600
        %989 = vmatprep.subr.mxu0 0.0
        %990 = vmatpush1.msra.mxu0 %v599
        %991 = vmatprep.subr.mxu0 0.0
        %992 = vmatpush1.msra.mxu0 %v598
        %993 = vmatprep.subr.mxu0 0.0
        %994 = vmatpush1.msra.mxu0 %v597
        %995 = vmatprep.subr.mxu0 0.0
        %996 = vmatpush1.msra.mxu0 %v596
        %997 = vmatprep.subr.mxu0 0.0
        %998 = vmatpush1.msra.mxu0 %v595
        %999 = vmatprep.subr.mxu0 0.0
        %1000 = vmatpush2.msra.mxu0 0.0
        %1001 = vmatprep.subr.mxu0 0.0
        %1002 = vmatpush2.msra.mxu0 0.0
        %1003 = vmatprep.subr.mxu0 0.0
        %1004 = vmatpush2.msra.mxu0 0.0
        %1005 = vmatprep.subr.mxu0 0.0
        %1006 = vmatpush2.msra.mxu0 0.0
        %1007 = vmatprep.subr.mxu0 0.0
        %1008 = vmatpush2.msra.mxu0 0.0
        %1009 = vmatprep.subr.mxu0 0.0
        %1010 = vmatpush2.msra.mxu0 0.0
        %1011 = vmatprep.subr.mxu0 0.0
        %1012 = vmatpush2.msra.mxu0 0.0
        %1013 = vmatprep.subr.mxu0 0.0
        %1014 = vmatpush2.msra.mxu0 0.0
        %1015 = vmatprep.subr.mxu0 0.0
        %1016 = vmatpush2.msra.mxu0 0.0
        %1017 = vmatprep.subr.mxu0 0.0
        %1018 = vmatpush2.msra.mxu0 0.0
        %1019 = vmatprep.subr.mxu0 0.0
        %1020 = vmatpush2.msra.mxu0 0.0
        %1021 = vmatprep.subr.mxu0 0.0
        %1022 = vmatpush2.msra.mxu0 0.0
        %1023 = vmatprep.subr.mxu0 0.0
        %1024 = vmatpush2.msra.mxu0 0.0
        %1025 = vmatprep.subr.mxu0 0.0
        %1026 = vmatpush2.msra.mxu0 0.0
        %1027 = vmatprep.subr.mxu0 0.0
        %1028 = vmatpush2.msra.mxu0 0.0
        %1029 = vmatprep.subr.mxu0 0.0
        %1030 = vmatpush2.msra.mxu0 0.0
        %1031 = vmatprep.mubr.f32.mxu0 0.0
        %1032 = vmatmul.mubr.f32.gmra.mxu0 %v965
        %v1033 = vpop.f32.mrf.mxu0
        %v1034 = vadd.f32 0.0, %v1033
        %v1035 = vpop.f32.mrf.mxu0
        %1036 = vmatprep.mubr.f32.mxu0 0.0
        %1037 = vmatmul.mubr.f32.gmra.mxu0 %v966
        %v1038 = vpop.f32.mrf.mxu0
        %v1039 = vadd.f32 0.0, %v1038
        %v1040 = vpop.f32.mrf.mxu0
        %1041 = vdwg.mxu0
        %v1042 = vmul.f32 %v1034, 0.17677669
        %v1043 = vmul.f32 %v1039, 0.17677669
        %v1044 = vmul.f32 %v815, %v829
        %v1045 = vmul.f32 %v821, %v835
        %1046 = vmatprep.subr.mxu0 0.0
        %1047 = vmatpush1.msra.mxu0 %v610
        %1048 = vmatprep.subr.mxu0 0.0
        %1049 = vmatpush1.msra.mxu0 %v609
        %1050 = vmatprep.subr.mxu0 0.0
        %1051 = vmatpush1.msra.mxu0 %v608
        %1052 = vmatprep.subr.mxu0 0.0
        %1053 = vmatpush1.msra.mxu0 %v607
        %1054 = vmatprep.subr.mxu0 0.0
        %1055 = vmatpush1.msra.mxu0 %v606
        %1056 = vmatprep.subr.mxu0 0.0
        %1057 = vmatpush1.msra.mxu0 %v605
        %1058 = vmatprep.subr.mxu0 0.0
        %1059 = vmatpush1.msra.mxu0 %v604
        %1060 = vmatprep.subr.mxu0 0.0
        %1061 = vmatpush1.msra.mxu0 %v603
        %1062 = vmatprep.subr.mxu0 0.0
        %1063 = vmatpush1.msra.mxu0 %v602
        %1064 = vmatprep.subr.mxu0 0.0
        %1065 = vmatpush1.msra.mxu0 %v601
        %1066 = vmatprep.subr.mxu0 0.0
        %1067 = vmatpush1.msra.mxu0 %v600
        %1068 = vmatprep.subr.mxu0 0.0
        %1069 = vmatpush1.msra.mxu0 %v599
        %1070 = vmatprep.subr.mxu0 0.0
        %1071 = vmatpush1.msra.mxu0 %v598
        %1072 = vmatprep.subr.mxu0 0.0
        %1073 = vmatpush1.msra.mxu0 %v597
        %1074 = vmatprep.subr.mxu0 0.0
        %1075 = vmatpush1.msra.mxu0 %v596
        %1076 = vmatprep.subr.mxu0 0.0
        %1077 = vmatpush1.msra.mxu0 %v595
        %1078 = vmatprep.subr.mxu0 0.0
        %1079 = vmatpush2.msra.mxu0 0.0
        %1080 = vmatprep.subr.mxu0 0.0
        %1081 = vmatpush2.msra.mxu0 0.0
        %1082 = vmatprep.subr.mxu0 0.0
        %1083 = vmatpush2.msra.mxu0 0.0
        %1084 = vmatprep.subr.mxu0 0.0
        %1085 = vmatpush2.msra.mxu0 0.0
        %1086 = vmatprep.subr.mxu0 0.0
        %1087 = vmatpush2.msra.mxu0 0.0
        %1088 = vmatprep.subr.mxu0 0.0
        %1089 = vmatpush2.msra.mxu0 0.0
        %1090 = vmatprep.subr.mxu0 0.0
        %1091 = vmatpush2.msra.mxu0 0.0
        %1092 = vmatprep.subr.mxu0 0.0
        %1093 = vmatpush2.msra.mxu0 0.0
        %1094 = vmatprep.subr.mxu0 0.0
        %1095 = vmatpush2.msra.mxu0 0.0
        %1096 = vmatprep.subr.mxu0 0.0
        %1097 = vmatpush2.msra.mxu0 0.0
        %1098 = vmatprep.subr.mxu0 0.0
        %1099 = vmatpush2.msra.mxu0 0.0
        %1100 = vmatprep.subr.mxu0 0.0
        %1101 = vmatpush2.msra.mxu0 0.0
        %1102 = vmatprep.subr.mxu0 0.0
        %1103 = vmatpush2.msra.mxu0 0.0
        %1104 = vmatprep.subr.mxu0 0.0
        %1105 = vmatpush2.msra.mxu0 0.0
        %1106 = vmatprep.subr.mxu0 0.0
        %1107 = vmatpush2.msra.mxu0 0.0
        %1108 = vmatprep.subr.mxu0 0.0
        %1109 = vmatpush2.msra.mxu0 0.0
        %1110 = vmatprep.mubr.f32.mxu0 0.0
        %1111 = vmatmul.mubr.f32.gmra.mxu0 %v1044
        %v1112 = vpop.f32.mrf.mxu0
        %v1113 = vadd.f32 0.0, %v1112
        %v1114 = vpop.f32.mrf.mxu0
        %1115 = vmatprep.mubr.f32.mxu0 0.0
        %1116 = vmatmul.mubr.f32.gmra.mxu0 %v1045
        %v1117 = vpop.f32.mrf.mxu0
        %v1118 = vadd.f32 0.0, %v1117
        %v1119 = vpop.f32.mrf.mxu0
        %1120 = vdwg.mxu0
        %v1121 = vmul.f32 %v1113, 0.17677669
        %v1122 = vmul.f32 %v1118, 0.17677669
        %v1123 = vmax.f32 %v1042, %v1121
        %v1124 = vmax.f32 %v1043, %v1122
        %v1125 = vsub.f32 %v1042, %v1123
        %v1126 = vsub.f32 %v1043, %v1124
        %v1127 = vmul.f32 %v1125, 1.442695
        %v1128 = vpow.pop %v1127
        %v1129 = vmul.f32 %v1126, 1.442695
        %v1130 = vpow.pop %v1129
        %v1131 = vsub.f32 %v1121, %v1123
        %v1132 = vsub.f32 %v1122, %v1124
        %v1133 = vmul.f32 %v1131, 1.442695
        %v1134 = vpow.pop %v1133
        %v1135 = vmul.f32 %v1132, 1.442695
        %v1136 = vpow.pop %v1135
        %v1137 = vadd.f32 %v1128, %v1134
        %v1138 = vadd.f32 %v1130, %v1136
        %v1139 = vrcp.pop %v1137
        %v1140 = vrcp.pop %v1138
        %v1141 = vmul.f32 %v1128, %v1139
        %v1142 = vmul.f32 %v1130, %v1140
        %vm1143 = vcmask 31744
        %v1145 = vsel %vm1143, %v1141, 0
        %v1148 = vsel %vm1143, %v1142, 0
        %vm1150 = vcmask 1043456
        %v1152 = vsel %vm1150, %v611, 0
        %1154 = vmatprep.subr.mxu0 0.0
        %1155 = vmatpush1.msra.mxu0 0.0
        %1156 = vmatprep.subr.mxu0 0.0
        %1157 = vmatpush1.msra.mxu0 0.0
        %1158 = vmatprep.subr.mxu0 0.0
        %1159 = vmatpush1.msra.mxu0 0.0
        %1160 = vmatprep.subr.mxu0 0.0
        %1161 = vmatpush1.msra.mxu0 0.0
        %1162 = vmatprep.subr.mxu0 0.0
        %1163 = vmatpush1.msra.mxu0 0.0
        %1164 = vmatprep.subr.mxu0 0.0
        %1165 = vmatpush1.msra.mxu0 0.0
        %1166 = vmatprep.subr.mxu0 0.0
        %1167 = vmatpush1.msra.mxu0 0.0
        %1168 = vmatprep.subr.mxu0 0.0
        %1169 = vmatpush1.msra.mxu0 0.0
        %1170 = vmatprep.subr.mxu0 0.0
        %1171 = vmatpush1.msra.mxu0 0.0
        %1172 = vmatprep.subr.mxu0 0.0
        %1173 = vmatpush1.msra.mxu0 0.0
        %1174 = vmatprep.subr.mxu0 0.0
        %1175 = vmatpush1.msra.mxu0 0.0
        %1176 = vmatprep.subr.mxu0 0.0
        %1177 = vmatpush1.msra.mxu0 0.0
        %1178 = vmatprep.subr.mxu0 0.0
        %1179 = vmatpush1.msra.mxu0 0.0
        %1180 = vmatprep.subr.mxu0 0.0
        %1181 = vmatpush1.msra.mxu0 0.0
        %1182 = vmatprep.subr.mxu0 0.0
        %1183 = vmatpush1.msra.mxu0 0.0
        %1184 = vmatprep.subr.mxu0 0.0
        %1185 = vmatpush1.msra.mxu0 %v1152
        %1186 = vmatprep.subr.mxu0 0.0
        %1187 = vmatpush2.msra.mxu0 0.0
        %1188 = vmatprep.subr.mxu0 0.0
        %1189 = vmatpush2.msra.mxu0 0.0
        %1190 = vmatprep.subr.mxu0 0.0
        %1191 = vmatpush2.msra.mxu0 0.0
        %1192 = vmatprep.subr.mxu0 0.0
        %1193 = vmatpush2.msra.mxu0 0.0
        %1194 = vmatprep.subr.mxu0 0.0
        %1195 = vmatpush2.msra.mxu0 0.0
        %1196 = vmatprep.subr.mxu0 0.0
        %1197 = vmatpush2.msra.mxu0 0.0
        %1198 = vmatprep.subr.mxu0 0.0
        %1199 = vmatpush2.msra.mxu0 0.0
        %1200 = vmatprep.subr.mxu0 0.0
        %1201 = vmatpush2.msra.mxu0 0.0
        %1202 = vmatprep.subr.mxu0 0.0
        %1203 = vmatpush2.msra.mxu0 0.0
        %1204 = vmatprep.subr.mxu0 0.0
        %1205 = vmatpush2.msra.mxu0 0.0
        %1206 = vmatprep.subr.mxu0 0.0
        %1207 = vmatpush2.msra.mxu0 0.0
        %1208 = vmatprep.subr.mxu0 0.0
        %1209 = vmatpush2.msra.mxu0 0.0
        %1210 = vmatprep.subr.mxu0 0.0
        %1211 = vmatpush2.msra.mxu0 0.0
        %1212 = vmatprep.subr.mxu0 0.0
        %1213 = vmatpush2.msra.mxu0 0.0
        %1214 = vmatprep.subr.mxu0 0.0
        %1215 = vmatpush2.msra.mxu0 0.0
        %1216 = vmatprep.subr.mxu0 0.0
        %1217 = vmatpush2.msra.mxu0 0.0
        %1218 = vmatprep.mubr.f32.mxu0 0.0
        %1219 = vmatmul.mubr.f32.gmra.mxu0 %v1145
        %v1220 = vpop.f32.mrf.mxu0
        %v1221 = vadd.f32 0.0, %v1220
        %v1222 = vpop.f32.mrf.mxu0
        %1223 = vmatprep.mubr.f32.mxu0 0.0
        %1224 = vmatmul.mubr.f32.gmra.mxu0 %v1148
        %v1225 = vpop.f32.mrf.mxu0
        %v1226 = vadd.f32 0.0, %v1225
        %v1227 = vpop.f32.mrf.mxu0
        %1228 = vdwg.mxu0
        %v1229 = vmul.f32 %v1221, %v904
        %v1230 = vmul.f32 %v1226, %v909
        %v1231 = vmul.f32 %v1134, %v1139
        %v1232 = vmul.f32 %v1136, %v1140
        %v1234 = vsel %vm1143, %v1231, 0
        %v1237 = vsel %vm1143, %v1232, 0
        %1239 = vmatprep.subr.mxu0 0.0
        %1240 = vmatpush1.msra.mxu0 0.0
        %1241 = vmatprep.subr.mxu0 0.0
        %1242 = vmatpush1.msra.mxu0 0.0
        %1243 = vmatprep.subr.mxu0 0.0
        %1244 = vmatpush1.msra.mxu0 0.0
        %1245 = vmatprep.subr.mxu0 0.0
        %1246 = vmatpush1.msra.mxu0 0.0
        %1247 = vmatprep.subr.mxu0 0.0
        %1248 = vmatpush1.msra.mxu0 0.0
        %1249 = vmatprep.subr.mxu0 0.0
        %1250 = vmatpush1.msra.mxu0 0.0
        %1251 = vmatprep.subr.mxu0 0.0
        %1252 = vmatpush1.msra.mxu0 0.0
        %1253 = vmatprep.subr.mxu0 0.0
        %1254 = vmatpush1.msra.mxu0 0.0
        %1255 = vmatprep.subr.mxu0 0.0
        %1256 = vmatpush1.msra.mxu0 0.0
        %1257 = vmatprep.subr.mxu0 0.0
        %1258 = vmatpush1.msra.mxu0 0.0
        %1259 = vmatprep.subr.mxu0 0.0
        %1260 = vmatpush1.msra.mxu0 0.0
        %1261 = vmatprep.subr.mxu0 0.0
        %1262 = vmatpush1.msra.mxu0 0.0
        %1263 = vmatprep.subr.mxu0 0.0
        %1264 = vmatpush1.msra.mxu0 0.0
        %1265 = vmatprep.subr.mxu0 0.0
        %1266 = vmatpush1.msra.mxu0 0.0
        %1267 = vmatprep.subr.mxu0 0.0
        %1268 = vmatpush1.msra.mxu0 0.0
        %1269 = vmatprep.subr.mxu0 0.0
        %1270 = vmatpush1.msra.mxu0 %v1152
        %1271 = vmatprep.subr.mxu0 0.0
        %1272 = vmatpush2.msra.mxu0 0.0
        %1273 = vmatprep.subr.mxu0 0.0
        %1274 = vmatpush2.msra.mxu0 0.0
        %1275 = vmatprep.subr.mxu0 0.0
        %1276 = vmatpush2.msra.mxu0 0.0
        %1277 = vmatprep.subr.mxu0 0.0
        %1278 = vmatpush2.msra.mxu0 0.0
        %1279 = vmatprep.subr.mxu0 0.0
        %1280 = vmatpush2.msra.mxu0 0.0
        %1281 = vmatprep.subr.mxu0 0.0
        %1282 = vmatpush2.msra.mxu0 0.0
        %1283 = vmatprep.subr.mxu0 0.0
        %1284 = vmatpush2.msra.mxu0 0.0
        %1285 = vmatprep.subr.mxu0 0.0
        %1286 = vmatpush2.msra.mxu0 0.0
        %1287 = vmatprep.subr.mxu0 0.0
        %1288 = vmatpush2.msra.mxu0 0.0
        %1289 = vmatprep.subr.mxu0 0.0
        %1290 = vmatpush2.msra.mxu0 0.0
        %1291 = vmatprep.subr.mxu0 0.0
        %1292 = vmatpush2.msra.mxu0 0.0
        %1293 = vmatprep.subr.mxu0 0.0
        %1294 = vmatpush2.msra.mxu0 0.0
        %1295 = vmatprep.subr.mxu0 0.0
        %1296 = vmatpush2.msra.mxu0 0.0
        %1297 = vmatprep.subr.mxu0 0.0
        %1298 = vmatpush2.msra.mxu0 0.0
        %1299 = vmatprep.subr.mxu0 0.0
        %1300 = vmatpush2.msra.mxu0 0.0
        %1301 = vmatprep.subr.mxu0 0.0
        %1302 = vmatpush2.msra.mxu0 0.0
        %1303 = vmatprep.mubr.f32.mxu0 0.0
        %1304 = vmatmul.mubr.f32.gmra.mxu0 %v1234
        %v1305 = vpop.f32.mrf.mxu0
        %v1306 = vadd.f32 0.0, %v1305
        %v1307 = vpop.f32.mrf.mxu0
        %1308 = vmatprep.mubr.f32.mxu0 0.0
        %1309 = vmatmul.mubr.f32.gmra.mxu0 %v1237
        %v1310 = vpop.f32.mrf.mxu0
        %v1311 = vadd.f32 0.0, %v1310
        %v1312 = vpop.f32.mrf.mxu0
        %1313 = vdwg.mxu0
        %v1314 = vmul.f32 %v1306, %v914
        %v1315 = vmul.f32 %v1311, %v919
        %v1316 = vadd.f32 %v1229, %v1314
        %v1317 = vadd.f32 %v1230, %v1315
        %v1318 = vld [vmem:[%s5] sm:$0xff]
        %v1319 = vld [vmem:[%s5 + $0x8] sm:$0xff]
        %v1320 = vld [vmem:[%s5 + $0x10] sm:$0xff]
        %v1321 = vld [vmem:[%s5 + $0x18] sm:$0xff]
        %v1322 = vld [vmem:[%s5 + $0x20] sm:$0xff]
        %v1323 = vld [vmem:[%s5 + $0x28] sm:$0xff]
        %v1324 = vld [vmem:[%s5 + $0x30] sm:$0xff]
        %v1325 = vld [vmem:[%s5 + $0x38] sm:$0xff]
        %v1326 = vld [vmem:[%s5 + $0x40] sm:$0xff]
        %v1327 = vld [vmem:[%s5 + $0x48] sm:$0xff]
        %v1328 = vld [vmem:[%s5 + $0x50] sm:$0xff]
        %v1329 = vld [vmem:[%s5 + $0x58] sm:$0xff]
        %v1330 = vld [vmem:[%s5 + $0x60] sm:$0xff]
        %v1331 = vld [vmem:[%s5 + $0x68] sm:$0xff]
        %v1332 = vld [vmem:[%s5 + $0x70] sm:$0xff]
        %v1333 = vld [vmem:[%s5 + $0x78] sm:$0xff]
        %v1334 = vld [vmem:[%s6] sm:$0x1]
        %v1336 = vlaneseq
        %v1337 = vshrl.u32 %v1336, 7
        %v1338 = vsub.s32 0, %v1337
        %v1339 = vrot.slane %v1334, %v1338
        %1341 = vmatprep.subr.mxu0 0.0
        %1342 = vmatpush1.msra.mxu0 %v1333
        %1343 = vmatprep.subr.mxu0 0.0
        %1344 = vmatpush1.msra.mxu0 %v1332
        %1345 = vmatprep.subr.mxu0 0.0
        %1346 = vmatpush1.msra.mxu0 %v1331
        %1347 = vmatprep.subr.mxu0 0.0
        %1348 = vmatpush1.msra.mxu0 %v1330
        %1349 = vmatprep.subr.mxu0 0.0
        %1350 = vmatpush1.msra.mxu0 %v1329
        %1351 = vmatprep.subr.mxu0 0.0
        %1352 = vmatpush1.msra.mxu0 %v1328
        %1353 = vmatprep.subr.mxu0 0.0
        %1354 = vmatpush1.msra.mxu0 %v1327
        %1355 = vmatprep.subr.mxu0 0.0
        %1356 = vmatpush1.msra.mxu0 %v1326
        %1357 = vmatprep.subr.mxu0 0.0
        %1358 = vmatpush1.msra.mxu0 %v1325
        %1359 = vmatprep.subr.mxu0 0.0
        %1360 = vmatpush1.msra.mxu0 %v1324
        %1361 = vmatprep.subr.mxu0 0.0
        %1362 = vmatpush1.msra.mxu0 %v1323
        %1363 = vmatprep.subr.mxu0 0.0
        %1364 = vmatpush1.msra.mxu0 %v1322
        %1365 = vmatprep.subr.mxu0 0.0
        %1366 = vmatpush1.msra.mxu0 %v1321
        %1367 = vmatprep.subr.mxu0 0.0
        %1368 = vmatpush1.msra.mxu0 %v1320
        %1369 = vmatprep.subr.mxu0 0.0
        %1370 = vmatpush1.msra.mxu0 %v1319
        %1371 = vmatprep.subr.mxu0 0.0
        %1372 = vmatpush1.msra.mxu0 %v1318
        %1373 = vmatprep.subr.mxu0 0.0
        %1374 = vmatpush2.msra.mxu0 0.0
        %1375 = vmatprep.subr.mxu0 0.0
        %1376 = vmatpush2.msra.mxu0 0.0
        %1377 = vmatprep.subr.mxu0 0.0
        %1378 = vmatpush2.msra.mxu0 0.0
        %1379 = vmatprep.subr.mxu0 0.0
        %1380 = vmatpush2.msra.mxu0 0.0
        %1381 = vmatprep.subr.mxu0 0.0
        %1382 = vmatpush2.msra.mxu0 0.0
        %1383 = vmatprep.subr.mxu0 0.0
        %1384 = vmatpush2.msra.mxu0 0.0
        %1385 = vmatprep.subr.mxu0 0.0
        %1386 = vmatpush2.msra.mxu0 0.0
        %1387 = vmatprep.subr.mxu0 0.0
        %1388 = vmatpush2.msra.mxu0 0.0
        %1389 = vmatprep.subr.mxu0 0.0
        %1390 = vmatpush2.msra.mxu0 0.0
        %1391 = vmatprep.subr.mxu0 0.0
        %1392 = vmatpush2.msra.mxu0 0.0
        %1393 = vmatprep.subr.mxu0 0.0
        %1394 = vmatpush2.msra.mxu0 0.0
        %1395 = vmatprep.subr.mxu0 0.0
        %1396 = vmatpush2.msra.mxu0 0.0
        %1397 = vmatprep.subr.mxu0 0.0
        %1398 = vmatpush2.msra.mxu0 0.0
        %1399 = vmatprep.subr.mxu0 0.0
        %1400 = vmatpush2.msra.mxu0 0.0
        %1401 = vmatprep.subr.mxu0 0.0
        %1402 = vmatpush2.msra.mxu0 0.0
        %1403 = vmatprep.subr.mxu0 0.0
        %1404 = vmatpush2.msra.mxu0 0.0
        %1405 = vmatprep.mubr.f32.mxu0 0.0
        %1406 = vmatmul.mubr.f32.gmra.mxu0 %v1316
        %v1407 = vpop.f32.mrf.mxu0
        %v1408 = vadd.f32 %v1339, %v1407
        %v1409 = vpop.f32.mrf.mxu0
        %1410 = vmatprep.mubr.f32.mxu0 0.0
        %1411 = vmatmul.mubr.f32.gmra.mxu0 %v1317
        %v1412 = vpop.f32.mrf.mxu0
        %v1413 = vadd.f32 %v1339, %v1412
        %v1414 = vpop.f32.mrf.mxu0
        %1415 = vdwg.mxu0
        %v1417 = vlaneseq
        %v1418 = vshrl.u32 %v1417, 7
        %v1419 = vsub.s32 0, %v1418
        %v1420 = vrot.slane %v612, %v1419
        %v1422 = vmul.f32 %v1408, %v1420
        %v1423 = vmul.f32 %v1413, %v1420
        %v1424 = vadd.f32 %v613, %v1422
        %v1425 = vadd.f32 %v614, %v1423
        %v1426 = vld [vmem:[%s10] sm:$0xff]
        %v1427 = vld [vmem:[%s10 + $0x8] sm:$0xff]
        %v1428 = vld [vmem:[%s10 + $0x10] sm:$0xff]
        %v1429 = vld [vmem:[%s10 + $0x18] sm:$0xff]
        %v1430 = vld [vmem:[%s10 + $0x20] sm:$0xff]
        %v1431 = vld [vmem:[%s10 + $0x28] sm:$0xff]
        %v1432 = vld [vmem:[%s10 + $0x30] sm:$0xff]
        %v1433 = vld [vmem:[%s10 + $0x38] sm:$0xff]
        %v1434 = vld [vmem:[%s10 + $0x40] sm:$0xff]
        %v1435 = vld [vmem:[%s10 + $0x48] sm:$0xff]
        %v1436 = vld [vmem:[%s10 + $0x50] sm:$0xff]
        %v1437 = vld [vmem:[%s10 + $0x58] sm:$0xff]
        %v1438 = vld [vmem:[%s10 + $0x60] sm:$0xff]
        %v1439 = vld [vmem:[%s10 + $0x68] sm:$0xff]
        %v1440 = vld [vmem:[%s10 + $0x70] sm:$0xff]
        %v1441 = vld [vmem:[%s10 + $0x78] sm:$0xff]
        %v1442 = vld [vmem:[%s10 + $0x80] sm:$0xff]
        %v1443 = vld [vmem:[%s10 + $0x88] sm:$0xff]
        %v1444 = vld [vmem:[%s10 + $0x90] sm:$0xff]
        %v1445 = vld [vmem:[%s10 + $0x98] sm:$0xff]
        %v1446 = vld [vmem:[%s10 + $0xa0] sm:$0xff]
        %v1447 = vld [vmem:[%s10 + $0xa8] sm:$0xff]
        %v1448 = vld [vmem:[%s10 + $0xb0] sm:$0xff]
        %v1449 = vld [vmem:[%s10 + $0xb8] sm:$0xff]
        %v1450 = vld [vmem:[%s10 + $0xc0] sm:$0xff]
        %v1451 = vld [vmem:[%s10 + $0xc8] sm:$0xff]
        %v1452 = vld [vmem:[%s10 + $0xd0] sm:$0xff]
        %v1453 = vld [vmem:[%s10 + $0xd8] sm:$0xff]
        %v1454 = vld [vmem:[%s10 + $0xe0] sm:$0xff]
        %v1455 = vld [vmem:[%s10 + $0xe8] sm:$0xff]
        %v1456 = vld [vmem:[%s10 + $0xf0] sm:$0xff]
        %v1457 = vld [vmem:[%s10 + $0xf8] sm:$0xff]
        %v1458 = vld [vmem:[%s10 + $0x100] sm:$0xff]
        %v1459 = vld [vmem:[%s10 + $0x108] sm:$0xff]
        %v1460 = vld [vmem:[%s10 + $0x110] sm:$0xff]
        %v1461 = vld [vmem:[%s10 + $0x118] sm:$0xff]
        %v1462 = vld [vmem:[%s10 + $0x120] sm:$0xff]
        %v1463 = vld [vmem:[%s10 + $0x128] sm:$0xff]
        %v1464 = vld [vmem:[%s10 + $0x130] sm:$0xff]
        %v1465 = vld [vmem:[%s10 + $0x138] sm:$0xff]
        %v1466 = vld [vmem:[%s10 + $0x140] sm:$0xff]
        %v1467 = vld [vmem:[%s10 + $0x148] sm:$0xff]
        %v1468 = vld [vmem:[%s10 + $0x150] sm:$0xff]
        %v1469 = vld [vmem:[%s10 + $0x158] sm:$0xff]
        %v1470 = vld [vmem:[%s10 + $0x160] sm:$0xff]
        %v1471 = vld [vmem:[%s10 + $0x168] sm:$0xff]
        %v1472 = vld [vmem:[%s10 + $0x170] sm:$0xff]
        %v1473 = vld [vmem:[%s10 + $0x178] sm:$0xff]
        %v1474 = vld [vmem:[%s10 + $0x180] sm:$0xff]
        %v1475 = vld [vmem:[%s10 + $0x188] sm:$0xff]
        %v1476 = vld [vmem:[%s10 + $0x190] sm:$0xff]
        %v1477 = vld [vmem:[%s10 + $0x198] sm:$0xff]
        %v1478 = vld [vmem:[%s10 + $0x1a0] sm:$0xff]
        %v1479 = vld [vmem:[%s10 + $0x1a8] sm:$0xff]
        %v1480 = vld [vmem:[%s10 + $0x1b0] sm:$0xff]
        %v1481 = vld [vmem:[%s10 + $0x1b8] sm:$0xff]
        %v1482 = vld [vmem:[%s10 + $0x1c0] sm:$0xff]
        %v1483 = vld [vmem:[%s10 + $0x1c8] sm:$0xff]
        %v1484 = vld [vmem:[%s10 + $0x1d0] sm:$0xff]
        %v1485 = vld [vmem:[%s10 + $0x1d8] sm:$0xff]
        %v1486 = vld [vmem:[%s10 + $0x1e0] sm:$0xff]
        %v1487 = vld [vmem:[%s10 + $0x1e8] sm:$0xff]
        %v1488 = vld [vmem:[%s10 + $0x1f0] sm:$0xff]
        %v1489 = vld [vmem:[%s10 + $0x1f8] sm:$0xff]
        %v1490 = vld [vmem:[%s10 + $0x200] sm:$0xff]
        %v1491 = vld [vmem:[%s10 + $0x208] sm:$0xff]
        %v1492 = vld [vmem:[%s10 + $0x210] sm:$0xff]
        %v1493 = vld [vmem:[%s10 + $0x218] sm:$0xff]
        %v1494 = vld [vmem:[%s10 + $0x220] sm:$0xff]
        %v1495 = vld [vmem:[%s10 + $0x228] sm:$0xff]
        %v1496 = vld [vmem:[%s10 + $0x230] sm:$0xff]
        %v1497 = vld [vmem:[%s10 + $0x238] sm:$0xff]
        %v1498 = vld [vmem:[%s10 + $0x240] sm:$0xff]
        %v1499 = vld [vmem:[%s10 + $0x248] sm:$0xff]
        %v1500 = vld [vmem:[%s10 + $0x250] sm:$0xff]
        %v1501 = vld [vmem:[%s10 + $0x258] sm:$0xff]
        %v1502 = vld [vmem:[%s10 + $0x260] sm:$0xff]
        %v1503 = vld [vmem:[%s10 + $0x268] sm:$0xff]
        %v1504 = vld [vmem:[%s10 + $0x270] sm:$0xff]
        %v1505 = vld [vmem:[%s10 + $0x278] sm:$0xff]
        %v1506 = vld [vmem:[%s10 + $0x280] sm:$0xff]
        %v1507 = vld [vmem:[%s10 + $0x288] sm:$0xff]
        %v1508 = vld [vmem:[%s10 + $0x290] sm:$0xff]
        %v1509 = vld [vmem:[%s10 + $0x298] sm:$0xff]
        %v1510 = vld [vmem:[%s10 + $0x2a0] sm:$0xff]
        %v1511 = vld [vmem:[%s10 + $0x2a8] sm:$0xff]
        %v1512 = vld [vmem:[%s10 + $0x2b0] sm:$0xff]
        %v1513 = vld [vmem:[%s10 + $0x2b8] sm:$0xff]
        %v1514 = vld [vmem:[%s10 + $0x2c0] sm:$0xff]
        %v1515 = vld [vmem:[%s10 + $0x2c8] sm:$0xff]
        %v1516 = vld [vmem:[%s10 + $0x2d0] sm:$0xff]
        %v1517 = vld [vmem:[%s10 + $0x2d8] sm:$0xff]
        %v1518 = vld [vmem:[%s10 + $0x2e0] sm:$0xff]
        %v1519 = vld [vmem:[%s10 + $0x2e8] sm:$0xff]
        %v1520 = vld [vmem:[%s10 + $0x2f0] sm:$0xff]
        %v1521 = vld [vmem:[%s10 + $0x2f8] sm:$0xff]
        %v1522 = vld [vmem:[%s11] sm:$0x3f]
        %v1524 = vlaneseq
        %v1525 = vshrl.u32 %v1524, 7
        %v1526 = vsub.s32 0, %v1525
        %v1527 = vrot.slane %v1522, %v1526
        %v1528 = vlaneseq
        %v1529 = vshrl.u32 %v1528, 7
        %v1530 = vsub.s32 1, %v1529
        %v1531 = vrot.slane %v1522, %v1530
        %v1532 = vlaneseq
        %v1533 = vshrl.u32 %v1532, 7
        %v1534 = vsub.s32 2, %v1533
        %v1535 = vrot.slane %v1522, %v1534
        %v1536 = vlaneseq
        %v1537 = vshrl.u32 %v1536, 7
        %v1538 = vsub.s32 3, %v1537
        %v1539 = vrot.slane %v1522, %v1538
        %v1540 = vlaneseq
        %v1541 = vshrl.u32 %v1540, 7
        %v1542 = vsub.s32 4, %v1541
        %v1543 = vrot.slane %v1522, %v1542
        %v1544 = vlaneseq
        %v1545 = vshrl.u32 %v1544, 7
        %v1546 = vsub.s32 5, %v1545
        %v1547 = vrot.slane %v1522, %v1546
        %1554 = vmatprep.subr.mxu0 %v1517
        %1555 = vmatpush1.msra.mxu0 %v1516
        %1556 = vmatprep.subr.mxu0 %v1511
        %1557 = vmatpush1.msra.mxu0 %v1510
        %1558 = vmatprep.subr.mxu0 %v1505
        %1559 = vmatpush1.msra.mxu0 %v1504
        %1560 = vmatprep.subr.mxu0 %v1499
        %1561 = vmatpush1.msra.mxu0 %v1498
        %1562 = vmatprep.subr.mxu0 %v1493
        %1563 = vmatpush1.msra.mxu0 %v1492
        %1564 = vmatprep.subr.mxu0 %v1487
        %1565 = vmatpush1.msra.mxu0 %v1486
        %1566 = vmatprep.subr.mxu0 %v1481
        %1567 = vmatpush1.msra.mxu0 %v1480
        %1568 = vmatprep.subr.mxu0 %v1475
        %1569 = vmatpush1.msra.mxu0 %v1474
        %1570 = vmatprep.subr.mxu0 %v1469
        %1571 = vmatpush1.msra.mxu0 %v1468
        %1572 = vmatprep.subr.mxu0 %v1463
        %1573 = vmatpush1.msra.mxu0 %v1462
        %1574 = vmatprep.subr.mxu0 %v1457
        %1575 = vmatpush1.msra.mxu0 %v1456
        %1576 = vmatprep.subr.mxu0 %v1451
        %1577 = vmatpush1.msra.mxu0 %v1450
        %1578 = vmatprep.subr.mxu0 %v1445
        %1579 = vmatpush1.msra.mxu0 %v1444
        %1580 = vmatprep.subr.mxu0 %v1439
        %1581 = vmatpush1.msra.mxu0 %v1438
        %1582 = vmatprep.subr.mxu0 %v1433
        %1583 = vmatpush1.msra.mxu0 %v1432
        %1584 = vmatprep.subr.mxu0 %v1427
        %1585 = vmatpush1.msra.mxu0 %v1426
        %1586 = vmatprep.subr.mxu0 0.0
        %1587 = vmatpush2.msra.mxu0 0.0
        %1588 = vmatprep.subr.mxu0 0.0
        %1589 = vmatpush2.msra.mxu0 0.0
        %1590 = vmatprep.subr.mxu0 0.0
        %1591 = vmatpush2.msra.mxu0 0.0
        %1592 = vmatprep.subr.mxu0 0.0
        %1593 = vmatpush2.msra.mxu0 0.0
        %1594 = vmatprep.subr.mxu0 0.0
        %1595 = vmatpush2.msra.mxu0 0.0
        %1596 = vmatprep.subr.mxu0 0.0
        %1597 = vmatpush2.msra.mxu0 0.0
        %1598 = vmatprep.subr.mxu0 0.0
        %1599 = vmatpush2.msra.mxu0 0.0
        %1600 = vmatprep.subr.mxu0 0.0
        %1601 = vmatpush2.msra.mxu0 0.0
        %1602 = vmatprep.subr.mxu0 0.0
        %1603 = vmatpush2.msra.mxu0 0.0
        %1604 = vmatprep.subr.mxu0 0.0
        %1605 = vmatpush2.msra.mxu0 0.0
        %1606 = vmatprep.subr.mxu0 0.0
        %1607 = vmatpush2.msra.mxu0 0.0
        %1608 = vmatprep.subr.mxu0 0.0
        %1609 = vmatpush2.msra.mxu0 0.0
        %1610 = vmatprep.subr.mxu0 0.0
        %1611 = vmatpush2.msra.mxu0 0.0
        %1612 = vmatprep.subr.mxu0 0.0
        %1613 = vmatpush2.msra.mxu0 0.0
        %1614 = vmatprep.subr.mxu0 0.0
        %1615 = vmatpush2.msra.mxu0 0.0
        %1616 = vmatprep.subr.mxu0 0.0
        %1617 = vmatpush2.msra.mxu0 0.0
        %1618 = vmatprep.mubr.f32.mxu0 0.0
        %1619 = vmatmul.mubr.f32.gmra.mxu0 %v1424
        %v1620 = vpop.f32.mrf.mxu0
        %v1621 = vadd.f32 %v1527, %v1620
        %v1622 = vpop.f32.mrf.mxu0
        %v1623 = vadd.f32 %v1531, %v1622
        %1624 = vmatprep.mubr.f32.mxu0 0.0
        %1625 = vmatmul.mubr.f32.gmra.mxu0 %v1425
        %v1626 = vpop.f32.mrf.mxu0
        %v1627 = vadd.f32 %v1527, %v1626
        %v1628 = vpop.f32.mrf.mxu0
        %v1629 = vadd.f32 %v1531, %v1628
        %1630 = vdwg.mxu0
        %1631 = vmatprep.subr.mxu0 %v1519
        %1632 = vmatpush1.msra.mxu0 %v1518
        %1633 = vmatprep.subr.mxu0 %v1513
        %1634 = vmatpush1.msra.mxu0 %v1512
        %1635 = vmatprep.subr.mxu0 %v1507
        %1636 = vmatpush1.msra.mxu0 %v1506
        %1637 = vmatprep.subr.mxu0 %v1501
        %1638 = vmatpush1.msra.mxu0 %v1500
        %1639 = vmatprep.subr.mxu0 %v1495
        %1640 = vmatpush1.msra.mxu0 %v1494
        %1641 = vmatprep.subr.mxu0 %v1489
        %1642 = vmatpush1.msra.mxu0 %v1488
        %1643 = vmatprep.subr.mxu0 %v1483
        %1644 = vmatpush1.msra.mxu0 %v1482
        %1645 = vmatprep.subr.mxu0 %v1477
        %1646 = vmatpush1.msra.mxu0 %v1476
        %1647 = vmatprep.subr.mxu0 %v1471
        %1648 = vmatpush1.msra.mxu0 %v1470
        %1649 = vmatprep.subr.mxu0 %v1465
        %1650 = vmatpush1.msra.mxu0 %v1464
        %1651 = vmatprep.subr.mxu0 %v1459
        %1652 = vmatpush1.msra.mxu0 %v1458
        %1653 = vmatprep.subr.mxu0 %v1453
        %1654 = vmatpush1.msra.mxu0 %v1452
        %1655 = vmatprep.subr.mxu0 %v1447
        %1656 = vmatpush1.msra.mxu0 %v1446
        %1657 = vmatprep.subr.mxu0 %v1441
        %1658 = vmatpush1.msra.mxu0 %v1440
        %1659 = vmatprep.subr.mxu0 %v1435
        %1660 = vmatpush1.msra.mxu0 %v1434
        %1661 = vmatprep.subr.mxu0 %v1429
        %1662 = vmatpush1.msra.mxu0 %v1428
        %1663 = vmatprep.subr.mxu0 0.0
        %1664 = vmatpush2.msra.mxu0 0.0
        %1665 = vmatprep.subr.mxu0 0.0
        %1666 = vmatpush2.msra.mxu0 0.0
        %1667 = vmatprep.subr.mxu0 0.0
        %1668 = vmatpush2.msra.mxu0 0.0
        %1669 = vmatprep.subr.mxu0 0.0
        %1670 = vmatpush2.msra.mxu0 0.0
        %1671 = vmatprep.subr.mxu0 0.0
        %1672 = vmatpush2.msra.mxu0 0.0
        %1673 = vmatprep.subr.mxu0 0.0
        %1674 = vmatpush2.msra.mxu0 0.0
        %1675 = vmatprep.subr.mxu0 0.0
        %1676 = vmatpush2.msra.mxu0 0.0
        %1677 = vmatprep.subr.mxu0 0.0
        %1678 = vmatpush2.msra.mxu0 0.0
        %1679 = vmatprep.subr.mxu0 0.0
        %1680 = vmatpush2.msra.mxu0 0.0
        %1681 = vmatprep.subr.mxu0 0.0
        %1682 = vmatpush2.msra.mxu0 0.0
        %1683 = vmatprep.subr.mxu0 0.0
        %1684 = vmatpush2.msra.mxu0 0.0
        %1685 = vmatprep.subr.mxu0 0.0
        %1686 = vmatpush2.msra.mxu0 0.0
        %1687 = vmatprep.subr.mxu0 0.0
        %1688 = vmatpush2.msra.mxu0 0.0
        %1689 = vmatprep.subr.mxu0 0.0
        %1690 = vmatpush2.msra.mxu0 0.0
        %1691 = vmatprep.subr.mxu0 0.0
        %1692 = vmatpush2.msra.mxu0 0.0
        %1693 = vmatprep.subr.mxu0 0.0
        %1694 = vmatpush2.msra.mxu0 0.0
        %1695 = vmatprep.mubr.f32.mxu0 0.0
        %1696 = vmatmul.mubr.f32.gmra.mxu0 %v1424
        %v1697 = vpop.f32.mrf.mxu0
        %v1698 = vadd.f32 %v1535, %v1697
        %v1699 = vpop.f32.mrf.mxu0
        %v1700 = vadd.f32 %v1539, %v1699
        %1701 = vmatprep.mubr.f32.mxu0 0.0
        %1702 = vmatmul.mubr.f32.gmra.mxu0 %v1425
        %v1703 = vpop.f32.mrf.mxu0
        %v1704 = vadd.f32 %v1535, %v1703
        %v1705 = vpop.f32.mrf.mxu0
        %v1706 = vadd.f32 %v1539, %v1705
        %1707 = vdwg.mxu0
        %1708 = vmatprep.subr.mxu0 %v1521
        %1709 = vmatpush1.msra.mxu0 %v1520
        %1710 = vmatprep.subr.mxu0 %v1515
        %1711 = vmatpush1.msra.mxu0 %v1514
        %1712 = vmatprep.subr.mxu0 %v1509
        %1713 = vmatpush1.msra.mxu0 %v1508
        %1714 = vmatprep.subr.mxu0 %v1503
        %1715 = vmatpush1.msra.mxu0 %v1502
        %1716 = vmatprep.subr.mxu0 %v1497
        %1717 = vmatpush1.msra.mxu0 %v1496
        %1718 = vmatprep.subr.mxu0 %v1491
        %1719 = vmatpush1.msra.mxu0 %v1490
        %1720 = vmatprep.subr.mxu0 %v1485
        %1721 = vmatpush1.msra.mxu0 %v1484
        %1722 = vmatprep.subr.mxu0 %v1479
        %1723 = vmatpush1.msra.mxu0 %v1478
        %1724 = vmatprep.subr.mxu0 %v1473
        %1725 = vmatpush1.msra.mxu0 %v1472
        %1726 = vmatprep.subr.mxu0 %v1467
        %1727 = vmatpush1.msra.mxu0 %v1466
        %1728 = vmatprep.subr.mxu0 %v1461
        %1729 = vmatpush1.msra.mxu0 %v1460
        %1730 = vmatprep.subr.mxu0 %v1455
        %1731 = vmatpush1.msra.mxu0 %v1454
        %1732 = vmatprep.subr.mxu0 %v1449
        %1733 = vmatpush1.msra.mxu0 %v1448
        %1734 = vmatprep.subr.mxu0 %v1443
        %1735 = vmatpush1.msra.mxu0 %v1442
        %1736 = vmatprep.subr.mxu0 %v1437
        %1737 = vmatpush1.msra.mxu0 %v1436
        %1738 = vmatprep.subr.mxu0 %v1431
        %1739 = vmatpush1.msra.mxu0 %v1430
        %1740 = vmatprep.subr.mxu0 0.0
        %1741 = vmatpush2.msra.mxu0 0.0
        %1742 = vmatprep.subr.mxu0 0.0
        %1743 = vmatpush2.msra.mxu0 0.0
        %1744 = vmatprep.subr.mxu0 0.0
        %1745 = vmatpush2.msra.mxu0 0.0
        %1746 = vmatprep.subr.mxu0 0.0
        %1747 = vmatpush2.msra.mxu0 0.0
        %1748 = vmatprep.subr.mxu0 0.0
        %1749 = vmatpush2.msra.mxu0 0.0
        %1750 = vmatprep.subr.mxu0 0.0
        %1751 = vmatpush2.msra.mxu0 0.0
        %1752 = vmatprep.subr.mxu0 0.0
        %1753 = vmatpush2.msra.mxu0 0.0
        %1754 = vmatprep.subr.mxu0 0.0
        %1755 = vmatpush2.msra.mxu0 0.0
        %1756 = vmatprep.subr.mxu0 0.0
        %1757 = vmatpush2.msra.mxu0 0.0
        %1758 = vmatprep.subr.mxu0 0.0
        %1759 = vmatpush2.msra.mxu0 0.0
        %1760 = vmatprep.subr.mxu0 0.0
        %1761 = vmatpush2.msra.mxu0 0.0
        %1762 = vmatprep.subr.mxu0 0.0
        %1763 = vmatpush2.msra.mxu0 0.0
        %1764 = vmatprep.subr.mxu0 0.0
        %1765 = vmatpush2.msra.mxu0 0.0
        %1766 = vmatprep.subr.mxu0 0.0
        %1767 = vmatpush2.msra.mxu0 0.0
        %1768 = vmatprep.subr.mxu0 0.0
        %1769 = vmatpush2.msra.mxu0 0.0
        %1770 = vmatprep.subr.mxu0 0.0
        %1771 = vmatpush2.msra.mxu0 0.0
        %1772 = vmatprep.mubr.f32.mxu0 0.0
        %1773 = vmatmul.mubr.f32.gmra.mxu0 %v1424
        %v1774 = vpop.f32.mrf.mxu0
        %v1775 = vadd.f32 %v1543, %v1774
        %v1776 = vpop.f32.mrf.mxu0
        %v1777 = vadd.f32 %v1547, %v1776
        %1778 = vmatprep.mubr.f32.mxu0 0.0
        %1779 = vmatmul.mubr.f32.gmra.mxu0 %v1425
        %v1780 = vpop.f32.mrf.mxu0
        %v1781 = vadd.f32 %v1543, %v1780
        %v1782 = vpop.f32.mrf.mxu0
        %v1783 = vadd.f32 %v1547, %v1782
        %1784 = vdwg.mxu0
        %v1785 = vrot.slane %v1621, 7
        %v1786 = vrot.slane %v1623, 7
        %v1787 = vrot.slane %v1698, 7
        %v1788 = vrot.slane %v1700, 7
        %v1789 = vrot.slane %v1775, 7
        %v1790 = vrot.slane %v1777, 7
        %v1791 = vrot.slane %v1627, 7
        %v1792 = vrot.slane %v1629, 7
        %v1793 = vrot.slane %v1704, 7
        %v1794 = vrot.slane %v1706, 7
        %v1795 = vrot.slane %v1781, 7
        %v1796 = vrot.slane %v1783, 7
        %vm1797 = vcmp.lt.s32.totalorder %v923, 1
        %v1798 = vsel %vm1797, %v1785, %v1791
        %v1799 = vsel %vm1797, %v1786, %v1792
        %v1800 = vsel %vm1797, %v1787, %v1793
        %v1801 = vsel %vm1797, %v1788, %v1794
        %v1802 = vsel %vm1797, %v1789, %v1795
        %v1803 = vsel %vm1797, %v1790, %v1796
        %v1804 = vsel %vm1797, %v1791, %v1785
        %v1805 = vsel %vm1797, %v1792, %v1786
        %v1806 = vsel %vm1797, %v1793, %v1787
        %v1807 = vsel %vm1797, %v1794, %v1788
        %v1808 = vsel %vm1797, %v1795, %v1789
        %v1809 = vsel %vm1797, %v1796, %v1790
        %v1810 = vmul.f32 %v1804, %v953
        %v1811 = vmul.f32 %v1805, %v953
        %v1812 = vmul.f32 %v1806, %v953
        %v1813 = vmul.f32 %v1807, %v953
        %v1814 = vmul.f32 %v1808, %v953
        %v1815 = vmul.f32 %v1809, %v953
        %v1816 = vmul.f32 %v1798, %v954
        %v1817 = vmul.f32 %v1799, %v954
        %v1818 = vmul.f32 %v1800, %v954
        %v1819 = vmul.f32 %v1801, %v954
        %v1820 = vmul.f32 %v1802, %v954
        %v1821 = vmul.f32 %v1803, %v954
        %v1822 = vrot.slane %v1621, 1
        %v1823 = vrot.slane %v1623, 1
        %v1824 = vrot.slane %v1698, 1
        %v1825 = vrot.slane %v1700, 1
        %v1826 = vrot.slane %v1775, 1
        %v1827 = vrot.slane %v1777, 1
        %v1828 = vrot.slane %v1627, 1
        %v1829 = vrot.slane %v1629, 1
        %v1830 = vrot.slane %v1704, 1
        %v1831 = vrot.slane %v1706, 1
        %v1832 = vrot.slane %v1781, 1
        %v1833 = vrot.slane %v1783, 1
        %vm1834 = vcmp.lt.s32.totalorder %v923, 7
        %v1835 = vsel %vm1834, %v1822, %v1828
        %v1836 = vsel %vm1834, %v1823, %v1829
        %v1837 = vsel %vm1834, %v1824, %v1830
        %v1838 = vsel %vm1834, %v1825, %v1831
        %v1839 = vsel %vm1834, %v1826, %v1832
        %v1840 = vsel %vm1834, %v1827, %v1833
        %v1841 = vsel %vm1834, %v1828, %v1822
        %v1842 = vsel %vm1834, %v1829, %v1823
        %v1843 = vsel %vm1834, %v1830, %v1824
        %v1844 = vsel %vm1834, %v1831, %v1825
        %v1845 = vsel %vm1834, %v1832, %v1826
        %v1846 = vsel %vm1834, %v1833, %v1827
        %v1847 = vmul.f32 %v1835, %v959
        %v1848 = vmul.f32 %v1836, %v959
        %v1849 = vmul.f32 %v1837, %v959
        %v1850 = vmul.f32 %v1838, %v959
        %v1851 = vmul.f32 %v1839, %v959
        %v1852 = vmul.f32 %v1840, %v959
        %v1853 = vmul.f32 %v1841, %v960
        %v1854 = vmul.f32 %v1842, %v960
        %v1855 = vmul.f32 %v1843, %v960
        %v1856 = vmul.f32 %v1844, %v960
        %v1857 = vmul.f32 %v1845, %v960
        %v1858 = vmul.f32 %v1846, %v960
        %v1862 = vlaneseq
        %v1863 = vshrl.u32 %v1862, 7
        %v1864 = vsub.s32 0, %v1863
        %v1865 = vrot.slane %v961, %v1864
        %v1866 = vlaneseq
        %v1867 = vshrl.u32 %v1866, 7
        %v1868 = vsub.s32 4, %v1867
        %v1869 = vrot.slane %v961, %v1868
        %v1870 = vlaneseq
        %v1871 = vshrl.u32 %v1870, 7
        %v1872 = vsub.s32 0, %v1871
        %v1873 = vrot.slane %v962, %v1872
        %v1874 = vlaneseq
        %v1875 = vshrl.u32 %v1874, 7
        %v1876 = vsub.s32 4, %v1875
        %v1877 = vrot.slane %v962, %v1876
        %v1878 = vlaneseq
        %v1879 = vshrl.u32 %v1878, 7
        %v1880 = vsub.s32 0, %v1879
        %v1881 = vrot.slane %v963, %v1880
        %v1882 = vlaneseq
        %v1883 = vshrl.u32 %v1882, 7
        %v1884 = vsub.s32 4, %v1883
        %v1885 = vrot.slane %v963, %v1884
        %v1892 = vlaneseq
        %v1893 = vshrl.u32 %v1892, 7
        %v1894 = vsub.s32 0, %v1893
        %v1895 = vrot.slane %v1865, %v1894
        %v1896 = vlaneseq
        %v1897 = vshrl.u32 %v1896, 7
        %v1898 = vsub.s32 0, %v1897
        %v1899 = vrot.slane %v1869, %v1898
        %v1900 = vlaneseq
        %v1901 = vshrl.u32 %v1900, 7
        %v1902 = vsub.s32 0, %v1901
        %v1903 = vrot.slane %v1873, %v1902
        %v1904 = vlaneseq
        %v1905 = vshrl.u32 %v1904, 7
        %v1906 = vsub.s32 0, %v1905
        %v1907 = vrot.slane %v1877, %v1906
        %v1908 = vlaneseq
        %v1909 = vshrl.u32 %v1908, 7
        %v1910 = vsub.s32 0, %v1909
        %v1911 = vrot.slane %v1881, %v1910
        %v1912 = vlaneseq
        %v1913 = vshrl.u32 %v1912, 7
        %v1914 = vsub.s32 0, %v1913
        %v1915 = vrot.slane %v1885, %v1914
        %v1916 = vmul.f32 %v1810, %v1895
        %v1917 = vmul.f32 %v1811, %v1899
        %v1918 = vmul.f32 %v1812, %v1903
        %v1919 = vmul.f32 %v1813, %v1907
        %v1920 = vmul.f32 %v1814, %v1911
        %v1921 = vmul.f32 %v1815, %v1915
        %v1922 = vmul.f32 %v1816, %v1895
        %v1923 = vmul.f32 %v1817, %v1899
        %v1924 = vmul.f32 %v1818, %v1903
        %v1925 = vmul.f32 %v1819, %v1907
        %v1926 = vmul.f32 %v1820, %v1911
        %v1927 = vmul.f32 %v1821, %v1915
        %v1928 = vlaneseq
        %v1929 = vshrl.u32 %v1928, 7
        %v1930 = vsub.s32 1, %v1929
        %v1931 = vrot.slane %v961, %v1930
        %v1932 = vlaneseq
        %v1933 = vshrl.u32 %v1932, 7
        %v1934 = vsub.s32 5, %v1933
        %v1935 = vrot.slane %v961, %v1934
        %v1936 = vlaneseq
        %v1937 = vshrl.u32 %v1936, 7
        %v1938 = vsub.s32 1, %v1937
        %v1939 = vrot.slane %v962, %v1938
        %v1940 = vlaneseq
        %v1941 = vshrl.u32 %v1940, 7
        %v1942 = vsub.s32 5, %v1941
        %v1943 = vrot.slane %v962, %v1942
        %v1944 = vlaneseq
        %v1945 = vshrl.u32 %v1944, 7
        %v1946 = vsub.s32 1, %v1945
        %v1947 = vrot.slane %v963, %v1946
        %v1948 = vlaneseq
        %v1949 = vshrl.u32 %v1948, 7
        %v1950 = vsub.s32 5, %v1949
        %v1951 = vrot.slane %v963, %v1950
        %v1958 = vlaneseq
        %v1959 = vshrl.u32 %v1958, 7
        %v1960 = vsub.s32 1, %v1959
        %v1961 = vrot.slane %v1931, %v1960
        %v1962 = vlaneseq
        %v1963 = vshrl.u32 %v1962, 7
        %v1964 = vsub.s32 1, %v1963
        %v1965 = vrot.slane %v1935, %v1964
        %v1966 = vlaneseq
        %v1967 = vshrl.u32 %v1966, 7
        %v1968 = vsub.s32 1, %v1967
        %v1969 = vrot.slane %v1939, %v1968
        %v1970 = vlaneseq
        %v1971 = vshrl.u32 %v1970, 7
        %v1972 = vsub.s32 1, %v1971
        %v1973 = vrot.slane %v1943, %v1972
        %v1974 = vlaneseq
        %v1975 = vshrl.u32 %v1974, 7
        %v1976 = vsub.s32 1, %v1975
        %v1977 = vrot.slane %v1947, %v1976
        %v1978 = vlaneseq
        %v1979 = vshrl.u32 %v1978, 7
        %v1980 = vsub.s32 1, %v1979
        %v1981 = vrot.slane %v1951, %v1980
        %v1982 = vmul.f32 %v1621, %v1961
        %v1983 = vmul.f32 %v1623, %v1965
        %v1984 = vmul.f32 %v1698, %v1969
        %v1985 = vmul.f32 %v1700, %v1973
        %v1986 = vmul.f32 %v1775, %v1977
        %v1987 = vmul.f32 %v1777, %v1981
        %v1988 = vmul.f32 %v1627, %v1961
        %v1989 = vmul.f32 %v1629, %v1965
        %v1990 = vmul.f32 %v1704, %v1969
        %v1991 = vmul.f32 %v1706, %v1973
        %v1992 = vmul.f32 %v1781, %v1977
        %v1993 = vmul.f32 %v1783, %v1981
        %v1994 = vadd.f32 %v1916, %v1982
        %v1995 = vadd.f32 %v1917, %v1983
        %v1996 = vadd.f32 %v1918, %v1984
        %v1997 = vadd.f32 %v1919, %v1985
        %v1998 = vadd.f32 %v1920, %v1986
        %v1999 = vadd.f32 %v1921, %v1987
        %v2000 = vadd.f32 %v1922, %v1988
        %v2001 = vadd.f32 %v1923, %v1989
        %v2002 = vadd.f32 %v1924, %v1990
        %v2003 = vadd.f32 %v1925, %v1991
        %v2004 = vadd.f32 %v1926, %v1992
        %v2005 = vadd.f32 %v1927, %v1993
        %v2006 = vlaneseq
        %v2007 = vshrl.u32 %v2006, 7
        %v2008 = vsub.s32 2, %v2007
        %v2009 = vrot.slane %v961, %v2008
        %v2010 = vlaneseq
        %v2011 = vshrl.u32 %v2010, 7
        %v2012 = vsub.s32 6, %v2011
        %v2013 = vrot.slane %v961, %v2012
        %v2014 = vlaneseq
        %v2015 = vshrl.u32 %v2014, 7
        %v2016 = vsub.s32 2, %v2015
        %v2017 = vrot.slane %v962, %v2016
        %v2018 = vlaneseq
        %v2019 = vshrl.u32 %v2018, 7
        %v2020 = vsub.s32 6, %v2019
        %v2021 = vrot.slane %v962, %v2020
        %v2022 = vlaneseq
        %v2023 = vshrl.u32 %v2022, 7
        %v2024 = vsub.s32 2, %v2023
        %v2025 = vrot.slane %v963, %v2024
        %v2026 = vlaneseq
        %v2027 = vshrl.u32 %v2026, 7
        %v2028 = vsub.s32 6, %v2027
        %v2029 = vrot.slane %v963, %v2028
        %v2036 = vlaneseq
        %v2037 = vshrl.u32 %v2036, 7
        %v2038 = vsub.s32 2, %v2037
        %v2039 = vrot.slane %v2009, %v2038
        %v2040 = vlaneseq
        %v2041 = vshrl.u32 %v2040, 7
        %v2042 = vsub.s32 2, %v2041
        %v2043 = vrot.slane %v2013, %v2042
        %v2044 = vlaneseq
        %v2045 = vshrl.u32 %v2044, 7
        %v2046 = vsub.s32 2, %v2045
        %v2047 = vrot.slane %v2017, %v2046
        %v2048 = vlaneseq
        %v2049 = vshrl.u32 %v2048, 7
        %v2050 = vsub.s32 2, %v2049
        %v2051 = vrot.slane %v2021, %v2050
        %v2052 = vlaneseq
        %v2053 = vshrl.u32 %v2052, 7
        %v2054 = vsub.s32 2, %v2053
        %v2055 = vrot.slane %v2025, %v2054
        %v2056 = vlaneseq
        %v2057 = vshrl.u32 %v2056, 7
        %v2058 = vsub.s32 2, %v2057
        %v2059 = vrot.slane %v2029, %v2058
        %v2060 = vmul.f32 %v1847, %v2039
        %v2061 = vmul.f32 %v1848, %v2043
        %v2062 = vmul.f32 %v1849, %v2047
        %v2063 = vmul.f32 %v1850, %v2051
        %v2064 = vmul.f32 %v1851, %v2055
        %v2065 = vmul.f32 %v1852, %v2059
        %v2066 = vmul.f32 %v1853, %v2039
        %v2067 = vmul.f32 %v1854, %v2043
        %v2068 = vmul.f32 %v1855, %v2047
        %v2069 = vmul.f32 %v1856, %v2051
        %v2070 = vmul.f32 %v1857, %v2055
        %v2071 = vmul.f32 %v1858, %v2059
        %v2072 = vadd.f32 %v1994, %v2060
        %v2073 = vadd.f32 %v1995, %v2061
        %v2074 = vadd.f32 %v1996, %v2062
        %v2075 = vadd.f32 %v1997, %v2063
        %v2076 = vadd.f32 %v1998, %v2064
        %v2077 = vadd.f32 %v1999, %v2065
        %v2078 = vadd.f32 %v2000, %v2066
        %v2079 = vadd.f32 %v2001, %v2067
        %v2080 = vadd.f32 %v2002, %v2068
        %v2081 = vadd.f32 %v2003, %v2069
        %v2082 = vadd.f32 %v2004, %v2070
        %v2083 = vadd.f32 %v2005, %v2071
        %v2084 = vld [vmem:[%s13] sm:$0x3f]
        %v2086 = vlaneseq
        %v2087 = vshrl.u32 %v2086, 7
        %v2088 = vsub.s32 0, %v2087
        %v2089 = vrot.slane %v2084, %v2088
        %v2090 = vlaneseq
        %v2091 = vshrl.u32 %v2090, 7
        %v2092 = vsub.s32 1, %v2091
        %v2093 = vrot.slane %v2084, %v2092
        %v2094 = vlaneseq
        %v2095 = vshrl.u32 %v2094, 7
        %v2096 = vsub.s32 2, %v2095
        %v2097 = vrot.slane %v2084, %v2096
        %v2098 = vlaneseq
        %v2099 = vshrl.u32 %v2098, 7
        %v2100 = vsub.s32 3, %v2099
        %v2101 = vrot.slane %v2084, %v2100
        %v2102 = vlaneseq
        %v2103 = vshrl.u32 %v2102, 7
        %v2104 = vsub.s32 4, %v2103
        %v2105 = vrot.slane %v2084, %v2104
        %v2106 = vlaneseq
        %v2107 = vshrl.u32 %v2106, 7
        %v2108 = vsub.s32 5, %v2107
        %v2109 = vrot.slane %v2084, %v2108
        %v2116 = vadd.f32 %v2072, %v2089
        %v2117 = vadd.f32 %v2073, %v2093
        %v2118 = vadd.f32 %v2074, %v2097
        %v2119 = vadd.f32 %v2075, %v2101
        %v2120 = vadd.f32 %v2076, %v2105
        %v2121 = vadd.f32 %v2077, %v2109
        %v2122 = vadd.f32 %v2078, %v2089
        %v2123 = vadd.f32 %v2079, %v2093
        %v2124 = vadd.f32 %v2080, %v2097
        %v2125 = vadd.f32 %v2081, %v2101
        %v2126 = vadd.f32 %v2082, %v2105
        %v2127 = vadd.f32 %v2083, %v2109
        %v2128 = vxor.u32 %v2119, 2147483648
        %v2129 = vxor.u32 %v2120, 2147483648
        %v2130 = vxor.u32 %v2121, 2147483648
        %v2131 = vxor.u32 %v2125, 2147483648
        %v2132 = vxor.u32 %v2126, 2147483648
        %v2133 = vxor.u32 %v2127, 2147483648
        %v2134 = vmul.f32 %v2128, 1.442695
        %v2135 = vpow.pop %v2134
        %v2136 = vmul.f32 %v2129, 1.442695
        %v2137 = vpow.pop %v2136
        %v2138 = vmul.f32 %v2130, 1.442695
        %v2139 = vpow.pop %v2138
        %v2140 = vmul.f32 %v2131, 1.442695
        %v2141 = vpow.pop %v2140
        %v2142 = vmul.f32 %v2132, 1.442695
        %v2143 = vpow.pop %v2142
        %v2144 = vmul.f32 %v2133, 1.442695
        %v2145 = vpow.pop %v2144
        %v2146 = vadd.f32 %v2135, 1.0
        %v2147 = vadd.f32 %v2137, 1.0
        %v2148 = vadd.f32 %v2139, 1.0
        %v2149 = vadd.f32 %v2141, 1.0
        %v2150 = vadd.f32 %v2143, 1.0
        %v2151 = vadd.f32 %v2145, 1.0
        %v2152 = vrcp.pop %v2146
        %v2153 = vmul.f32 1.0, %v2152
        %v2154 = vrcp.pop %v2147
        %v2155 = vmul.f32 1.0, %v2154
        %v2156 = vrcp.pop %v2148
        %v2157 = vmul.f32 1.0, %v2156
        %v2158 = vrcp.pop %v2149
        %v2159 = vmul.f32 1.0, %v2158
        %v2160 = vrcp.pop %v2150
        %v2161 = vmul.f32 1.0, %v2160
        %v2162 = vrcp.pop %v2151
        %v2163 = vmul.f32 1.0, %v2162
        %v2164 = vmul.f32 %v2116, %v2153
        %v2165 = vmul.f32 %v2117, %v2155
        %v2166 = vmul.f32 %v2118, %v2157
        %v2167 = vmul.f32 %v2122, %v2159
        %v2168 = vmul.f32 %v2123, %v2161
        %v2169 = vmul.f32 %v2124, %v2163
        %v2170 = vld [vmem:[%s14] sm:$0xff]
        %v2171 = vld [vmem:[%s14 + $0x8] sm:$0xff]
        %v2172 = vld [vmem:[%s14 + $0x10] sm:$0xff]
        %v2173 = vld [vmem:[%s14 + $0x18] sm:$0xff]
        %v2174 = vld [vmem:[%s14 + $0x20] sm:$0xff]
        %v2175 = vld [vmem:[%s14 + $0x28] sm:$0xff]
        %v2176 = vld [vmem:[%s14 + $0x30] sm:$0xff]
        %v2177 = vld [vmem:[%s14 + $0x38] sm:$0xff]
        %v2178 = vld [vmem:[%s14 + $0x40] sm:$0xff]
        %v2179 = vld [vmem:[%s14 + $0x48] sm:$0xff]
        %v2180 = vld [vmem:[%s14 + $0x50] sm:$0xff]
        %v2181 = vld [vmem:[%s14 + $0x58] sm:$0xff]
        %v2182 = vld [vmem:[%s14 + $0x60] sm:$0xff]
        %v2183 = vld [vmem:[%s14 + $0x68] sm:$0xff]
        %v2184 = vld [vmem:[%s14 + $0x70] sm:$0xff]
        %v2185 = vld [vmem:[%s14 + $0x78] sm:$0xff]
        %v2186 = vld [vmem:[%s14 + $0x80] sm:$0xff]
        %v2187 = vld [vmem:[%s14 + $0x88] sm:$0xff]
        %v2188 = vld [vmem:[%s14 + $0x90] sm:$0xff]
        %v2189 = vld [vmem:[%s14 + $0x98] sm:$0xff]
        %v2190 = vld [vmem:[%s14 + $0xa0] sm:$0xff]
        %v2191 = vld [vmem:[%s14 + $0xa8] sm:$0xff]
        %v2192 = vld [vmem:[%s14 + $0xb0] sm:$0xff]
        %v2193 = vld [vmem:[%s14 + $0xb8] sm:$0xff]
        %v2194 = vld [vmem:[%s14 + $0xc0] sm:$0xff]
        %v2195 = vld [vmem:[%s14 + $0xc8] sm:$0xff]
        %v2196 = vld [vmem:[%s14 + $0xd0] sm:$0xff]
        %v2197 = vld [vmem:[%s14 + $0xd8] sm:$0xff]
        %v2198 = vld [vmem:[%s14 + $0xe0] sm:$0xff]
        %v2199 = vld [vmem:[%s14 + $0xe8] sm:$0xff]
        %v2200 = vld [vmem:[%s14 + $0xf0] sm:$0xff]
        %v2201 = vld [vmem:[%s14 + $0xf8] sm:$0xff]
        %v2202 = vld [vmem:[%s14 + $0x100] sm:$0xff]
        %v2203 = vld [vmem:[%s14 + $0x108] sm:$0xff]
        %v2204 = vld [vmem:[%s14 + $0x110] sm:$0xff]
        %v2205 = vld [vmem:[%s14 + $0x118] sm:$0xff]
        %v2206 = vld [vmem:[%s14 + $0x120] sm:$0xff]
        %v2207 = vld [vmem:[%s14 + $0x128] sm:$0xff]
        %v2208 = vld [vmem:[%s14 + $0x130] sm:$0xff]
        %v2209 = vld [vmem:[%s14 + $0x138] sm:$0xff]
        %v2210 = vld [vmem:[%s14 + $0x140] sm:$0xff]
        %v2211 = vld [vmem:[%s14 + $0x148] sm:$0xff]
        %v2212 = vld [vmem:[%s14 + $0x150] sm:$0xff]
        %v2213 = vld [vmem:[%s14 + $0x158] sm:$0xff]
        %v2214 = vld [vmem:[%s14 + $0x160] sm:$0xff]
        %v2215 = vld [vmem:[%s14 + $0x168] sm:$0xff]
        %v2216 = vld [vmem:[%s14 + $0x170] sm:$0xff]
        %v2217 = vld [vmem:[%s14 + $0x178] sm:$0xff]
        %v2218 = vld [vmem:[%s15] sm:$0x1]
        %v2220 = vlaneseq
        %v2221 = vshrl.u32 %v2220, 7
        %v2222 = vsub.s32 0, %v2221
        %v2223 = vrot.slane %v2218, %v2222
        %2225 = vmatprep.subr.mxu0 0.0
        %2226 = vmatpush1.msra.mxu0 %v2185
        %2227 = vmatprep.subr.mxu0 0.0
        %2228 = vmatpush1.msra.mxu0 %v2184
        %2229 = vmatprep.subr.mxu0 0.0
        %2230 = vmatpush1.msra.mxu0 %v2183
        %2231 = vmatprep.subr.mxu0 0.0
        %2232 = vmatpush1.msra.mxu0 %v2182
        %2233 = vmatprep.subr.mxu0 0.0
        %2234 = vmatpush1.msra.mxu0 %v2181
        %2235 = vmatprep.subr.mxu0 0.0
        %2236 = vmatpush1.msra.mxu0 %v2180
        %2237 = vmatprep.subr.mxu0 0.0
        %2238 = vmatpush1.msra.mxu0 %v2179
        %2239 = vmatprep.subr.mxu0 0.0
        %2240 = vmatpush1.msra.mxu0 %v2178
        %2241 = vmatprep.subr.mxu0 0.0
        %2242 = vmatpush1.msra.mxu0 %v2177
        %2243 = vmatprep.subr.mxu0 0.0
        %2244 = vmatpush1.msra.mxu0 %v2176
        %2245 = vmatprep.subr.mxu0 0.0
        %2246 = vmatpush1.msra.mxu0 %v2175
        %2247 = vmatprep.subr.mxu0 0.0
        %2248 = vmatpush1.msra.mxu0 %v2174
        %2249 = vmatprep.subr.mxu0 0.0
        %2250 = vmatpush1.msra.mxu0 %v2173
        %2251 = vmatprep.subr.mxu0 0.0
        %2252 = vmatpush1.msra.mxu0 %v2172
        %2253 = vmatprep.subr.mxu0 0.0
        %2254 = vmatpush1.msra.mxu0 %v2171
        %2255 = vmatprep.subr.mxu0 0.0
        %2256 = vmatpush1.msra.mxu0 %v2170
        %2257 = vmatprep.subr.mxu0 0.0
        %2258 = vmatpush2.msra.mxu0 %v2201
        %2259 = vmatprep.subr.mxu0 0.0
        %2260 = vmatpush2.msra.mxu0 %v2200
        %2261 = vmatprep.subr.mxu0 0.0
        %2262 = vmatpush2.msra.mxu0 %v2199
        %2263 = vmatprep.subr.mxu0 0.0
        %2264 = vmatpush2.msra.mxu0 %v2198
        %2265 = vmatprep.subr.mxu0 0.0
        %2266 = vmatpush2.msra.mxu0 %v2197
        %2267 = vmatprep.subr.mxu0 0.0
        %2268 = vmatpush2.msra.mxu0 %v2196
        %2269 = vmatprep.subr.mxu0 0.0
        %2270 = vmatpush2.msra.mxu0 %v2195
        %2271 = vmatprep.subr.mxu0 0.0
        %2272 = vmatpush2.msra.mxu0 %v2194
        %2273 = vmatprep.subr.mxu0 0.0
        %2274 = vmatpush2.msra.mxu0 %v2193
        %2275 = vmatprep.subr.mxu0 0.0
        %2276 = vmatpush2.msra.mxu0 %v2192
        %2277 = vmatprep.subr.mxu0 0.0
        %2278 = vmatpush2.msra.mxu0 %v2191
        %2279 = vmatprep.subr.mxu0 0.0
        %2280 = vmatpush2.msra.mxu0 %v2190
        %2281 = vmatprep.subr.mxu0 0.0
        %2282 = vmatpush2.msra.mxu0 %v2189
        %2283 = vmatprep.subr.mxu0 0.0
        %2284 = vmatpush2.msra.mxu0 %v2188
        %2285 = vmatprep.subr.mxu0 0.0
        %2286 = vmatpush2.msra.mxu0 %v2187
        %2287 = vmatprep.subr.mxu0 0.0
        %2288 = vmatpush2.msra.mxu0 %v2186
        %2289 = vmatprep.mubr.f32.mxu0 %v2165
        %2290 = vmatmul.mubr.f32.gmra.mxu0 %v2164
        %v2291 = vpop.f32.mrf.mxu0
        %v2292 = vadd.f32 %v2223, %v2291
        %v2293 = vpop.f32.mrf.mxu0
        %2294 = vmatprep.mubr.f32.mxu0 %v2168
        %2295 = vmatmul.mubr.f32.gmra.mxu0 %v2167
        %v2296 = vpop.f32.mrf.mxu0
        %v2297 = vadd.f32 %v2223, %v2296
        %v2298 = vpop.f32.mrf.mxu0
        %2299 = vdwg.mxu0
        %2300 = vmatprep.subr.mxu0 0.0
        %2301 = vmatpush1.msra.mxu0 %v2217
        %2302 = vmatprep.subr.mxu0 0.0
        %2303 = vmatpush1.msra.mxu0 %v2216
        %2304 = vmatprep.subr.mxu0 0.0
        %2305 = vmatpush1.msra.mxu0 %v2215
        %2306 = vmatprep.subr.mxu0 0.0
        %2307 = vmatpush1.msra.mxu0 %v2214
        %2308 = vmatprep.subr.mxu0 0.0
        %2309 = vmatpush1.msra.mxu0 %v2213
        %2310 = vmatprep.subr.mxu0 0.0
        %2311 = vmatpush1.msra.mxu0 %v2212
        %2312 = vmatprep.subr.mxu0 0.0
        %2313 = vmatpush1.msra.mxu0 %v2211
        %2314 = vmatprep.subr.mxu0 0.0
        %2315 = vmatpush1.msra.mxu0 %v2210
        %2316 = vmatprep.subr.mxu0 0.0
        %2317 = vmatpush1.msra.mxu0 %v2209
        %2318 = vmatprep.subr.mxu0 0.0
        %2319 = vmatpush1.msra.mxu0 %v2208
        %2320 = vmatprep.subr.mxu0 0.0
        %2321 = vmatpush1.msra.mxu0 %v2207
        %2322 = vmatprep.subr.mxu0 0.0
        %2323 = vmatpush1.msra.mxu0 %v2206
        %2324 = vmatprep.subr.mxu0 0.0
        %2325 = vmatpush1.msra.mxu0 %v2205
        %2326 = vmatprep.subr.mxu0 0.0
        %2327 = vmatpush1.msra.mxu0 %v2204
        %2328 = vmatprep.subr.mxu0 0.0
        %2329 = vmatpush1.msra.mxu0 %v2203
        %2330 = vmatprep.subr.mxu0 0.0
        %2331 = vmatpush1.msra.mxu0 %v2202
        %2332 = vmatprep.subr.mxu0 0.0
        %2333 = vmatpush2.msra.mxu0 0.0
        %2334 = vmatprep.subr.mxu0 0.0
        %2335 = vmatpush2.msra.mxu0 0.0
        %2336 = vmatprep.subr.mxu0 0.0
        %2337 = vmatpush2.msra.mxu0 0.0
        %2338 = vmatprep.subr.mxu0 0.0
        %2339 = vmatpush2.msra.mxu0 0.0
        %2340 = vmatprep.subr.mxu0 0.0
        %2341 = vmatpush2.msra.mxu0 0.0
        %2342 = vmatprep.subr.mxu0 0.0
        %2343 = vmatpush2.msra.mxu0 0.0
        %2344 = vmatprep.subr.mxu0 0.0
        %2345 = vmatpush2.msra.mxu0 0.0
        %2346 = vmatprep.subr.mxu0 0.0
        %2347 = vmatpush2.msra.mxu0 0.0
        %2348 = vmatprep.subr.mxu0 0.0
        %2349 = vmatpush2.msra.mxu0 0.0
        %2350 = vmatprep.subr.mxu0 0.0
        %2351 = vmatpush2.msra.mxu0 0.0
        %2352 = vmatprep.subr.mxu0 0.0
        %2353 = vmatpush2.msra.mxu0 0.0
        %2354 = vmatprep.subr.mxu0 0.0
        %2355 = vmatpush2.msra.mxu0 0.0
        %2356 = vmatprep.subr.mxu0 0.0
        %2357 = vmatpush2.msra.mxu0 0.0
        %2358 = vmatprep.subr.mxu0 0.0
        %2359 = vmatpush2.msra.mxu0 0.0
        %2360 = vmatprep.subr.mxu0 0.0
        %2361 = vmatpush2.msra.mxu0 0.0
        %2362 = vmatprep.subr.mxu0 0.0
        %2363 = vmatpush2.msra.mxu0 0.0
        %2364 = vmatprep.mubr.f32.mxu0 0.0
        %2365 = vmatmul.mubr.f32.gmra.mxu0 %v2166
        %v2366 = vpop.f32.mrf.mxu0
        %v2367 = vadd.f32 %v2292, %v2366
        %v2368 = vpop.f32.mrf.mxu0
        %2369 = vmatprep.mubr.f32.mxu0 0.0
        %2370 = vmatmul.mubr.f32.gmra.mxu0 %v2169
        %v2371 = vpop.f32.mrf.mxu0
        %v2372 = vadd.f32 %v2297, %v2371
        %v2373 = vpop.f32.mrf.mxu0
        %2374 = vdwg.mxu0
        %v2376 = vlaneseq
        %v2377 = vshrl.u32 %v2376, 7
        %v2378 = vsub.s32 0, %v2377
        %v2379 = vrot.slane %v964, %v2378
        %v2381 = vmul.f32 %v2367, %v2379
        %v2382 = vmul.f32 %v2372, %v2379
        %v2383 = vadd.f32 %v1424, %v2381
        %v2384 = vadd.f32 %v1425, %v2382
        %2385 = vst [vmem:[%s590] sm:$0xff] %v2383
        %2386 = vst [vmem:[%s590 + $0x8] sm:$0xff] %v2384
        %v2387 = vmul.f32 %v827, %v817
        %v2388 = vmul.f32 %v833, %v823
        %2389 = vmatprep.subr.mxu0 0.0
        %2390 = vmatpush1.msra.mxu0 %v610
        %2391 = vmatprep.subr.mxu0 0.0
        %2392 = vmatpush1.msra.mxu0 %v609
        %2393 = vmatprep.subr.mxu0 0.0
        %2394 = vmatpush1.msra.mxu0 %v608
        %2395 = vmatprep.subr.mxu0 0.0
        %2396 = vmatpush1.msra.mxu0 %v607
        %2397 = vmatprep.subr.mxu0 0.0
        %2398 = vmatpush1.msra.mxu0 %v606
        %2399 = vmatprep.subr.mxu0 0.0
        %2400 = vmatpush1.msra.mxu0 %v605
        %2401 = vmatprep.subr.mxu0 0.0
        %2402 = vmatpush1.msra.mxu0 %v604
        %2403 = vmatprep.subr.mxu0 0.0
        %2404 = vmatpush1.msra.mxu0 %v603
        %2405 = vmatprep.subr.mxu0 0.0
        %2406 = vmatpush1.msra.mxu0 %v602
        %2407 = vmatprep.subr.mxu0 0.0
        %2408 = vmatpush1.msra.mxu0 %v601
        %2409 = vmatprep.subr.mxu0 0.0
        %2410 = vmatpush1.msra.mxu0 %v600
        %2411 = vmatprep.subr.mxu0 0.0
        %2412 = vmatpush1.msra.mxu0 %v599
        %2413 = vmatprep.subr.mxu0 0.0
        %2414 = vmatpush1.msra.mxu0 %v598
        %2415 = vmatprep.subr.mxu0 0.0
        %2416 = vmatpush1.msra.mxu0 %v597
        %2417 = vmatprep.subr.mxu0 0.0
        %2418 = vmatpush1.msra.mxu0 %v596
        %2419 = vmatprep.subr.mxu0 0.0
        %2420 = vmatpush1.msra.mxu0 %v595
        %2421 = vmatprep.subr.mxu0 0.0
        %2422 = vmatpush2.msra.mxu0 0.0
        %2423 = vmatprep.subr.mxu0 0.0
        %2424 = vmatpush2.msra.mxu0 0.0
        %2425 = vmatprep.subr.mxu0 0.0
        %2426 = vmatpush2.msra.mxu0 0.0
        %2427 = vmatprep.subr.mxu0 0.0
        %2428 = vmatpush2.msra.mxu0 0.0
        %2429 = vmatprep.subr.mxu0 0.0
        %2430 = vmatpush2.msra.mxu0 0.0
        %2431 = vmatprep.subr.mxu0 0.0
        %2432 = vmatpush2.msra.mxu0 0.0
        %2433 = vmatprep.subr.mxu0 0.0
        %2434 = vmatpush2.msra.mxu0 0.0
        %2435 = vmatprep.subr.mxu0 0.0
        %2436 = vmatpush2.msra.mxu0 0.0
        %2437 = vmatprep.subr.mxu0 0.0
        %2438 = vmatpush2.msra.mxu0 0.0
        %2439 = vmatprep.subr.mxu0 0.0
        %2440 = vmatpush2.msra.mxu0 0.0
        %2441 = vmatprep.subr.mxu0 0.0
        %2442 = vmatpush2.msra.mxu0 0.0
        %2443 = vmatprep.subr.mxu0 0.0
        %2444 = vmatpush2.msra.mxu0 0.0
        %2445 = vmatprep.subr.mxu0 0.0
        %2446 = vmatpush2.msra.mxu0 0.0
        %2447 = vmatprep.subr.mxu0 0.0
        %2448 = vmatpush2.msra.mxu0 0.0
        %2449 = vmatprep.subr.mxu0 0.0
        %2450 = vmatpush2.msra.mxu0 0.0
        %2451 = vmatprep.subr.mxu0 0.0
        %2452 = vmatpush2.msra.mxu0 0.0
        %2453 = vmatprep.mubr.f32.mxu0 0.0
        %2454 = vmatmul.mubr.f32.gmra.mxu0 %v2387
        %v2455 = vpop.f32.mrf.mxu0
        %v2456 = vadd.f32 0.0, %v2455
        %v2457 = vpop.f32.mrf.mxu0
        %2458 = vmatprep.mubr.f32.mxu0 0.0
        %2459 = vmatmul.mubr.f32.gmra.mxu0 %v2388
        %v2460 = vpop.f32.mrf.mxu0
        %v2461 = vadd.f32 0.0, %v2460
        %v2462 = vpop.f32.mrf.mxu0
        %2463 = vdwg.mxu0
        %v2464 = vmul.f32 %v2456, 0.17677669
        %v2465 = vmul.f32 %v2461, 0.17677669
        %v2466 = vmul.f32 %v827, %v829
        %v2467 = vmul.f32 %v833, %v835
        %2468 = vmatprep.subr.mxu0 0.0
        %2469 = vmatpush1.msra.mxu0 %v610
        %2470 = vmatprep.subr.mxu0 0.0
        %2471 = vmatpush1.msra.mxu0 %v609
        %2472 = vmatprep.subr.mxu0 0.0
        %2473 = vmatpush1.msra.mxu0 %v608
        %2474 = vmatprep.subr.mxu0 0.0
        %2475 = vmatpush1.msra.mxu0 %v607
        %2476 = vmatprep.subr.mxu0 0.0
        %2477 = vmatpush1.msra.mxu0 %v606
        %2478 = vmatprep.subr.mxu0 0.0
        %2479 = vmatpush1.msra.mxu0 %v605
        %2480 = vmatprep.subr.mxu0 0.0
        %2481 = vmatpush1.msra.mxu0 %v604
        %2482 = vmatprep.subr.mxu0 0.0
        %2483 = vmatpush1.msra.mxu0 %v603
        %2484 = vmatprep.subr.mxu0 0.0
        %2485 = vmatpush1.msra.mxu0 %v602
        %2486 = vmatprep.subr.mxu0 0.0
        %2487 = vmatpush1.msra.mxu0 %v601
        %2488 = vmatprep.subr.mxu0 0.0
        %2489 = vmatpush1.msra.mxu0 %v600
        %2490 = vmatprep.subr.mxu0 0.0
        %2491 = vmatpush1.msra.mxu0 %v599
        %2492 = vmatprep.subr.mxu0 0.0
        %2493 = vmatpush1.msra.mxu0 %v598
        %2494 = vmatprep.subr.mxu0 0.0
        %2495 = vmatpush1.msra.mxu0 %v597
        %2496 = vmatprep.subr.mxu0 0.0
        %2497 = vmatpush1.msra.mxu0 %v596
        %2498 = vmatprep.subr.mxu0 0.0
        %2499 = vmatpush1.msra.mxu0 %v595
        %2500 = vmatprep.subr.mxu0 0.0
        %2501 = vmatpush2.msra.mxu0 0.0
        %2502 = vmatprep.subr.mxu0 0.0
        %2503 = vmatpush2.msra.mxu0 0.0
        %2504 = vmatprep.subr.mxu0 0.0
        %2505 = vmatpush2.msra.mxu0 0.0
        %2506 = vmatprep.subr.mxu0 0.0
        %2507 = vmatpush2.msra.mxu0 0.0
        %2508 = vmatprep.subr.mxu0 0.0
        %2509 = vmatpush2.msra.mxu0 0.0
        %2510 = vmatprep.subr.mxu0 0.0
        %2511 = vmatpush2.msra.mxu0 0.0
        %2512 = vmatprep.subr.mxu0 0.0
        %2513 = vmatpush2.msra.mxu0 0.0
        %2514 = vmatprep.subr.mxu0 0.0
        %2515 = vmatpush2.msra.mxu0 0.0
        %2516 = vmatprep.subr.mxu0 0.0
        %2517 = vmatpush2.msra.mxu0 0.0
        %2518 = vmatprep.subr.mxu0 0.0
        %2519 = vmatpush2.msra.mxu0 0.0
        %2520 = vmatprep.subr.mxu0 0.0
        %2521 = vmatpush2.msra.mxu0 0.0
        %2522 = vmatprep.subr.mxu0 0.0
        %2523 = vmatpush2.msra.mxu0 0.0
        %2524 = vmatprep.subr.mxu0 0.0
        %2525 = vmatpush2.msra.mxu0 0.0
        %2526 = vmatprep.subr.mxu0 0.0
        %2527 = vmatpush2.msra.mxu0 0.0
        %2528 = vmatprep.subr.mxu0 0.0
        %2529 = vmatpush2.msra.mxu0 0.0
        %2530 = vmatprep.subr.mxu0 0.0
        %2531 = vmatpush2.msra.mxu0 0.0
        %2532 = vmatprep.mubr.f32.mxu0 0.0
        %2533 = vmatmul.mubr.f32.gmra.mxu0 %v2466
        %v2534 = vpop.f32.mrf.mxu0
        %v2535 = vadd.f32 0.0, %v2534
        %v2536 = vpop.f32.mrf.mxu0
        %2537 = vmatprep.mubr.f32.mxu0 0.0
        %2538 = vmatmul.mubr.f32.gmra.mxu0 %v2467
        %v2539 = vpop.f32.mrf.mxu0
        %v2540 = vadd.f32 0.0, %v2539
        %v2541 = vpop.f32.mrf.mxu0
        %2542 = vdwg.mxu0
        %v2543 = vmul.f32 %v2535, 0.17677669
        %v2544 = vmul.f32 %v2540, 0.17677669
        %v2545 = vmax.f32 %v2464, %v2543
        %v2546 = vmax.f32 %v2465, %v2544
        %v2547 = vsub.f32 %v2464, %v2545
        %v2548 = vsub.f32 %v2465, %v2546
        %v2549 = vmul.f32 %v2547, 1.442695
        %v2550 = vpow.pop %v2549
        %v2551 = vmul.f32 %v2548, 1.442695
        %v2552 = vpow.pop %v2551
        %v2553 = vsub.f32 %v2543, %v2545
        %v2554 = vsub.f32 %v2544, %v2546
        %v2555 = vmul.f32 %v2553, 1.442695
        %v2556 = vpow.pop %v2555
        %v2557 = vmul.f32 %v2554, 1.442695
        %v2558 = vpow.pop %v2557
        %v2559 = vadd.f32 %v2550, %v2556
        %v2560 = vadd.f32 %v2552, %v2558
        %v2561 = vrcp.pop %v2559
        %v2562 = vrcp.pop %v2560
        %v2563 = vmul.f32 %v2550, %v2561
        %v2564 = vmul.f32 %v2552, %v2562
        %v2566 = vsel %vm1143, %v2563, 0
        %v2569 = vsel %vm1143, %v2564, 0
        %2571 = vmatprep.subr.mxu0 0.0
        %2572 = vmatpush1.msra.mxu0 0.0
        %2573 = vmatprep.subr.mxu0 0.0
        %2574 = vmatpush1.msra.mxu0 0.0
        %2575 = vmatprep.subr.mxu0 0.0
        %2576 = vmatpush1.msra.mxu0 0.0
        %2577 = vmatprep.subr.mxu0 0.0
        %2578 = vmatpush1.msra.mxu0 0.0
        %2579 = vmatprep.subr.mxu0 0.0
        %2580 = vmatpush1.msra.mxu0 0.0
        %2581 = vmatprep.subr.mxu0 0.0
        %2582 = vmatpush1.msra.mxu0 0.0
        %2583 = vmatprep.subr.mxu0 0.0
        %2584 = vmatpush1.msra.mxu0 0.0
        %2585 = vmatprep.subr.mxu0 0.0
        %2586 = vmatpush1.msra.mxu0 0.0
        %2587 = vmatprep.subr.mxu0 0.0
        %2588 = vmatpush1.msra.mxu0 0.0
        %2589 = vmatprep.subr.mxu0 0.0
        %2590 = vmatpush1.msra.mxu0 0.0
        %2591 = vmatprep.subr.mxu0 0.0
        %2592 = vmatpush1.msra.mxu0 0.0
        %2593 = vmatprep.subr.mxu0 0.0
        %2594 = vmatpush1.msra.mxu0 0.0
        %2595 = vmatprep.subr.mxu0 0.0
        %2596 = vmatpush1.msra.mxu0 0.0
        %2597 = vmatprep.subr.mxu0 0.0
        %2598 = vmatpush1.msra.mxu0 0.0
        %2599 = vmatprep.subr.mxu0 0.0
        %2600 = vmatpush1.msra.mxu0 0.0
        %2601 = vmatprep.subr.mxu0 0.0
        %2602 = vmatpush1.msra.mxu0 %v1152
        %2603 = vmatprep.subr.mxu0 0.0
        %2604 = vmatpush2.msra.mxu0 0.0
        %2605 = vmatprep.subr.mxu0 0.0
        %2606 = vmatpush2.msra.mxu0 0.0
        %2607 = vmatprep.subr.mxu0 0.0
        %2608 = vmatpush2.msra.mxu0 0.0
        %2609 = vmatprep.subr.mxu0 0.0
        %2610 = vmatpush2.msra.mxu0 0.0
        %2611 = vmatprep.subr.mxu0 0.0
        %2612 = vmatpush2.msra.mxu0 0.0
        %2613 = vmatprep.subr.mxu0 0.0
        %2614 = vmatpush2.msra.mxu0 0.0
        %2615 = vmatprep.subr.mxu0 0.0
        %2616 = vmatpush2.msra.mxu0 0.0
        %2617 = vmatprep.subr.mxu0 0.0
        %2618 = vmatpush2.msra.mxu0 0.0
        %2619 = vmatprep.subr.mxu0 0.0
        %2620 = vmatpush2.msra.mxu0 0.0
        %2621 = vmatprep.subr.mxu0 0.0
        %2622 = vmatpush2.msra.mxu0 0.0
        %2623 = vmatprep.subr.mxu0 0.0
        %2624 = vmatpush2.msra.mxu0 0.0
        %2625 = vmatprep.subr.mxu0 0.0
        %2626 = vmatpush2.msra.mxu0 0.0
        %2627 = vmatprep.subr.mxu0 0.0
        %2628 = vmatpush2.msra.mxu0 0.0
        %2629 = vmatprep.subr.mxu0 0.0
        %2630 = vmatpush2.msra.mxu0 0.0
        %2631 = vmatprep.subr.mxu0 0.0
        %2632 = vmatpush2.msra.mxu0 0.0
        %2633 = vmatprep.subr.mxu0 0.0
        %2634 = vmatpush2.msra.mxu0 0.0
        %2635 = vmatprep.mubr.f32.mxu0 0.0
        %2636 = vmatmul.mubr.f32.gmra.mxu0 %v2566
        %v2637 = vpop.f32.mrf.mxu0
        %v2638 = vadd.f32 0.0, %v2637
        %v2639 = vpop.f32.mrf.mxu0
        %2640 = vmatprep.mubr.f32.mxu0 0.0
        %2641 = vmatmul.mubr.f32.gmra.mxu0 %v2569
        %v2642 = vpop.f32.mrf.mxu0
        %v2643 = vadd.f32 0.0, %v2642
        %v2644 = vpop.f32.mrf.mxu0
        %2645 = vdwg.mxu0
        %v2646 = vmul.f32 %v2638, %v904
        %v2647 = vmul.f32 %v2643, %v909
        %v2648 = vmul.f32 %v2556, %v2561
        %v2649 = vmul.f32 %v2558, %v2562
        %v2651 = vsel %vm1143, %v2648, 0
        %v2654 = vsel %vm1143, %v2649, 0
        %2656 = vmatprep.subr.mxu0 0.0
        %2657 = vmatpush1.msra.mxu0 0.0
        %2658 = vmatprep.subr.mxu0 0.0
        %2659 = vmatpush1.msra.mxu0 0.0
        %2660 = vmatprep.subr.mxu0 0.0
        %2661 = vmatpush1.msra.mxu0 0.0
        %2662 = vmatprep.subr.mxu0 0.0
        %2663 = vmatpush1.msra.mxu0 0.0
        %2664 = vmatprep.subr.mxu0 0.0
        %2665 = vmatpush1.msra.mxu0 0.0
        %2666 = vmatprep.subr.mxu0 0.0
        %2667 = vmatpush1.msra.mxu0 0.0
        %2668 = vmatprep.subr.mxu0 0.0
        %2669 = vmatpush1.msra.mxu0 0.0
        %2670 = vmatprep.subr.mxu0 0.0
        %2671 = vmatpush1.msra.mxu0 0.0
        %2672 = vmatprep.subr.mxu0 0.0
        %2673 = vmatpush1.msra.mxu0 0.0
        %2674 = vmatprep.subr.mxu0 0.0
        %2675 = vmatpush1.msra.mxu0 0.0
        %2676 = vmatprep.subr.mxu0 0.0
        %2677 = vmatpush1.msra.mxu0 0.0
        %2678 = vmatprep.subr.mxu0 0.0
        %2679 = vmatpush1.msra.mxu0 0.0
        %2680 = vmatprep.subr.mxu0 0.0
        %2681 = vmatpush1.msra.mxu0 0.0
        %2682 = vmatprep.subr.mxu0 0.0
        %2683 = vmatpush1.msra.mxu0 0.0
        %2684 = vmatprep.subr.mxu0 0.0
        %2685 = vmatpush1.msra.mxu0 0.0
        %2686 = vmatprep.subr.mxu0 0.0
        %2687 = vmatpush1.msra.mxu0 %v1152
        %2688 = vmatprep.subr.mxu0 0.0
        %2689 = vmatpush2.msra.mxu0 0.0
        %2690 = vmatprep.subr.mxu0 0.0
        %2691 = vmatpush2.msra.mxu0 0.0
        %2692 = vmatprep.subr.mxu0 0.0
        %2693 = vmatpush2.msra.mxu0 0.0
        %2694 = vmatprep.subr.mxu0 0.0
        %2695 = vmatpush2.msra.mxu0 0.0
        %2696 = vmatprep.subr.mxu0 0.0
        %2697 = vmatpush2.msra.mxu0 0.0
        %2698 = vmatprep.subr.mxu0 0.0
        %2699 = vmatpush2.msra.mxu0 0.0
        %2700 = vmatprep.subr.mxu0 0.0
        %2701 = vmatpush2.msra.mxu0 0.0
        %2702 = vmatprep.subr.mxu0 0.0
        %2703 = vmatpush2.msra.mxu0 0.0
        %2704 = vmatprep.subr.mxu0 0.0
        %2705 = vmatpush2.msra.mxu0 0.0
        %2706 = vmatprep.subr.mxu0 0.0
        %2707 = vmatpush2.msra.mxu0 0.0
        %2708 = vmatprep.subr.mxu0 0.0
        %2709 = vmatpush2.msra.mxu0 0.0
        %2710 = vmatprep.subr.mxu0 0.0
        %2711 = vmatpush2.msra.mxu0 0.0
        %2712 = vmatprep.subr.mxu0 0.0
        %2713 = vmatpush2.msra.mxu0 0.0
        %2714 = vmatprep.subr.mxu0 0.0
        %2715 = vmatpush2.msra.mxu0 0.0
        %2716 = vmatprep.subr.mxu0 0.0
        %2717 = vmatpush2.msra.mxu0 0.0
        %2718 = vmatprep.subr.mxu0 0.0
        %2719 = vmatpush2.msra.mxu0 0.0
        %2720 = vmatprep.mubr.f32.mxu0 0.0
        %2721 = vmatmul.mubr.f32.gmra.mxu0 %v2651
        %v2722 = vpop.f32.mrf.mxu0
        %v2723 = vadd.f32 0.0, %v2722
        %v2724 = vpop.f32.mrf.mxu0
        %2725 = vmatprep.mubr.f32.mxu0 0.0
        %2726 = vmatmul.mubr.f32.gmra.mxu0 %v2654
        %v2727 = vpop.f32.mrf.mxu0
        %v2728 = vadd.f32 0.0, %v2727
        %v2729 = vpop.f32.mrf.mxu0
        %2730 = vdwg.mxu0
        %v2731 = vmul.f32 %v2723, %v914
        %v2732 = vmul.f32 %v2728, %v919
        %v2733 = vadd.f32 %v2646, %v2731
        %v2734 = vadd.f32 %v2647, %v2732
        %v2735 = vld [vmem:[%s5] sm:$0xff]
        %v2736 = vld [vmem:[%s5 + $0x8] sm:$0xff]
        %v2737 = vld [vmem:[%s5 + $0x10] sm:$0xff]
        %v2738 = vld [vmem:[%s5 + $0x18] sm:$0xff]
        %v2739 = vld [vmem:[%s5 + $0x20] sm:$0xff]
        %v2740 = vld [vmem:[%s5 + $0x28] sm:$0xff]
        %v2741 = vld [vmem:[%s5 + $0x30] sm:$0xff]
        %v2742 = vld [vmem:[%s5 + $0x38] sm:$0xff]
        %v2743 = vld [vmem:[%s5 + $0x40] sm:$0xff]
        %v2744 = vld [vmem:[%s5 + $0x48] sm:$0xff]
        %v2745 = vld [vmem:[%s5 + $0x50] sm:$0xff]
        %v2746 = vld [vmem:[%s5 + $0x58] sm:$0xff]
        %v2747 = vld [vmem:[%s5 + $0x60] sm:$0xff]
        %v2748 = vld [vmem:[%s5 + $0x68] sm:$0xff]
        %v2749 = vld [vmem:[%s5 + $0x70] sm:$0xff]
        %v2750 = vld [vmem:[%s5 + $0x78] sm:$0xff]
        %v2751 = vld [vmem:[%s6] sm:$0x1]
        %v2753 = vlaneseq
        %v2754 = vshrl.u32 %v2753, 7
        %v2755 = vsub.s32 0, %v2754
        %v2756 = vrot.slane %v2751, %v2755
        %2758 = vmatprep.subr.mxu0 0.0
        %2759 = vmatpush1.msra.mxu0 %v2750
        %2760 = vmatprep.subr.mxu0 0.0
        %2761 = vmatpush1.msra.mxu0 %v2749
        %2762 = vmatprep.subr.mxu0 0.0
        %2763 = vmatpush1.msra.mxu0 %v2748
        %2764 = vmatprep.subr.mxu0 0.0
        %2765 = vmatpush1.msra.mxu0 %v2747
        %2766 = vmatprep.subr.mxu0 0.0
        %2767 = vmatpush1.msra.mxu0 %v2746
        %2768 = vmatprep.subr.mxu0 0.0
        %2769 = vmatpush1.msra.mxu0 %v2745
        %2770 = vmatprep.subr.mxu0 0.0
        %2771 = vmatpush1.msra.mxu0 %v2744
        %2772 = vmatprep.subr.mxu0 0.0
        %2773 = vmatpush1.msra.mxu0 %v2743
        %2774 = vmatprep.subr.mxu0 0.0
        %2775 = vmatpush1.msra.mxu0 %v2742
        %2776 = vmatprep.subr.mxu0 0.0
        %2777 = vmatpush1.msra.mxu0 %v2741
        %2778 = vmatprep.subr.mxu0 0.0
        %2779 = vmatpush1.msra.mxu0 %v2740
        %2780 = vmatprep.subr.mxu0 0.0
        %2781 = vmatpush1.msra.mxu0 %v2739
        %2782 = vmatprep.subr.mxu0 0.0
        %2783 = vmatpush1.msra.mxu0 %v2738
        %2784 = vmatprep.subr.mxu0 0.0
        %2785 = vmatpush1.msra.mxu0 %v2737
        %2786 = vmatprep.subr.mxu0 0.0
        %2787 = vmatpush1.msra.mxu0 %v2736
        %2788 = vmatprep.subr.mxu0 0.0
        %2789 = vmatpush1.msra.mxu0 %v2735
        %2790 = vmatprep.subr.mxu0 0.0
        %2791 = vmatpush2.msra.mxu0 0.0
        %2792 = vmatprep.subr.mxu0 0.0
        %2793 = vmatpush2.msra.mxu0 0.0
        %2794 = vmatprep.subr.mxu0 0.0
        %2795 = vmatpush2.msra.mxu0 0.0
        %2796 = vmatprep.subr.mxu0 0.0
        %2797 = vmatpush2.msra.mxu0 0.0
        %2798 = vmatprep.subr.mxu0 0.0
        %2799 = vmatpush2.msra.mxu0 0.0
        %2800 = vmatprep.subr.mxu0 0.0
        %2801 = vmatpush2.msra.mxu0 0.0
        %2802 = vmatprep.subr.mxu0 0.0
        %2803 = vmatpush2.msra.mxu0 0.0
        %2804 = vmatprep.subr.mxu0 0.0
        %2805 = vmatpush2.msra.mxu0 0.0
        %2806 = vmatprep.subr.mxu0 0.0
        %2807 = vmatpush2.msra.mxu0 0.0
        %2808 = vmatprep.subr.mxu0 0.0
        %2809 = vmatpush2.msra.mxu0 0.0
        %2810 = vmatprep.subr.mxu0 0.0
        %2811 = vmatpush2.msra.mxu0 0.0
        %2812 = vmatprep.subr.mxu0 0.0
        %2813 = vmatpush2.msra.mxu0 0.0
        %2814 = vmatprep.subr.mxu0 0.0
        %2815 = vmatpush2.msra.mxu0 0.0
        %2816 = vmatprep.subr.mxu0 0.0
        %2817 = vmatpush2.msra.mxu0 0.0
        %2818 = vmatprep.subr.mxu0 0.0
        %2819 = vmatpush2.msra.mxu0 0.0
        %2820 = vmatprep.subr.mxu0 0.0
        %2821 = vmatpush2.msra.mxu0 0.0
        %2822 = vmatprep.mubr.f32.mxu0 0.0
        %2823 = vmatmul.mubr.f32.gmra.mxu0 %v2733
        %v2824 = vpop.f32.mrf.mxu0
        %v2825 = vadd.f32 %v2756, %v2824
        %v2826 = vpop.f32.mrf.mxu0
        %2827 = vmatprep.mubr.f32.mxu0 0.0
        %2828 = vmatmul.mubr.f32.gmra.mxu0 %v2734
        %v2829 = vpop.f32.mrf.mxu0
        %v2830 = vadd.f32 %v2756, %v2829
        %v2831 = vpop.f32.mrf.mxu0
        %2832 = vdwg.mxu0
        %v2833 = vld [vmem:[%s654] sm:$0xff]
        %v2834 = vld [vmem:[%s654 + $0x8] sm:$0xff]
        %v2835 = vmul.f32 %v2825, %v1420
        %v2836 = vmul.f32 %v2830, %v1420
        %v2837 = vadd.f32 %v2833, %v2835
        %v2838 = vadd.f32 %v2834, %v2836
        %v2839 = vld [vmem:[%s10] sm:$0xff]
        %v2840 = vld [vmem:[%s10 + $0x8] sm:$0xff]
        %v2841 = vld [vmem:[%s10 + $0x10] sm:$0xff]
        %v2842 = vld [vmem:[%s10 + $0x18] sm:$0xff]
        %v2843 = vld [vmem:[%s10 + $0x20] sm:$0xff]
        %v2844 = vld [vmem:[%s10 + $0x28] sm:$0xff]
        %v2845 = vld [vmem:[%s10 + $0x30] sm:$0xff]
        %v2846 = vld [vmem:[%s10 + $0x38] sm:$0xff]
        %v2847 = vld [vmem:[%s10 + $0x40] sm:$0xff]
        %v2848 = vld [vmem:[%s10 + $0x48] sm:$0xff]
        %v2849 = vld [vmem:[%s10 + $0x50] sm:$0xff]
        %v2850 = vld [vmem:[%s10 + $0x58] sm:$0xff]
        %v2851 = vld [vmem:[%s10 + $0x60] sm:$0xff]
        %v2852 = vld [vmem:[%s10 + $0x68] sm:$0xff]
        %v2853 = vld [vmem:[%s10 + $0x70] sm:$0xff]
        %v2854 = vld [vmem:[%s10 + $0x78] sm:$0xff]
        %v2855 = vld [vmem:[%s10 + $0x80] sm:$0xff]
        %v2856 = vld [vmem:[%s10 + $0x88] sm:$0xff]
        %v2857 = vld [vmem:[%s10 + $0x90] sm:$0xff]
        %v2858 = vld [vmem:[%s10 + $0x98] sm:$0xff]
        %v2859 = vld [vmem:[%s10 + $0xa0] sm:$0xff]
        %v2860 = vld [vmem:[%s10 + $0xa8] sm:$0xff]
        %v2861 = vld [vmem:[%s10 + $0xb0] sm:$0xff]
        %v2862 = vld [vmem:[%s10 + $0xb8] sm:$0xff]
        %v2863 = vld [vmem:[%s10 + $0xc0] sm:$0xff]
        %v2864 = vld [vmem:[%s10 + $0xc8] sm:$0xff]
        %v2865 = vld [vmem:[%s10 + $0xd0] sm:$0xff]
        %v2866 = vld [vmem:[%s10 + $0xd8] sm:$0xff]
        %v2867 = vld [vmem:[%s10 + $0xe0] sm:$0xff]
        %v2868 = vld [vmem:[%s10 + $0xe8] sm:$0xff]
        %v2869 = vld [vmem:[%s10 + $0xf0] sm:$0xff]
        %v2870 = vld [vmem:[%s10 + $0xf8] sm:$0xff]
        %v2871 = vld [vmem:[%s10 + $0x100] sm:$0xff]
        %v2872 = vld [vmem:[%s10 + $0x108] sm:$0xff]
        %v2873 = vld [vmem:[%s10 + $0x110] sm:$0xff]
        %v2874 = vld [vmem:[%s10 + $0x118] sm:$0xff]
        %v2875 = vld [vmem:[%s10 + $0x120] sm:$0xff]
        %v2876 = vld [vmem:[%s10 + $0x128] sm:$0xff]
        %v2877 = vld [vmem:[%s10 + $0x130] sm:$0xff]
        %v2878 = vld [vmem:[%s10 + $0x138] sm:$0xff]
        %v2879 = vld [vmem:[%s10 + $0x140] sm:$0xff]
        %v2880 = vld [vmem:[%s10 + $0x148] sm:$0xff]
        %v2881 = vld [vmem:[%s10 + $0x150] sm:$0xff]
        %v2882 = vld [vmem:[%s10 + $0x158] sm:$0xff]
        %v2883 = vld [vmem:[%s10 + $0x160] sm:$0xff]
        %v2884 = vld [vmem:[%s10 + $0x168] sm:$0xff]
        %v2885 = vld [vmem:[%s10 + $0x170] sm:$0xff]
        %v2886 = vld [vmem:[%s10 + $0x178] sm:$0xff]
        %v2887 = vld [vmem:[%s10 + $0x180] sm:$0xff]
        %v2888 = vld [vmem:[%s10 + $0x188] sm:$0xff]
        %v2889 = vld [vmem:[%s10 + $0x190] sm:$0xff]
        %v2890 = vld [vmem:[%s10 + $0x198] sm:$0xff]
        %v2891 = vld [vmem:[%s10 + $0x1a0] sm:$0xff]
        %v2892 = vld [vmem:[%s10 + $0x1a8] sm:$0xff]
        %v2893 = vld [vmem:[%s10 + $0x1b0] sm:$0xff]
        %v2894 = vld [vmem:[%s10 + $0x1b8] sm:$0xff]
        %v2895 = vld [vmem:[%s10 + $0x1c0] sm:$0xff]
        %v2896 = vld [vmem:[%s10 + $0x1c8] sm:$0xff]
        %v2897 = vld [vmem:[%s10 + $0x1d0] sm:$0xff]
        %v2898 = vld [vmem:[%s10 + $0x1d8] sm:$0xff]
        %v2899 = vld [vmem:[%s10 + $0x1e0] sm:$0xff]
        %v2900 = vld [vmem:[%s10 + $0x1e8] sm:$0xff]
        %v2901 = vld [vmem:[%s10 + $0x1f0] sm:$0xff]
        %v2902 = vld [vmem:[%s10 + $0x1f8] sm:$0xff]
        %v2903 = vld [vmem:[%s10 + $0x200] sm:$0xff]
        %v2904 = vld [vmem:[%s10 + $0x208] sm:$0xff]
        %v2905 = vld [vmem:[%s10 + $0x210] sm:$0xff]
        %v2906 = vld [vmem:[%s10 + $0x218] sm:$0xff]
        %v2907 = vld [vmem:[%s10 + $0x220] sm:$0xff]
        %v2908 = vld [vmem:[%s10 + $0x228] sm:$0xff]
        %v2909 = vld [vmem:[%s10 + $0x230] sm:$0xff]
        %v2910 = vld [vmem:[%s10 + $0x238] sm:$0xff]
        %v2911 = vld [vmem:[%s10 + $0x240] sm:$0xff]
        %v2912 = vld [vmem:[%s10 + $0x248] sm:$0xff]
        %v2913 = vld [vmem:[%s10 + $0x250] sm:$0xff]
        %v2914 = vld [vmem:[%s10 + $0x258] sm:$0xff]
        %v2915 = vld [vmem:[%s10 + $0x260] sm:$0xff]
        %v2916 = vld [vmem:[%s10 + $0x268] sm:$0xff]
        %v2917 = vld [vmem:[%s10 + $0x270] sm:$0xff]
        %v2918 = vld [vmem:[%s10 + $0x278] sm:$0xff]
        %v2919 = vld [vmem:[%s10 + $0x280] sm:$0xff]
        %v2920 = vld [vmem:[%s10 + $0x288] sm:$0xff]
        %v2921 = vld [vmem:[%s10 + $0x290] sm:$0xff]
        %v2922 = vld [vmem:[%s10 + $0x298] sm:$0xff]
        %v2923 = vld [vmem:[%s10 + $0x2a0] sm:$0xff]
        %v2924 = vld [vmem:[%s10 + $0x2a8] sm:$0xff]
        %v2925 = vld [vmem:[%s10 + $0x2b0] sm:$0xff]
        %v2926 = vld [vmem:[%s10 + $0x2b8] sm:$0xff]
        %v2927 = vld [vmem:[%s10 + $0x2c0] sm:$0xff]
        %v2928 = vld [vmem:[%s10 + $0x2c8] sm:$0xff]
        %v2929 = vld [vmem:[%s10 + $0x2d0] sm:$0xff]
        %v2930 = vld [vmem:[%s10 + $0x2d8] sm:$0xff]
        %v2931 = vld [vmem:[%s10 + $0x2e0] sm:$0xff]
        %v2932 = vld [vmem:[%s10 + $0x2e8] sm:$0xff]
        %v2933 = vld [vmem:[%s10 + $0x2f0] sm:$0xff]
        %v2934 = vld [vmem:[%s10 + $0x2f8] sm:$0xff]
        %v2935 = vld [vmem:[%s11] sm:$0x3f]
        %v2937 = vlaneseq
        %v2938 = vshrl.u32 %v2937, 7
        %v2939 = vsub.s32 0, %v2938
        %v2940 = vrot.slane %v2935, %v2939
        %v2941 = vlaneseq
        %v2942 = vshrl.u32 %v2941, 7
        %v2943 = vsub.s32 1, %v2942
        %v2944 = vrot.slane %v2935, %v2943
        %v2945 = vlaneseq
        %v2946 = vshrl.u32 %v2945, 7
        %v2947 = vsub.s32 2, %v2946
        %v2948 = vrot.slane %v2935, %v2947
        %v2949 = vlaneseq
        %v2950 = vshrl.u32 %v2949, 7
        %v2951 = vsub.s32 3, %v2950
        %v2952 = vrot.slane %v2935, %v2951
        %v2953 = vlaneseq
        %v2954 = vshrl.u32 %v2953, 7
        %v2955 = vsub.s32 4, %v2954
        %v2956 = vrot.slane %v2935, %v2955
        %v2957 = vlaneseq
        %v2958 = vshrl.u32 %v2957, 7
        %v2959 = vsub.s32 5, %v2958
        %v2960 = vrot.slane %v2935, %v2959
        %2967 = vmatprep.subr.mxu0 %v2930
        %2968 = vmatpush1.msra.mxu0 %v2929
        %2969 = vmatprep.subr.mxu0 %v2924
        %2970 = vmatpush1.msra.mxu0 %v2923
        %2971 = vmatprep.subr.mxu0 %v2918
        %2972 = vmatpush1.msra.mxu0 %v2917
        %2973 = vmatprep.subr.mxu0 %v2912
        %2974 = vmatpush1.msra.mxu0 %v2911
        %2975 = vmatprep.subr.mxu0 %v2906
        %2976 = vmatpush1.msra.mxu0 %v2905
        %2977 = vmatprep.subr.mxu0 %v2900
        %2978 = vmatpush1.msra.mxu0 %v2899
        %2979 = vmatprep.subr.mxu0 %v2894
        %2980 = vmatpush1.msra.mxu0 %v2893
        %2981 = vmatprep.subr.mxu0 %v2888
        %2982 = vmatpush1.msra.mxu0 %v2887
        %2983 = vmatprep.subr.mxu0 %v2882
        %2984 = vmatpush1.msra.mxu0 %v2881
        %2985 = vmatprep.subr.mxu0 %v2876
        %2986 = vmatpush1.msra.mxu0 %v2875
        %2987 = vmatprep.subr.mxu0 %v2870
        %2988 = vmatpush1.msra.mxu0 %v2869
        %2989 = vmatprep.subr.mxu0 %v2864
        %2990 = vmatpush1.msra.mxu0 %v2863
        %2991 = vmatprep.subr.mxu0 %v2858
        %2992 = vmatpush1.msra.mxu0 %v2857
        %2993 = vmatprep.subr.mxu0 %v2852
        %2994 = vmatpush1.msra.mxu0 %v2851
        %2995 = vmatprep.subr.mxu0 %v2846
        %2996 = vmatpush1.msra.mxu0 %v2845
        %2997 = vmatprep.subr.mxu0 %v2840
        %2998 = vmatpush1.msra.mxu0 %v2839
        %2999 = vmatprep.subr.mxu0 0.0
        %3000 = vmatpush2.msra.mxu0 0.0
        %3001 = vmatprep.subr.mxu0 0.0
        %3002 = vmatpush2.msra.mxu0 0.0
        %3003 = vmatprep.subr.mxu0 0.0
        %3004 = vmatpush2.msra.mxu0 0.0
        %3005 = vmatprep.subr.mxu0 0.0
        %3006 = vmatpush2.msra.mxu0 0.0
        %3007 = vmatprep.subr.mxu0 0.0
        %3008 = vmatpush2.msra.mxu0 0.0
        %3009 = vmatprep.subr.mxu0 0.0
        %3010 = vmatpush2.msra.mxu0 0.0
        %3011 = vmatprep.subr.mxu0 0.0
        %3012 = vmatpush2.msra.mxu0 0.0
        %3013 = vmatprep.subr.mxu0 0.0
        %3014 = vmatpush2.msra.mxu0 0.0
        %3015 = vmatprep.subr.mxu0 0.0
        %3016 = vmatpush2.msra.mxu0 0.0
        %3017 = vmatprep.subr.mxu0 0.0
        %3018 = vmatpush2.msra.mxu0 0.0
        %3019 = vmatprep.subr.mxu0 0.0
        %3020 = vmatpush2.msra.mxu0 0.0
        %3021 = vmatprep.subr.mxu0 0.0
        %3022 = vmatpush2.msra.mxu0 0.0
        %3023 = vmatprep.subr.mxu0 0.0
        %3024 = vmatpush2.msra.mxu0 0.0
        %3025 = vmatprep.subr.mxu0 0.0
        %3026 = vmatpush2.msra.mxu0 0.0
        %3027 = vmatprep.subr.mxu0 0.0
        %3028 = vmatpush2.msra.mxu0 0.0
        %3029 = vmatprep.subr.mxu0 0.0
        %3030 = vmatpush2.msra.mxu0 0.0
        %3031 = vmatprep.mubr.f32.mxu0 0.0
        %3032 = vmatmul.mubr.f32.gmra.mxu0 %v2837
        %v3033 = vpop.f32.mrf.mxu0
        %v3034 = vadd.f32 %v2940, %v3033
        %v3035 = vpop.f32.mrf.mxu0
        %v3036 = vadd.f32 %v2944, %v3035
        %3037 = vmatprep.mubr.f32.mxu0 0.0
        %3038 = vmatmul.mubr.f32.gmra.mxu0 %v2838
        %v3039 = vpop.f32.mrf.mxu0
        %v3040 = vadd.f32 %v2940, %v3039
        %v3041 = vpop.f32.mrf.mxu0
        %v3042 = vadd.f32 %v2944, %v3041
        %3043 = vdwg.mxu0
        %3044 = vmatprep.subr.mxu0 %v2932
        %3045 = vmatpush1.msra.mxu0 %v2931
        %3046 = vmatprep.subr.mxu0 %v2926
        %3047 = vmatpush1.msra.mxu0 %v2925
        %3048 = vmatprep.subr.mxu0 %v2920
        %3049 = vmatpush1.msra.mxu0 %v2919
        %3050 = vmatprep.subr.mxu0 %v2914
        %3051 = vmatpush1.msra.mxu0 %v2913
        %3052 = vmatprep.subr.mxu0 %v2908
        %3053 = vmatpush1.msra.mxu0 %v2907
        %3054 = vmatprep.subr.mxu0 %v2902
        %3055 = vmatpush1.msra.mxu0 %v2901
        %3056 = vmatprep.subr.mxu0 %v2896
        %3057 = vmatpush1.msra.mxu0 %v2895
        %3058 = vmatprep.subr.mxu0 %v2890
        %3059 = vmatpush1.msra.mxu0 %v2889
        %3060 = vmatprep.subr.mxu0 %v2884
        %3061 = vmatpush1.msra.mxu0 %v2883
        %3062 = vmatprep.subr.mxu0 %v2878
        %3063 = vmatpush1.msra.mxu0 %v2877
        %3064 = vmatprep.subr.mxu0 %v2872
        %3065 = vmatpush1.msra.mxu0 %v2871
        %3066 = vmatprep.subr.mxu0 %v2866
        %3067 = vmatpush1.msra.mxu0 %v2865
        %3068 = vmatprep.subr.mxu0 %v2860
        %3069 = vmatpush1.msra.mxu0 %v2859
        %3070 = vmatprep.subr.mxu0 %v2854
        %3071 = vmatpush1.msra.mxu0 %v2853
        %3072 = vmatprep.subr.mxu0 %v2848
        %3073 = vmatpush1.msra.mxu0 %v2847
        %3074 = vmatprep.subr.mxu0 %v2842
        %3075 = vmatpush1.msra.mxu0 %v2841
        %3076 = vmatprep.subr.mxu0 0.0
        %3077 = vmatpush2.msra.mxu0 0.0
        %3078 = vmatprep.subr.mxu0 0.0
        %3079 = vmatpush2.msra.mxu0 0.0
        %3080 = vmatprep.subr.mxu0 0.0
        %3081 = vmatpush2.msra.mxu0 0.0
        %3082 = vmatprep.subr.mxu0 0.0
        %3083 = vmatpush2.msra.mxu0 0.0
        %3084 = vmatprep.subr.mxu0 0.0
        %3085 = vmatpush2.msra.mxu0 0.0
        %3086 = vmatprep.subr.mxu0 0.0
        %3087 = vmatpush2.msra.mxu0 0.0
        %3088 = vmatprep.subr.mxu0 0.0
        %3089 = vmatpush2.msra.mxu0 0.0
        %3090 = vmatprep.subr.mxu0 0.0
        %3091 = vmatpush2.msra.mxu0 0.0
        %3092 = vmatprep.subr.mxu0 0.0
        %3093 = vmatpush2.msra.mxu0 0.0
        %3094 = vmatprep.subr.mxu0 0.0
        %3095 = vmatpush2.msra.mxu0 0.0
        %3096 = vmatprep.subr.mxu0 0.0
        %3097 = vmatpush2.msra.mxu0 0.0
        %3098 = vmatprep.subr.mxu0 0.0
        %3099 = vmatpush2.msra.mxu0 0.0
        %3100 = vmatprep.subr.mxu0 0.0
        %3101 = vmatpush2.msra.mxu0 0.0
        %3102 = vmatprep.subr.mxu0 0.0
        %3103 = vmatpush2.msra.mxu0 0.0
        %3104 = vmatprep.subr.mxu0 0.0
        %3105 = vmatpush2.msra.mxu0 0.0
        %3106 = vmatprep.subr.mxu0 0.0
        %3107 = vmatpush2.msra.mxu0 0.0
        %3108 = vmatprep.mubr.f32.mxu0 0.0
        %3109 = vmatmul.mubr.f32.gmra.mxu0 %v2837
        %v3110 = vpop.f32.mrf.mxu0
        %v3111 = vadd.f32 %v2948, %v3110
        %v3112 = vpop.f32.mrf.mxu0
        %v3113 = vadd.f32 %v2952, %v3112
        %3114 = vmatprep.mubr.f32.mxu0 0.0
        %3115 = vmatmul.mubr.f32.gmra.mxu0 %v2838
        %v3116 = vpop.f32.mrf.mxu0
        %v3117 = vadd.f32 %v2948, %v3116
        %v3118 = vpop.f32.mrf.mxu0
        %v3119 = vadd.f32 %v2952, %v3118
        %3120 = vdwg.mxu0
        %3121 = vmatprep.subr.mxu0 %v2934
        %3122 = vmatpush1.msra.mxu0 %v2933
        %3123 = vmatprep.subr.mxu0 %v2928
        %3124 = vmatpush1.msra.mxu0 %v2927
        %3125 = vmatprep.subr.mxu0 %v2922
        %3126 = vmatpush1.msra.mxu0 %v2921
        %3127 = vmatprep.subr.mxu0 %v2916
        %3128 = vmatpush1.msra.mxu0 %v2915
        %3129 = vmatprep.subr.mxu0 %v2910
        %3130 = vmatpush1.msra.mxu0 %v2909
        %3131 = vmatprep.subr.mxu0 %v2904
        %3132 = vmatpush1.msra.mxu0 %v2903
        %3133 = vmatprep.subr.mxu0 %v2898
        %3134 = vmatpush1.msra.mxu0 %v2897
        %3135 = vmatprep.subr.mxu0 %v2892
        %3136 = vmatpush1.msra.mxu0 %v2891
        %3137 = vmatprep.subr.mxu0 %v2886
        %3138 = vmatpush1.msra.mxu0 %v2885
        %3139 = vmatprep.subr.mxu0 %v2880
        %3140 = vmatpush1.msra.mxu0 %v2879
        %3141 = vmatprep.subr.mxu0 %v2874
        %3142 = vmatpush1.msra.mxu0 %v2873
        %3143 = vmatprep.subr.mxu0 %v2868
        %3144 = vmatpush1.msra.mxu0 %v2867
        %3145 = vmatprep.subr.mxu0 %v2862
        %3146 = vmatpush1.msra.mxu0 %v2861
        %3147 = vmatprep.subr.mxu0 %v2856
        %3148 = vmatpush1.msra.mxu0 %v2855
        %3149 = vmatprep.subr.mxu0 %v2850
        %3150 = vmatpush1.msra.mxu0 %v2849
        %3151 = vmatprep.subr.mxu0 %v2844
        %3152 = vmatpush1.msra.mxu0 %v2843
        %3153 = vmatprep.subr.mxu0 0.0
        %3154 = vmatpush2.msra.mxu0 0.0
        %3155 = vmatprep.subr.mxu0 0.0
        %3156 = vmatpush2.msra.mxu0 0.0
        %3157 = vmatprep.subr.mxu0 0.0
        %3158 = vmatpush2.msra.mxu0 0.0
        %3159 = vmatprep.subr.mxu0 0.0
        %3160 = vmatpush2.msra.mxu0 0.0
        %3161 = vmatprep.subr.mxu0 0.0
        %3162 = vmatpush2.msra.mxu0 0.0
        %3163 = vmatprep.subr.mxu0 0.0
        %3164 = vmatpush2.msra.mxu0 0.0
        %3165 = vmatprep.subr.mxu0 0.0
        %3166 = vmatpush2.msra.mxu0 0.0
        %3167 = vmatprep.subr.mxu0 0.0
        %3168 = vmatpush2.msra.mxu0 0.0
        %3169 = vmatprep.subr.mxu0 0.0
        %3170 = vmatpush2.msra.mxu0 0.0
        %3171 = vmatprep.subr.mxu0 0.0
        %3172 = vmatpush2.msra.mxu0 0.0
        %3173 = vmatprep.subr.mxu0 0.0
        %3174 = vmatpush2.msra.mxu0 0.0
        %3175 = vmatprep.subr.mxu0 0.0
        %3176 = vmatpush2.msra.mxu0 0.0
        %3177 = vmatprep.subr.mxu0 0.0
        %3178 = vmatpush2.msra.mxu0 0.0
        %3179 = vmatprep.subr.mxu0 0.0
        %3180 = vmatpush2.msra.mxu0 0.0
        %3181 = vmatprep.subr.mxu0 0.0
        %3182 = vmatpush2.msra.mxu0 0.0
        %3183 = vmatprep.subr.mxu0 0.0
        %3184 = vmatpush2.msra.mxu0 0.0
        %3185 = vmatprep.mubr.f32.mxu0 0.0
        %3186 = vmatmul.mubr.f32.gmra.mxu0 %v2837
        %v3187 = vpop.f32.mrf.mxu0
        %v3188 = vadd.f32 %v2956, %v3187
        %v3189 = vpop.f32.mrf.mxu0
        %v3190 = vadd.f32 %v2960, %v3189
        %3191 = vmatprep.mubr.f32.mxu0 0.0
        %3192 = vmatmul.mubr.f32.gmra.mxu0 %v2838
        %v3193 = vpop.f32.mrf.mxu0
        %v3194 = vadd.f32 %v2956, %v3193
        %v3195 = vpop.f32.mrf.mxu0
        %v3196 = vadd.f32 %v2960, %v3195
        %3197 = vdwg.mxu0
        %v3198 = vrot.slane %v3034, 7
        %v3199 = vrot.slane %v3036, 7
        %v3200 = vrot.slane %v3111, 7
        %v3201 = vrot.slane %v3113, 7
        %v3202 = vrot.slane %v3188, 7
        %v3203 = vrot.slane %v3190, 7
        %v3204 = vrot.slane %v3040, 7
        %v3205 = vrot.slane %v3042, 7
        %v3206 = vrot.slane %v3117, 7
        %v3207 = vrot.slane %v3119, 7
        %v3208 = vrot.slane %v3194, 7
        %v3209 = vrot.slane %v3196, 7
        %v3210 = vsel %vm1797, %v3198, %v3204
        %v3211 = vsel %vm1797, %v3199, %v3205
        %v3212 = vsel %vm1797, %v3200, %v3206
        %v3213 = vsel %vm1797, %v3201, %v3207
        %v3214 = vsel %vm1797, %v3202, %v3208
        %v3215 = vsel %vm1797, %v3203, %v3209
        %v3216 = vsel %vm1797, %v3204, %v3198
        %v3217 = vsel %vm1797, %v3205, %v3199
        %v3218 = vsel %vm1797, %v3206, %v3200
        %v3219 = vsel %vm1797, %v3207, %v3201
        %v3220 = vsel %vm1797, %v3208, %v3202
        %v3221 = vsel %vm1797, %v3209, %v3203
        %v3222 = vmul.f32 %v3216, %v953
        %v3223 = vmul.f32 %v3217, %v953
        %v3224 = vmul.f32 %v3218, %v953
        %v3225 = vmul.f32 %v3219, %v953
        %v3226 = vmul.f32 %v3220, %v953
        %v3227 = vmul.f32 %v3221, %v953
        %v3228 = vmul.f32 %v3210, %v954
        %v3229 = vmul.f32 %v3211, %v954
        %v3230 = vmul.f32 %v3212, %v954
        %v3231 = vmul.f32 %v3213, %v954
        %v3232 = vmul.f32 %v3214, %v954
        %v3233 = vmul.f32 %v3215, %v954
        %v3234 = vrot.slane %v3034, 1
        %v3235 = vrot.slane %v3036, 1
        %v3236 = vrot.slane %v3111, 1
        %v3237 = vrot.slane %v3113, 1
        %v3238 = vrot.slane %v3188, 1
        %v3239 = vrot.slane %v3190, 1
        %v3240 = vrot.slane %v3040, 1
        %v3241 = vrot.slane %v3042, 1
        %v3242 = vrot.slane %v3117, 1
        %v3243 = vrot.slane %v3119, 1
        %v3244 = vrot.slane %v3194, 1
        %v3245 = vrot.slane %v3196, 1
        %v3246 = vsel %vm1834, %v3234, %v3240
        %v3247 = vsel %vm1834, %v3235, %v3241
        %v3248 = vsel %vm1834, %v3236, %v3242
        %v3249 = vsel %vm1834, %v3237, %v3243
        %v3250 = vsel %vm1834, %v3238, %v3244
        %v3251 = vsel %vm1834, %v3239, %v3245
        %v3252 = vsel %vm1834, %v3240, %v3234
        %v3253 = vsel %vm1834, %v3241, %v3235
        %v3254 = vsel %vm1834, %v3242, %v3236
        %v3255 = vsel %vm1834, %v3243, %v3237
        %v3256 = vsel %vm1834, %v3244, %v3238
        %v3257 = vsel %vm1834, %v3245, %v3239
        %v3258 = vmul.f32 %v3246, %v959
        %v3259 = vmul.f32 %v3247, %v959
        %v3260 = vmul.f32 %v3248, %v959
        %v3261 = vmul.f32 %v3249, %v959
        %v3262 = vmul.f32 %v3250, %v959
        %v3263 = vmul.f32 %v3251, %v959
        %v3264 = vmul.f32 %v3252, %v960
        %v3265 = vmul.f32 %v3253, %v960
        %v3266 = vmul.f32 %v3254, %v960
        %v3267 = vmul.f32 %v3255, %v960
        %v3268 = vmul.f32 %v3256, %v960
        %v3269 = vmul.f32 %v3257, %v960
        %v3270 = vmul.f32 %v3222, %v1895
        %v3271 = vmul.f32 %v3223, %v1899
        %v3272 = vmul.f32 %v3224, %v1903
        %v3273 = vmul.f32 %v3225, %v1907
        %v3274 = vmul.f32 %v3226, %v1911
        %v3275 = vmul.f32 %v3227, %v1915
        %v3276 = vmul.f32 %v3228, %v1895
        %v3277 = vmul.f32 %v3229, %v1899
        %v3278 = vmul.f32 %v3230, %v1903
        %v3279 = vmul.f32 %v3231, %v1907
        %v3280 = vmul.f32 %v3232, %v1911
        %v3281 = vmul.f32 %v3233, %v1915
        %v3282 = vmul.f32 %v3034, %v1961
        %v3283 = vmul.f32 %v3036, %v1965
        %v3284 = vmul.f32 %v3111, %v1969
        %v3285 = vmul.f32 %v3113, %v1973
        %v3286 = vmul.f32 %v3188, %v1977
        %v3287 = vmul.f32 %v3190, %v1981
        %v3288 = vmul.f32 %v3040, %v1961
        %v3289 = vmul.f32 %v3042, %v1965
        %v3290 = vmul.f32 %v3117, %v1969
        %v3291 = vmul.f32 %v3119, %v1973
        %v3292 = vmul.f32 %v3194, %v1977
        %v3293 = vmul.f32 %v3196, %v1981
        %v3294 = vadd.f32 %v3270, %v3282
        %v3295 = vadd.f32 %v3271, %v3283
        %v3296 = vadd.f32 %v3272, %v3284
        %v3297 = vadd.f32 %v3273, %v3285
        %v3298 = vadd.f32 %v3274, %v3286
        %v3299 = vadd.f32 %v3275, %v3287
        %v3300 = vadd.f32 %v3276, %v3288
        %v3301 = vadd.f32 %v3277, %v3289
        %v3302 = vadd.f32 %v3278, %v3290
        %v3303 = vadd.f32 %v3279, %v3291
        %v3304 = vadd.f32 %v3280, %v3292
        %v3305 = vadd.f32 %v3281, %v3293
        %v3306 = vmul.f32 %v3258, %v2039
        %v3307 = vmul.f32 %v3259, %v2043
        %v3308 = vmul.f32 %v3260, %v2047
        %v3309 = vmul.f32 %v3261, %v2051
        %v3310 = vmul.f32 %v3262, %v2055
        %v3311 = vmul.f32 %v3263, %v2059
        %v3312 = vmul.f32 %v3264, %v2039
        %v3313 = vmul.f32 %v3265, %v2043
        %v3314 = vmul.f32 %v3266, %v2047
        %v3315 = vmul.f32 %v3267, %v2051
        %v3316 = vmul.f32 %v3268, %v2055
        %v3317 = vmul.f32 %v3269, %v2059
        %v3318 = vadd.f32 %v3294, %v3306
        %v3319 = vadd.f32 %v3295, %v3307
        %v3320 = vadd.f32 %v3296, %v3308
        %v3321 = vadd.f32 %v3297, %v3309
        %v3322 = vadd.f32 %v3298, %v3310
        %v3323 = vadd.f32 %v3299, %v3311
        %v3324 = vadd.f32 %v3300, %v3312
        %v3325 = vadd.f32 %v3301, %v3313
        %v3326 = vadd.f32 %v3302, %v3314
        %v3327 = vadd.f32 %v3303, %v3315
        %v3328 = vadd.f32 %v3304, %v3316
        %v3329 = vadd.f32 %v3305, %v3317
        %v3330 = vld [vmem:[%s13] sm:$0x3f]
        %v3332 = vlaneseq
        %v3333 = vshrl.u32 %v3332, 7
        %v3334 = vsub.s32 0, %v3333
        %v3335 = vrot.slane %v3330, %v3334
        %v3336 = vlaneseq
        %v3337 = vshrl.u32 %v3336, 7
        %v3338 = vsub.s32 1, %v3337
        %v3339 = vrot.slane %v3330, %v3338
        %v3340 = vlaneseq
        %v3341 = vshrl.u32 %v3340, 7
        %v3342 = vsub.s32 2, %v3341
        %v3343 = vrot.slane %v3330, %v3342
        %v3344 = vlaneseq
        %v3345 = vshrl.u32 %v3344, 7
        %v3346 = vsub.s32 3, %v3345
        %v3347 = vrot.slane %v3330, %v3346
        %v3348 = vlaneseq
        %v3349 = vshrl.u32 %v3348, 7
        %v3350 = vsub.s32 4, %v3349
        %v3351 = vrot.slane %v3330, %v3350
        %v3352 = vlaneseq
        %v3353 = vshrl.u32 %v3352, 7
        %v3354 = vsub.s32 5, %v3353
        %v3355 = vrot.slane %v3330, %v3354
        %v3362 = vadd.f32 %v3318, %v3335
        %v3363 = vadd.f32 %v3319, %v3339
        %v3364 = vadd.f32 %v3320, %v3343
        %v3365 = vadd.f32 %v3321, %v3347
        %v3366 = vadd.f32 %v3322, %v3351
        %v3367 = vadd.f32 %v3323, %v3355
        %v3368 = vadd.f32 %v3324, %v3335
        %v3369 = vadd.f32 %v3325, %v3339
        %v3370 = vadd.f32 %v3326, %v3343
        %v3371 = vadd.f32 %v3327, %v3347
        %v3372 = vadd.f32 %v3328, %v3351
        %v3373 = vadd.f32 %v3329, %v3355
        %v3374 = vxor.u32 %v3365, 2147483648
        %v3375 = vxor.u32 %v3366, 2147483648
        %v3376 = vxor.u32 %v3367, 2147483648
        %v3377 = vxor.u32 %v3371, 2147483648
        %v3378 = vxor.u32 %v3372, 2147483648
        %v3379 = vxor.u32 %v3373, 2147483648
        %v3380 = vmul.f32 %v3374, 1.442695
        %v3381 = vpow.pop %v3380
        %v3382 = vmul.f32 %v3375, 1.442695
        %v3383 = vpow.pop %v3382
        %v3384 = vmul.f32 %v3376, 1.442695
        %v3385 = vpow.pop %v3384
        %v3386 = vmul.f32 %v3377, 1.442695
        %v3387 = vpow.pop %v3386
        %v3388 = vmul.f32 %v3378, 1.442695
        %v3389 = vpow.pop %v3388
        %v3390 = vmul.f32 %v3379, 1.442695
        %v3391 = vpow.pop %v3390
        %v3392 = vadd.f32 %v3381, 1.0
        %v3393 = vadd.f32 %v3383, 1.0
        %v3394 = vadd.f32 %v3385, 1.0
        %v3395 = vadd.f32 %v3387, 1.0
        %v3396 = vadd.f32 %v3389, 1.0
        %v3397 = vadd.f32 %v3391, 1.0
        %v3398 = vrcp.pop %v3392
        %v3399 = vmul.f32 1.0, %v3398
        %v3400 = vrcp.pop %v3393
        %v3401 = vmul.f32 1.0, %v3400
        %v3402 = vrcp.pop %v3394
        %v3403 = vmul.f32 1.0, %v3402
        %v3404 = vrcp.pop %v3395
        %v3405 = vmul.f32 1.0, %v3404
        %v3406 = vrcp.pop %v3396
        %v3407 = vmul.f32 1.0, %v3406
        %v3408 = vrcp.pop %v3397
        %v3409 = vmul.f32 1.0, %v3408
        %v3410 = vmul.f32 %v3362, %v3399
        %v3411 = vmul.f32 %v3363, %v3401
        %v3412 = vmul.f32 %v3364, %v3403
        %v3413 = vmul.f32 %v3368, %v3405
        %v3414 = vmul.f32 %v3369, %v3407
        %v3415 = vmul.f32 %v3370, %v3409
        %v3416 = vld [vmem:[%s14] sm:$0xff]
        %v3417 = vld [vmem:[%s14 + $0x8] sm:$0xff]
        %v3418 = vld [vmem:[%s14 + $0x10] sm:$0xff]
        %v3419 = vld [vmem:[%s14 + $0x18] sm:$0xff]
        %v3420 = vld [vmem:[%s14 + $0x20] sm:$0xff]
        %v3421 = vld [vmem:[%s14 + $0x28] sm:$0xff]
        %v3422 = vld [vmem:[%s14 + $0x30] sm:$0xff]
        %v3423 = vld [vmem:[%s14 + $0x38] sm:$0xff]
        %v3424 = vld [vmem:[%s14 + $0x40] sm:$0xff]
        %v3425 = vld [vmem:[%s14 + $0x48] sm:$0xff]
        %v3426 = vld [vmem:[%s14 + $0x50] sm:$0xff]
        %v3427 = vld [vmem:[%s14 + $0x58] sm:$0xff]
        %v3428 = vld [vmem:[%s14 + $0x60] sm:$0xff]
        %v3429 = vld [vmem:[%s14 + $0x68] sm:$0xff]
        %v3430 = vld [vmem:[%s14 + $0x70] sm:$0xff]
        %v3431 = vld [vmem:[%s14 + $0x78] sm:$0xff]
        %v3432 = vld [vmem:[%s14 + $0x80] sm:$0xff]
        %v3433 = vld [vmem:[%s14 + $0x88] sm:$0xff]
        %v3434 = vld [vmem:[%s14 + $0x90] sm:$0xff]
        %v3435 = vld [vmem:[%s14 + $0x98] sm:$0xff]
        %v3436 = vld [vmem:[%s14 + $0xa0] sm:$0xff]
        %v3437 = vld [vmem:[%s14 + $0xa8] sm:$0xff]
        %v3438 = vld [vmem:[%s14 + $0xb0] sm:$0xff]
        %v3439 = vld [vmem:[%s14 + $0xb8] sm:$0xff]
        %v3440 = vld [vmem:[%s14 + $0xc0] sm:$0xff]
        %v3441 = vld [vmem:[%s14 + $0xc8] sm:$0xff]
        %v3442 = vld [vmem:[%s14 + $0xd0] sm:$0xff]
        %v3443 = vld [vmem:[%s14 + $0xd8] sm:$0xff]
        %v3444 = vld [vmem:[%s14 + $0xe0] sm:$0xff]
        %v3445 = vld [vmem:[%s14 + $0xe8] sm:$0xff]
        %v3446 = vld [vmem:[%s14 + $0xf0] sm:$0xff]
        %v3447 = vld [vmem:[%s14 + $0xf8] sm:$0xff]
        %v3448 = vld [vmem:[%s14 + $0x100] sm:$0xff]
        %v3449 = vld [vmem:[%s14 + $0x108] sm:$0xff]
        %v3450 = vld [vmem:[%s14 + $0x110] sm:$0xff]
        %v3451 = vld [vmem:[%s14 + $0x118] sm:$0xff]
        %v3452 = vld [vmem:[%s14 + $0x120] sm:$0xff]
        %v3453 = vld [vmem:[%s14 + $0x128] sm:$0xff]
        %v3454 = vld [vmem:[%s14 + $0x130] sm:$0xff]
        %v3455 = vld [vmem:[%s14 + $0x138] sm:$0xff]
        %v3456 = vld [vmem:[%s14 + $0x140] sm:$0xff]
        %v3457 = vld [vmem:[%s14 + $0x148] sm:$0xff]
        %v3458 = vld [vmem:[%s14 + $0x150] sm:$0xff]
        %v3459 = vld [vmem:[%s14 + $0x158] sm:$0xff]
        %v3460 = vld [vmem:[%s14 + $0x160] sm:$0xff]
        %v3461 = vld [vmem:[%s14 + $0x168] sm:$0xff]
        %v3462 = vld [vmem:[%s14 + $0x170] sm:$0xff]
        %v3463 = vld [vmem:[%s14 + $0x178] sm:$0xff]
        %v3464 = vld [vmem:[%s15] sm:$0x1]
        %v3466 = vlaneseq
        %v3467 = vshrl.u32 %v3466, 7
        %v3468 = vsub.s32 0, %v3467
        %v3469 = vrot.slane %v3464, %v3468
        %3471 = vmatprep.subr.mxu0 0.0
        %3472 = vmatpush1.msra.mxu0 %v3431
        %3473 = vmatprep.subr.mxu0 0.0
        %3474 = vmatpush1.msra.mxu0 %v3430
        %3475 = vmatprep.subr.mxu0 0.0
        %3476 = vmatpush1.msra.mxu0 %v3429
        %3477 = vmatprep.subr.mxu0 0.0
        %3478 = vmatpush1.msra.mxu0 %v3428
        %3479 = vmatprep.subr.mxu0 0.0
        %3480 = vmatpush1.msra.mxu0 %v3427
        %3481 = vmatprep.subr.mxu0 0.0
        %3482 = vmatpush1.msra.mxu0 %v3426
        %3483 = vmatprep.subr.mxu0 0.0
        %3484 = vmatpush1.msra.mxu0 %v3425
        %3485 = vmatprep.subr.mxu0 0.0
        %3486 = vmatpush1.msra.mxu0 %v3424
        %3487 = vmatprep.subr.mxu0 0.0
        %3488 = vmatpush1.msra.mxu0 %v3423
        %3489 = vmatprep.subr.mxu0 0.0
        %3490 = vmatpush1.msra.mxu0 %v3422
        %3491 = vmatprep.subr.mxu0 0.0
        %3492 = vmatpush1.msra.mxu0 %v3421
        %3493 = vmatprep.subr.mxu0 0.0
        %3494 = vmatpush1.msra.mxu0 %v3420
        %3495 = vmatprep.subr.mxu0 0.0
        %3496 = vmatpush1.msra.mxu0 %v3419
        %3497 = vmatprep.subr.mxu0 0.0
        %3498 = vmatpush1.msra.mxu0 %v3418
        %3499 = vmatprep.subr.mxu0 0.0
        %3500 = vmatpush1.msra.mxu0 %v3417
        %3501 = vmatprep.subr.mxu0 0.0
        %3502 = vmatpush1.msra.mxu0 %v3416
        %3503 = vmatprep.subr.mxu0 0.0
        %3504 = vmatpush2.msra.mxu0 %v3447
        %3505 = vmatprep.subr.mxu0 0.0
        %3506 = vmatpush2.msra.mxu0 %v3446
        %3507 = vmatprep.subr.mxu0 0.0
        %3508 = vmatpush2.msra.mxu0 %v3445
        %3509 = vmatprep.subr.mxu0 0.0
        %3510 = vmatpush2.msra.mxu0 %v3444
        %3511 = vmatprep.subr.mxu0 0.0
        %3512 = vmatpush2.msra.mxu0 %v3443
        %3513 = vmatprep.subr.mxu0 0.0
        %3514 = vmatpush2.msra.mxu0 %v3442
        %3515 = vmatprep.subr.mxu0 0.0
        %3516 = vmatpush2.msra.mxu0 %v3441
        %3517 = vmatprep.subr.mxu0 0.0
        %3518 = vmatpush2.msra.mxu0 %v3440
        %3519 = vmatprep.subr.mxu0 0.0
        %3520 = vmatpush2.msra.mxu0 %v3439
        %3521 = vmatprep.subr.mxu0 0.0
        %3522 = vmatpush2.msra.mxu0 %v3438
        %3523 = vmatprep.subr.mxu0 0.0
        %3524 = vmatpush2.msra.mxu0 %v3437
        %3525 = vmatprep.subr.mxu0 0.0
        %3526 = vmatpush2.msra.mxu0 %v3436
        %3527 = vmatprep.subr.mxu0 0.0
        %3528 = vmatpush2.msra.mxu0 %v3435
        %3529 = vmatprep.subr.mxu0 0.0
        %3530 = vmatpush2.msra.mxu0 %v3434
        %3531 = vmatprep.subr.mxu0 0.0
        %3532 = vmatpush2.msra.mxu0 %v3433
        %3533 = vmatprep.subr.mxu0 0.0
        %3534 = vmatpush2.msra.mxu0 %v3432
        %3535 = vmatprep.mubr.f32.mxu0 %v3411
        %3536 = vmatmul.mubr.f32.gmra.mxu0 %v3410
        %v3537 = vpop.f32.mrf.mxu0
        %v3538 = vadd.f32 %v3469, %v3537
        %v3539 = vpop.f32.mrf.mxu0
        %3540 = vmatprep.mubr.f32.mxu0 %v3414
        %3541 = vmatmul.mubr.f32.gmra.mxu0 %v3413
        %v3542 = vpop.f32.mrf.mxu0
        %v3543 = vadd.f32 %v3469, %v3542
        %v3544 = vpop.f32.mrf.mxu0
        %3545 = vdwg.mxu0
        %3546 = vmatprep.subr.mxu0 0.0
        %3547 = vmatpush1.msra.mxu0 %v3463
        %3548 = vmatprep.subr.mxu0 0.0
        %3549 = vmatpush1.msra.mxu0 %v3462
        %3550 = vmatprep.subr.mxu0 0.0
        %3551 = vmatpush1.msra.mxu0 %v3461
        %3552 = vmatprep.subr.mxu0 0.0
        %3553 = vmatpush1.msra.mxu0 %v3460
        %3554 = vmatprep.subr.mxu0 0.0
        %3555 = vmatpush1.msra.mxu0 %v3459
        %3556 = vmatprep.subr.mxu0 0.0
        %3557 = vmatpush1.msra.mxu0 %v3458
        %3558 = vmatprep.subr.mxu0 0.0
        %3559 = vmatpush1.msra.mxu0 %v3457
        %3560 = vmatprep.subr.mxu0 0.0
        %3561 = vmatpush1.msra.mxu0 %v3456
        %3562 = vmatprep.subr.mxu0 0.0
        %3563 = vmatpush1.msra.mxu0 %v3455
        %3564 = vmatprep.subr.mxu0 0.0
        %3565 = vmatpush1.msra.mxu0 %v3454
        %3566 = vmatprep.subr.mxu0 0.0
        %3567 = vmatpush1.msra.mxu0 %v3453
        %3568 = vmatprep.subr.mxu0 0.0
        %3569 = vmatpush1.msra.mxu0 %v3452
        %3570 = vmatprep.subr.mxu0 0.0
        %3571 = vmatpush1.msra.mxu0 %v3451
        %3572 = vmatprep.subr.mxu0 0.0
        %3573 = vmatpush1.msra.mxu0 %v3450
        %3574 = vmatprep.subr.mxu0 0.0
        %3575 = vmatpush1.msra.mxu0 %v3449
        %3576 = vmatprep.subr.mxu0 0.0
        %3577 = vmatpush1.msra.mxu0 %v3448
        %3578 = vmatprep.subr.mxu0 0.0
        %3579 = vmatpush2.msra.mxu0 0.0
        %3580 = vmatprep.subr.mxu0 0.0
        %3581 = vmatpush2.msra.mxu0 0.0
        %3582 = vmatprep.subr.mxu0 0.0
        %3583 = vmatpush2.msra.mxu0 0.0
        %3584 = vmatprep.subr.mxu0 0.0
        %3585 = vmatpush2.msra.mxu0 0.0
        %3586 = vmatprep.subr.mxu0 0.0
        %3587 = vmatpush2.msra.mxu0 0.0
        %3588 = vmatprep.subr.mxu0 0.0
        %3589 = vmatpush2.msra.mxu0 0.0
        %3590 = vmatprep.subr.mxu0 0.0
        %3591 = vmatpush2.msra.mxu0 0.0
        %3592 = vmatprep.subr.mxu0 0.0
        %3593 = vmatpush2.msra.mxu0 0.0
        %3594 = vmatprep.subr.mxu0 0.0
        %3595 = vmatpush2.msra.mxu0 0.0
        %3596 = vmatprep.subr.mxu0 0.0
        %3597 = vmatpush2.msra.mxu0 0.0
        %3598 = vmatprep.subr.mxu0 0.0
        %3599 = vmatpush2.msra.mxu0 0.0
        %3600 = vmatprep.subr.mxu0 0.0
        %3601 = vmatpush2.msra.mxu0 0.0
        %3602 = vmatprep.subr.mxu0 0.0
        %3603 = vmatpush2.msra.mxu0 0.0
        %3604 = vmatprep.subr.mxu0 0.0
        %3605 = vmatpush2.msra.mxu0 0.0
        %3606 = vmatprep.subr.mxu0 0.0
        %3607 = vmatpush2.msra.mxu0 0.0
        %3608 = vmatprep.subr.mxu0 0.0
        %3609 = vmatpush2.msra.mxu0 0.0
        %3610 = vmatprep.mubr.f32.mxu0 0.0
        %3611 = vmatmul.mubr.f32.gmra.mxu0 %v3412
        %v3612 = vpop.f32.mrf.mxu0
        %v3613 = vadd.f32 %v3538, %v3612
        %v3614 = vpop.f32.mrf.mxu0
        %3615 = vmatprep.mubr.f32.mxu0 0.0
        %3616 = vmatmul.mubr.f32.gmra.mxu0 %v3415
        %v3617 = vpop.f32.mrf.mxu0
        %v3618 = vadd.f32 %v3543, %v3617
        %v3619 = vpop.f32.mrf.mxu0
        %3620 = vdwg.mxu0
        %v3621 = vmul.f32 %v3613, %v2379
        %v3622 = vmul.f32 %v3618, %v2379
        %v3623 = vadd.f32 %v2837, %v3621
        %v3624 = vadd.f32 %v2838, %v3622
        %s3625 = scalar_lea.vmem %s590, 16 [#allocation3]
        %3626 = vst [vmem:[%s3625] sm:$0xff] %v3623
        %3627 = vst [vmem:[%s3625 + $0x8] sm:$0xff] %v3624
        %s3628 = sand.u32 %s398, 1
        %s3629 = sand.u32 %s398, 1
        %s3630 = smul.addr %s3629, 32
        %s3631 = scalar_lea.vmem [#allocation3], %s3630
        // Predicated region
        $region127: #{cs_transformer_forward.1} parent=121 // pred_check
          %p3632 = pneg %p408
        $region128: #{cs_transformer_forward.1} parent=121 // pred_check_branch
          %3634 = sbr.rel (%p3632) target = $region130
        $region129: #{cs_transformer_forward.1} parent=121 // pred_region
          %s3635 = smul.u32 2, %s28
          %s3636 = smul.addr %s3635, 8
          %s3637 = scalar_lea.vmem %s17, %s3636
          // Predicated region
          $region131: #{cs_transformer_forward.1} parent=129 // pred_check
            _
          $region132: #{cs_transformer_forward.1} parent=129 // pred_check_branch
            %3639 = sbr.rel (0) target = $region134
          $region133: #{cs_transformer_forward.1} parent=129 // pred_region
            // Predicated region
            $region135: #{cs_transformer_forward.1} parent=133 // pred_check
              _
            $region136: #{cs_transformer_forward.1} parent=133 // pred_check_branch
              %3641 = sbr.rel (0) target = $region138
            $region137: #{cs_transformer_forward.1} parent=133 // pred_region
              // Predicated region
              $region150: #{cs_transformer_forward.1} parent=137 // pred_check
                _
              $region151: #{cs_transformer_forward.1} parent=137 // pred_check_branch
                %3663 = sbr.rel (0) target = $region153
              $region152: #{cs_transformer_forward.1} parent=137 // pred_region
                loop: start=0, step=1, limit=1
                $region154: #{cs_transformer_forward.1} parent=152 // loop_pre_header
                  _
                $region155: #{cs_transformer_forward.1} parent=152 // loop_header
                  %s3665 = sphi 0, %s3669
                  %p3666 = scmp.ge.s32.totalorder %s3665, 1
                  %s3670 = sphi %s3631, %s3631
                  %s3671 = sphi %s3637, %s3637
                $region156: #{cs_transformer_forward.1} parent=152 // loop_header_branch
                  %3668 = sbr.rel (%p3666) target = $region160
                $region157: #{cs_transformer_forward.1} parent=152 // loop_body
                  %v3672 = vld [vmem:[%s3670] sm:$0xff]
                  %3673 = vst [vmem:[%s3671] sm:$0xff] %v3672
                  %v3674 = vld [vmem:[%s3670 + $0x8] sm:$0xff]
                  %3675 = vst [vmem:[%s3671 + $0x8] sm:$0xff] %v3674
                  %v3676 = vld [vmem:[%s3670 + $0x10] sm:$0xff]
                  %3677 = vst [vmem:[%s3671 + $0x20] sm:$0xff] %v3676
                  %v3678 = vld [vmem:[%s3670 + $0x18] sm:$0xff]
                  %3679 = vst [vmem:[%s3671 + $0x28] sm:$0xff] %v3678
                $region158: #{cs_transformer_forward.1} parent=152 // loop_footer
                  %s3669 = sadd.s32 1, %s3665
                $region159: #{cs_transformer_forward.1} parent=152 // loop_footer_branch
                  %3664 = sbr.rel target = $region155
                $region160: #{cs_transformer_forward.1} parent=152 // loop_exit
                  _
              $region153: #{cs_transformer_forward.1} parent=137 // pred_fallthru
                _
              // Predicated region
              $region161: #{cs_transformer_forward.1} parent=137 // pred_check
                _
              $region162: #{cs_transformer_forward.1} parent=137 // pred_check_branch
                %3681 = sbr.rel target = $region164
              $region163: #{cs_transformer_forward.1} parent=137 // pred_region
                _
              $region164: #{cs_transformer_forward.1} parent=137 // pred_fallthru
                _
            $region138: #{cs_transformer_forward.1} parent=133 // pred_fallthru
              _
            // Predicated region
            $region139: #{cs_transformer_forward.1} parent=133 // pred_check
              _
            $region140: #{cs_transformer_forward.1} parent=133 // pred_check_branch
              %3643 = sbr.rel target = $region142
            $region141: #{cs_transformer_forward.1} parent=133 // pred_region
              %s3645 = ssub.s32 256, 1
              loop: start=0, step=1, limit=1
              $region143: #{cs_transformer_forward.1} parent=141 // loop_pre_header
                _
              $region144: #{cs_transformer_forward.1} parent=141 // loop_header
                %s3647 = sphi 0, %s3651
                %p3648 = scmp.ge.s32.totalorder %s3647, 1
                %s3652 = sphi %s3631, %s3631
                %s3653 = sphi %s3637, %s3637
              $region145: #{cs_transformer_forward.1} parent=141 // loop_header_branch
                %3650 = sbr.rel (%p3648) target = $region149
              $region146: #{cs_transformer_forward.1} parent=141 // loop_body
                %v3654 = vld [vmem:[%s3652] sm:%s3645]
                %3655 = vst [vmem:[%s3653] sm:%s3645] %v3654
                %v3656 = vld [vmem:[%s3652 + $0x8] sm:%s3645]
                %3657 = vst [vmem:[%s3653 + $0x8] sm:%s3645] %v3656
                %v3658 = vld [vmem:[%s3652 + $0x10] sm:%s3645]
                %3659 = vst [vmem:[%s3653 + $0x20] sm:%s3645] %v3658
                %v3660 = vld [vmem:[%s3652 + $0x18] sm:%s3645]
                %3661 = vst [vmem:[%s3653 + $0x28] sm:%s3645] %v3660
              $region147: #{cs_transformer_forward.1} parent=141 // loop_footer
                %s3651 = sadd.s32 1, %s3647
              $region148: #{cs_transformer_forward.1} parent=141 // loop_footer_branch
                %3646 = sbr.rel target = $region144
              $region149: #{cs_transformer_forward.1} parent=141 // loop_exit
                _
            $region142: #{cs_transformer_forward.1} parent=133 // pred_fallthru
              _
          $region134: #{cs_transformer_forward.1} parent=129 // pred_fallthru
            _
          %3682 = vnop
        $region130: #{cs_transformer_forward.1} parent=121 // pred_fallthru
          _
      $region122: #{cs_transformer_forward.1} parent=5 // pred_fallthru
        _
      %p3683 = scmp.le.s32.totalorder 2, %s23
      // Predicated region
      $region165: #{cs_transformer_forward.1} parent=5 // pred_check
        %p3684 = pneg %p3683
      $region166: #{cs_transformer_forward.1} parent=5 // pred_check_branch
        %3686 = sbr.rel (%p3684) target = $region168
      $region167: #{cs_transformer_forward.1} parent=5 // pred_region
        %s3687 = ssub.s32 %s23, 2
        // Predicated region
        $region169: #{cs_transformer_forward.1} parent=167 // pred_check
          %p3688 = pneg %p414
        $region170: #{cs_transformer_forward.1} parent=167 // pred_check_branch
          %3690 = sbr.rel (%p3688) target = $region172
        $region171: #{cs_transformer_forward.1} parent=167 // pred_region
          %s3691 = sand.u32 %s399, 1
          %s3692 = sand.u32 %s399, 1
          %s3693 = smul.addr %s3692, 32
          %s3694 = scalar_lea.vmem [#allocation3], %s3693
        $region172: #{cs_transformer_forward.1} parent=167 // pred_fallthru
          _
      $region168: #{cs_transformer_forward.1} parent=5 // pred_fallthru
        _
    $region6: #{cs_transformer_forward.1} parent=1 // loop_footer
      %s27 = sadd.s32 1, %s23
    $region7: #{cs_transformer_forward.1} parent=1 // loop_footer_branch
      %22 = sbr.rel target = $region3
    $region8: #{cs_transformer_forward.1} parent=1 // loop_exit
      _

</llo_original>
